<compile_context>
chip_gen: v7x
topology: tpu7x:2x2x1
jax: 0.10.0
libtpu: 0.0.40
codegen_flags: <defaults>
</compile_context>

<pallas_src>
import functools

import jax
import jax.numpy as jnp
from jax import lax
from jax.experimental import pallas as pl
from jax.experimental.pallas import tpu as pltpu


LANE = 128
SUB = 8
_VMEM_LIMIT = 48 * 1024 * 1024   # <= v7x 64 MiB physical; plenty on v5e/v6e


# ----------------------------------------------------------------------------
# helpers
# ----------------------------------------------------------------------------
def _round_up(x, m):
    return (x + m - 1) // m * m


def _pick_tile(m, target=1024, min_tiles=1):
    """Row tile (multiple of 128) and the padded row count it divides."""
    tile = min(target, _round_up(m, LANE))
    if min_tiles > 1:
        while tile > LANE and _round_up(m, tile) // tile < min_tiles:
            tile -= LANE
    mp = _round_up(m, tile)
    return mp, tile


def _leaky(x):
    return jnp.where(x >= 0, x, 0.1 * x)


def _pad_cols(w, cols):
    return jnp.pad(w, ((0, 0), (0, cols - w.shape[1])))


# ----------------------------------------------------------------------------
# Kernel 1: nearest-neighbour search (FusionAwareInterp, k = 1), lane-dense.
#   grid = (bs, HW tiles); the full point set is swept inside the kernel in
#   8-point sub-chunks with (1, thw) register carries.
# ----------------------------------------------------------------------------
def _nn_kernel(gxy_ref, uv_ref, idx_ref, *, nsub, npts_pad, thw):
    gx = gxy_ref[0:1, :]                                  # (1, thw)
    gy = gxy_ref[1:2, :]
    trips = npts_pad // nsub

    def body(s, carry):
        mind, midx = carry
        start = pl.multiple_of(s * nsub, nsub)
        pts = uv_ref[0, pl.ds(start, nsub), :]            # (nsub, 2)
        ux = pts[:, 0:1]
        uy = pts[:, 1:2]
        dx = gx - ux                                      # (nsub, thw)
        dy = gy - uy
        d = dx * dx + dy * dy
        cmin = jnp.min(d, axis=0, keepdims=True)          # (1, thw)
        iota = lax.broadcasted_iota(jnp.int32, (nsub, thw), 0) + s * nsub
        cidx = jnp.min(jnp.where(d <= cmin, iota, jnp.int32(2 ** 30)),
                       axis=0, keepdims=True)             # first index at min
        better = cmin < mind                              # keep earliest on ties
        return (jnp.where(better, cmin, mind),
                jnp.where(better, cidx, midx))

    mind0 = jnp.full((1, thw), jnp.inf, jnp.float32)
    midx0 = jnp.zeros((1, thw), jnp.int32)
    _, midx = lax.fori_loop(0, trips, body, (mind0, midx0), unroll=2)
    idx_ref[0] = jnp.broadcast_to(midx, (SUB, thw))


def nn_search(gxy_t, uv_r, *, thw):
    HWp = gxy_t.shape[1]
    bs, npts_pad, _ = uv_r.shape
    T = HWp // thw
    out = pl.pallas_call(
        functools.partial(_nn_kernel, nsub=SUB, npts_pad=npts_pad, thw=thw),
        out_shape=jax.ShapeDtypeStruct((bs, SUB * T, thw), jnp.int32),
        grid_spec=pltpu.PrefetchScalarGridSpec(
            num_scalar_prefetch=0,
            grid=(bs, T),
            in_specs=[
                pl.BlockSpec((2, thw), lambda b, t: (0, t)),
                pl.BlockSpec((1, npts_pad, 2), lambda b, t: (b, 0, 0)),
            ],
            out_specs=pl.BlockSpec((1, SUB, thw), lambda b, t: (b, t, 0)),
        ),
        compiler_params=pltpu.CompilerParams(
            dimension_semantics=("parallel", "parallel"),
            vmem_limit_bytes=_VMEM_LIMIT),
    )(gxy_t, uv_r)
    # (bs, 8*T, thw) -> (bs, HWp): row 0 of each 8-row group holds the indices.
    return out.reshape(bs, T, SUB, thw)[:, :, 0, :].reshape(bs, HWp)


# ----------------------------------------------------------------------------
# Kernel 2: fused interp tail (score_net + out_conv) + fuse2d.align1/align2 +
#           partial channel pooling.  Channel-padded (128) bf16 outputs.
# ----------------------------------------------------------------------------
def _interp_align2d_kernel(gxy_ref, knnf_ref, knnuv_ref, f2d_ref, sm_ref,
                           ocw_ref, a2w_ref, a1w_ref,
                           f2o_ref, f3o_ref, ps_ref,
                           *, HW, thw, c3d, c2p):
    t = pl.program_id(1)
    gx = gxy_ref[:, 0:1]                                  # (thw, 1)
    gy = gxy_ref[:, 1:2]
    kuv = knnuv_ref[0]                                    # (thw, 2) f32
    kux = kuv[:, 0:1]
    kuy = kuv[:, 1:2]
    kf3 = knnf_ref[0].astype(jnp.float32)                 # (thw, c3d)
    sm = sm_ref[...]                                      # packed smalls (8, CP)

    ox = kux - gx
    oy = kuy - gy
    onorm = jnp.sqrt(ox * ox + oy * oy)

    # score_net[0]: Conv2d(3 -> k=1) + LeakyReLU   (scalar weights, k == 1)
    h = _leaky(ox * sm[0:1, 0:1] + oy * sm[0:1, 1:2]
               + onorm * sm[0:1, 2:3] + sm[0:1, 3:4])     # (thw, 1)
    # score_net[1]: Conv2d(k=1 -> C3) + Sigmoid
    score = jax.nn.sigmoid(h * sm[1:2, 0:c3d] + sm[2:3, 0:c3d])   # (thw, c3d)

    interp = (score * kf3).astype(jnp.bfloat16)           # sum over k (k == 1)
    interp = _leaky(jnp.dot(interp, ocw_ref[...],
                            preferred_element_type=jnp.float32)
                    + sm[3:4, 0:c3d])                     # out_conv
    f3_al = _leaky(jnp.dot(interp.astype(jnp.bfloat16), a2w_ref[...],
                           preferred_element_type=jnp.float32)
                   + sm[4:5, 0:c2p])                      # fuse2d.align2
    f2_al = _leaky(jnp.dot(f2d_ref[0], a1w_ref[...],
                           preferred_element_type=jnp.float32)
                   + sm[5:6, 0:c2p])                      # fuse2d.align1

    rows = t * thw + lax.broadcasted_iota(jnp.int32, (thw, 1), 0)
    mask = (rows < HW).astype(jnp.float32)                # ignore padded rows
    ps = jnp.sum(mask * (f2_al + f3_al), axis=0, keepdims=True)   # (1, c2p)

    f2o_ref[0] = f2_al.astype(f2o_ref.dtype)
    f3o_ref[0] = f3_al.astype(f3o_ref.dtype)
    ps_ref[0] = jnp.broadcast_to(ps, (SUB, c2p))


def interp_align_2d(gxy_r, knn_f3, knn_uv, f2d_pad, sm2, ocw, a2w, a1w,
                    *, HW, thw, c2d, c3d, c2p):
    bs, HWp, _ = knn_f3.shape
    T = HWp // thw
    rep = lambda b, t: (0, 0)
    return pl.pallas_call(
        functools.partial(_interp_align2d_kernel, HW=HW, thw=thw,
                          c3d=c3d, c2p=c2p),
        out_shape=(
            jax.ShapeDtypeStruct((bs, HWp, c2p), jnp.bfloat16),
            jax.ShapeDtypeStruct((bs, HWp, c2p), jnp.bfloat16),
            jax.ShapeDtypeStruct((bs, SUB * T, c2p), jnp.float32),
        ),
        grid_spec=pltpu.PrefetchScalarGridSpec(
            num_scalar_prefetch=0,
            grid=(bs, T),
            in_specs=[
                pl.BlockSpec((thw, 2), lambda b, t: (t, 0)),
                pl.BlockSpec((1, thw, c3d), lambda b, t: (b, t, 0)),
                pl.BlockSpec((1, thw, 2), lambda b, t: (b, t, 0)),
                pl.BlockSpec((1, thw, c2d), lambda b, t: (b, t, 0)),
                pl.BlockSpec(sm2.shape, rep),
                pl.BlockSpec(ocw.shape, rep),
                pl.BlockSpec(a2w.shape, rep),
                pl.BlockSpec(a1w.shape, rep),
            ],
            out_specs=[
                pl.BlockSpec((1, thw, c2p), lambda b, t: (b, t, 0)),
                pl.BlockSpec((1, thw, c2p), lambda b, t: (b, t, 0)),
                pl.BlockSpec((1, SUB, c2p), lambda b, t: (b, t, 0)),
            ],
        ),
        compiler_params=pltpu.CompilerParams(
            dimension_semantics=("parallel", "parallel"),
            vmem_limit_bytes=_VMEM_LIMIT),
    )(gxy_r, knn_f3, knn_uv, f2d_pad, sm2, ocw, a2w, a1w)


# ----------------------------------------------------------------------------
# Kernel 3: mlps3d + fuse3d.align1/align2 + partial channel pooling
#           (bilinear grid_sample result fused into the XLA gather in JAX).
# ----------------------------------------------------------------------------
def _mlps_align3d_kernel(smp_ref, f3d_ref, sm_ref, mlw_ref, a1w_ref, a2w_ref,
                         f2o_ref, f3o_ref, ps_ref,
                         *, N, tn, c2d, c3p):
    t = pl.program_id(1)
    sm = sm_ref[...]
    mlp = _leaky(jnp.dot(smp_ref[0], mlw_ref[...],
                         preferred_element_type=jnp.float32)
                 + sm[0:1, 0:c2d])                        # mlps3d
    f2a = _leaky(jnp.dot(mlp.astype(jnp.bfloat16), a1w_ref[...],
                         preferred_element_type=jnp.float32)
                 + sm[1:2, 0:c3p])                        # fuse3d.align1
    f3a = _leaky(jnp.dot(f3d_ref[0], a2w_ref[...],
                         preferred_element_type=jnp.float32)
                 + sm[2:3, 0:c3p])                        # fuse3d.align2

    rows = t * tn + lax.broadcasted_iota(jnp.int32, (tn, 1), 0)
    mask = (rows < N).astype(jnp.float32)
    ps = jnp.sum(mask * (f2a + f3a), axis=0, keepdims=True)

    f2o_ref[0] = f2a.astype(f2o_ref.dtype)
    f3o_ref[0] = f3a.astype(f3o_ref.dtype)
    ps_ref[0] = jnp.broadcast_to(ps, (SUB, c3p))


def mlps_align_3d(sampled, f3d_pad, sm3, mlw, a1w, a2w,
                  *, N, tn, c2d, c3d, c3p):
    bs, Np3, _ = sampled.shape
    T = Np3 // tn
    rep = lambda b, t: (0, 0)
    return pl.pallas_call(
        functools.partial(_mlps_align3d_kernel, N=N, tn=tn, c2d=c2d, c3p=c3p),
        out_shape=(
            jax.ShapeDtypeStruct((bs, Np3, c3p), jnp.bfloat16),
            jax.ShapeDtypeStruct((bs, Np3, c3p), jnp.bfloat16),
            jax.ShapeDtypeStruct((bs, SUB * T, c3p), jnp.float32),
        ),
        grid_spec=pltpu.PrefetchScalarGridSpec(
            num_scalar_prefetch=0,
            grid=(bs, T),
            in_specs=[
                pl.BlockSpec((1, tn, c2d), lambda b, t: (b, t, 0)),
                pl.BlockSpec((1, tn, c3d), lambda b, t: (b, t, 0)),
                pl.BlockSpec(sm3.shape, rep),
                pl.BlockSpec(mlw.shape, rep),
                pl.BlockSpec(a1w.shape, rep),
                pl.BlockSpec(a2w.shape, rep),
            ],
            out_specs=[
                pl.BlockSpec((1, tn, c3p), lambda b, t: (b, t, 0)),
                pl.BlockSpec((1, tn, c3p), lambda b, t: (b, t, 0)),
                pl.BlockSpec((1, SUB, c3p), lambda b, t: (b, t, 0)),
            ],
        ),
        compiler_params=pltpu.CompilerParams(
            dimension_semantics=("parallel", "parallel"),
            vmem_limit_bytes=_VMEM_LIMIT),
    )(sampled, f3d_pad, sm3, mlw, a1w, a2w)


# ----------------------------------------------------------------------------
# Kernel 4: SK blend, writing the channels-first output directly
#           (per-128-row chunks, in-kernel XLU transpose).
# ----------------------------------------------------------------------------
def _blend_t_kernel(fa_ref, fb_ref, w1_ref, w2_ref, o_ref, *, tile):
    w1 = w1_ref[0]                                        # (1, Cp)
    w2 = w2_ref[0]
    for i in range(tile // LANE):
        lo, hi = i * LANE, (i + 1) * LANE
        v = (fa_ref[0, lo:hi, :].astype(jnp.float32) * w1
             + fb_ref[0, lo:hi, :].astype(jnp.float32) * w2)      # (128, Cp)
        o_ref[0, :, lo:hi] = jnp.transpose(v, (1, 0))             # (Cp, 128)


def sk_blend_t(fa, fb, w1, w2, *, tile):
    bs, Mp, Cp = fa.shape
    T = Mp // tile
    return pl.pallas_call(
        functools.partial(_blend_t_kernel, tile=tile),
        out_shape=jax.ShapeDtypeStruct((bs, Cp, Mp), jnp.float32),
        grid_spec=pltpu.PrefetchScalarGridSpec(
            num_scalar_prefetch=0,
            grid=(bs, T),
            in_specs=[
                pl.BlockSpec((1, tile, Cp), lambda b, t: (b, t, 0)),
                pl.BlockSpec((1, tile, Cp), lambda b, t: (b, t, 0)),
                pl.BlockSpec((1, 1, Cp), lambda b, t: (b, 0, 0)),
                pl.BlockSpec((1, 1, Cp), lambda b, t: (b, 0, 0)),
            ],
            out_specs=pl.BlockSpec((1, Cp, tile), lambda b, t: (b, 0, t)),
        ),
        compiler_params=pltpu.CompilerParams(
            dimension_semantics=("parallel", "parallel"),
            vmem_limit_bytes=_VMEM_LIMIT),
    )(fa, fb, w1.reshape(bs, 1, Cp), w2.reshape(bs, 1, Cp))


# ----------------------------------------------------------------------------
# SK squeeze: tiny per-batch FCs in plain JAX (pool sums come from the kernels)
# ----------------------------------------------------------------------------
def _sk_weights(pool_sum, count, w_mid, w_out):
    s = pool_sum / jnp.float32(count)                     # global average pool
    mid = jnp.maximum(jnp.dot(s, w_mid), 0.0)             # fc_mid (no bias) + ReLU
    gates = jax.nn.sigmoid(jnp.dot(mid, w_out))           # fc_out (no bias) + Sigmoid
    a = gates[:, 0::2]                                    # reshape(bs, C, 2)[..., 0]
    b = gates[:, 1::2]                                    # reshape(bs, C, 2)[..., 1]
    m = jnp.maximum(a, b)                                 # pairwise softmax
    ea = jnp.exp(a - m)
    eb = jnp.exp(b - m)
    inv = 1.0 / (ea + eb)
    return ea * inv, eb * inv


# ----------------------------------------------------------------------------
# deterministic parameter init (weights stored (in, out); torch stores (out, in))
# ----------------------------------------------------------------------------
def init_clfm_params(key, c2d, c3d):
    ks = jax.random.split(key, 20)

    def w(k, shape, scale=0.1):
        return jax.random.normal(k, shape, jnp.float32) * scale

    p = {}
    # FusionAwareInterp: score_net = [Conv(3->1)+leaky, Conv(1->C3)+sigmoid], out_conv
    p["interp_score1_w"] = w(ks[0], (1, 3))               # weights for [dx, dy, |d|]
    p["interp_score1_b"] = w(ks[1], (1, 1))
    p["interp_score2_w"] = w(ks[2], (1, c3d))
    p["interp_score2_b"] = w(ks[3], (1, c3d))
    p["interp_outconv_w"] = w(ks[4], (c3d, c3d))
    p["interp_outconv_b"] = w(ks[5], (c3d,))
    # mlps3d: Conv1d(c2d -> c2d)
    p["mlps3d_w"] = w(ks[6], (c2d, c2d))
    p["mlps3d_b"] = w(ks[7], (c2d,))
    # fuse2d = SKFusion(c2d, c3d, c2d, 'nchw', reduction=2)
    p["f2d_align1_w"] = w(ks[8], (c2d, c2d))
    p["f2d_align1_b"] = w(ks[9], (c2d,))
    p["f2d_align2_w"] = w(ks[10], (c3d, c2d))
    p["f2d_align2_b"] = w(ks[11], (c2d,))
    p["f2d_fc_mid_w"] = w(ks[12], (c2d, c2d // 2))
    p["f2d_fc_out_w"] = w(ks[13], (c2d // 2, 2 * c2d))
    # fuse3d = SKFusion(c2d, c3d, c3d, 'ncm', reduction=2)
    p["f3d_align1_w"] = w(ks[14], (c2d, c3d))
    p["f3d_align1_b"] = w(ks[15], (c3d,))
    p["f3d_align2_w"] = w(ks[16], (c3d, c3d))
    p["f3d_align2_b"] = w(ks[17], (c3d,))
    p["f3d_fc_mid_w"] = w(ks[18], (c3d, c3d // 2))
    p["f3d_fc_out_w"] = w(ks[19], (c3d // 2, 2 * c3d))
    return p


def _prepare_params(p, c2d, c3d):
    """Pad output channels to 128 multiples, pre-cast weights to bf16, pack smalls."""
    bf = jnp.bfloat16
    c2p = _round_up(c2d, LANE)
    c3p = _round_up(c3d, LANE)
    cp2 = max(c2p, _round_up(c3d, LANE))
    cp3 = max(c3p, _round_up(c2d, LANE))

    sm2 = jnp.zeros((SUB, cp2), jnp.float32)
    sm2 = sm2.at[0, 0:3].set(p["interp_score1_w"][0])
    sm2 = sm2.at[0, 3].set(p["interp_score1_b"][0, 0])
    sm2 = sm2.at[1, 0:c3d].set(p["interp_score2_w"][0])
    sm2 = sm2.at[2, 0:c3d].set(p["interp_score2_b"][0])
    sm2 = sm2.at[3, 0:c3d].set(p["interp_outconv_b"])
    sm2 = sm2.at[4, 0:c2d].set(p["f2d_align2_b"])
    sm2 = sm2.at[5, 0:c2d].set(p["f2d_align1_b"])

    sm3 = jnp.zeros((SUB, cp3), jnp.float32)
    sm3 = sm3.at[0, 0:c2d].set(p["mlps3d_b"])
    sm3 = sm3.at[1, 0:c3d].set(p["f3d_align1_b"])
    sm3 = sm3.at[2, 0:c3d].set(p["f3d_align2_b"])

    return dict(
        c2p=c2p, c3p=c3p, sm2=sm2, sm3=sm3,
        ocw=p["interp_outconv_w"].astype(bf),
        a2w_2d=_pad_cols(p["f2d_align2_w"], c2p).astype(bf),
        a1w_2d=_pad_cols(p["f2d_align1_w"], c2p).astype(bf),
        mlw=p["mlps3d_w"].astype(bf),
        a1w_3d=_pad_cols(p["f3d_align1_w"], c3p).astype(bf),
        a2w_3d=_pad_cols(p["f3d_align2_w"], c3p).astype(bf),
    )


# ----------------------------------------------------------------------------
# CLFM forward
# ----------------------------------------------------------------------------
def clfm_forward(params, uv, feat_2d, feat_3d):
    # uv: (bs, 2, N) pixel coords (x, y); feat_2d: (bs, C2, H, W); feat_3d: (bs, C3, N)
    bs, c2d, H, W = feat_2d.shape
    c3d = feat_3d.shape[1]
    N = uv.shape[2]
    HW = H * W
    f32 = jnp.float32
    bf = jnp.bfloat16

    prep = _prepare_params(params, c2d, c3d)
    c2p, c3p = prep["c2p"], prep["c3p"]

    min_tiles = 2 if bs == 1 else 1          # keep both v7x TensorCores busy
    HWp, thw = _pick_tile(HW, target=1024, min_tiles=min_tiles)
    Np3, tn = _pick_tile(N, target=1024, min_tiles=min_tiles)

    f2d_flat = jnp.transpose(feat_2d, (0, 2, 3, 1)).reshape(bs, HW, c2d)
    f3d_nl = jnp.transpose(feat_3d, (0, 2, 1))                            # (bs, N, C3)
    uv_nl = jnp.transpose(uv, (0, 2, 1)).astype(f32)                      # (bs, N, 2)

    # ------------------------------- 2D branch ------------------------------
    flat = jnp.arange(HW, dtype=jnp.int32)                                # flat = y*W + x
    gx = (flat % W).astype(f32)
    gy = (flat // W).astype(f32)
    gxy_r = jnp.pad(jnp.stack([gx, gy], axis=1), ((0, HWp - HW), (0, 0)))  # (HWp, 2)
    gxy_t = jnp.pad(jnp.stack([gx, gy], axis=0), ((0, 0), (0, HWp - HW)))  # (2, HWp)

    Nu = _round_up(N, SUB)
    uv_r = jnp.pad(uv_nl, ((0, 0), (0, Nu - N), (0, 0)), constant_values=1e8)

    idx = nn_search(gxy_t, uv_r, thw=thw)                                 # (bs, HWp) int32
    idx3 = idx[..., None]

    knn_f3 = jnp.take_along_axis(f3d_nl.astype(bf), idx3, axis=1)         # (bs, HWp, C3)
    knn_uv = jnp.take_along_axis(uv_nl, idx3, axis=1)                     # (bs, HWp, 2) f32
    f2d_pad = jnp.pad(f2d_flat, ((0, 0), (0, HWp - HW), (0, 0))).astype(bf)

    f2_al, f3_al, psum2 = interp_align_2d(
        gxy_r, knn_f3, knn_uv, f2d_pad, prep["sm2"], prep["ocw"],
        prep["a2w_2d"], prep["a1w_2d"],
        HW=HW, thw=thw, c2d=c2d, c3d=c3d, c2p=c2p)

    T2 = HWp // thw
    pool2 = psum2.reshape(bs, T2, SUB, c2p)[:, :, 0, :c2d].sum(axis=1)    # (bs, C2)
    w1_2d, w2_2d = _sk_weights(pool2, HW,
                               params["f2d_fc_mid_w"], params["f2d_fc_out_w"])
    w1_2d = jnp.pad(w1_2d, ((0, 0), (0, c2p - c2d)))
    w2_2d = jnp.pad(w2_2d, ((0, 0), (0, c2p - c2d)))
    out2d_t = sk_blend_t(f2_al, f3_al, w1_2d, w2_2d, tile=thw)            # (bs, c2p, HWp)
    out2d = out2d_t[:, :c2d, :HW].reshape(bs, c2d, H, W)

    # ------------------------------- 3D branch ------------------------------
    # bilinear grid_sample (align_corners=True, zero padding) fused with the gather
    ux_, uy_ = uv_nl[..., 0], uv_nl[..., 1]
    x0f, y0f = jnp.floor(ux_), jnp.floor(uy_)
    x0, y0 = x0f.astype(jnp.int32), y0f.astype(jnp.int32)
    x1, y1 = x0 + 1, y0 + 1
    wx1, wy1 = ux_ - x0f, uy_ - y0f
    wx0, wy0 = 1.0 - wx1, 1.0 - wy1

    def corner(xi, yi, wgt):
        valid = (xi >= 0) & (xi < W) & (yi >= 0) & (yi < H)
        flat_i = jnp.clip(yi, 0, H - 1) * W + jnp.clip(xi, 0, W - 1)
        rows = jnp.take_along_axis(f2d_flat, flat_i[..., None], axis=1)   # (bs, N, C2)
        return rows * jnp.where(valid, wgt, 0.0)[..., None]

    sampled = (corner(x0, y0, wx0 * wy0) + corner(x1, y0, wx1 * wy0)
               + corner(x0, y1, wx0 * wy1) + corner(x1, y1, wx1 * wy1))
    sampled = jnp.pad(sampled, ((0, 0), (0, Np3 - N), (0, 0))).astype(bf)
    f3d_pad = jnp.pad(f3d_nl, ((0, 0), (0, Np3 - N), (0, 0))).astype(bf)

    f2a3, f3a3, psum3 = mlps_align_3d(
        sampled, f3d_pad, prep["sm3"], prep["mlw"], prep["a1w_3d"], prep["a2w_3d"],
        N=N, tn=tn, c2d=c2d, c3d=c3d, c3p=c3p)

    T3 = Np3 // tn
    pool3 = psum3.reshape(bs, T3, SUB, c3p)[:, :, 0, :c3d].sum(axis=1)    # (bs, C3)
    w1_3d, w2_3d = _sk_weights(pool3, N,
                               params["f3d_fc_mid_w"], params["f3d_fc_out_w"])
    w1_3d = jnp.pad(w1_3d, ((0, 0), (0, c3p - c3d)))
    w2_3d = jnp.pad(w2_3d, ((0, 0), (0, c3p - c3d)))
    out3d_t = sk_blend_t(f2a3, f3a3, w1_3d, w2_3d, tile=tn)               # (bs, c3p, Np3)
    out3d = out3d_t[:, :c3d, :N]                                          # (bs, C3, N)

    return out2d, out3d


if __name__ == "__main__":
    key = jax.random.PRNGKey(0)
    bs, c2d, c3d, H, W, N = 2, 8, 8, 8, 16, 16
    k1, k2, k3, k4, kp = jax.random.split(key, 5)

    ux = jax.random.uniform(k1, (bs, 1, N), jnp.float32, 0.0, W - 1.0)
    uy = jax.random.uniform(k2, (bs, 1, N), jnp.float32, 0.0, H - 1.0)
    uv = jnp.concatenate([ux, uy], axis=1)                                # (bs, 2, N)
    feat_2d = jax.random.normal(k3, (bs, c2d, H, W), jnp.float32)
    feat_3d = jax.random.normal(k4, (bs, c3d, N), jnp.float32)
    params = init_clfm_params(kp, c2d, c3d)

    out2d, out3d = jax.jit(clfm_forward)(params, uv, feat_2d, feat_3d)
    jax.block_until_ready((out2d, out3d))
    assert out2d.shape == (bs, c2d, H, W)
    assert out3d.shape == (bs, c3d, N)
    assert bool(jnp.all(jnp.isfinite(out2d))) and bool(jnp.all(jnp.isfinite(out3d)))
    print("KERNEL_OK")
</pallas_src>

<mosaic_0001>
module attributes {stable_mosaic.version = 11 : i64} {
  func.func @_mlps_align3d_kernel(%arg0: i32, %arg1: i32, %arg2: memref<1x128x8xbf16, #tpu.memory_space<vmem>>, %arg3: memref<1x128x8xbf16, #tpu.memory_space<vmem>>, %arg4: memref<8x128xf32, #tpu.memory_space<vmem>>, %arg5: memref<8x8xbf16, #tpu.memory_space<vmem>>, %arg6: memref<8x128xbf16, #tpu.memory_space<vmem>>, %arg7: memref<8x128xbf16, #tpu.memory_space<vmem>>, %arg8: memref<1x128x128xbf16, #tpu.memory_space<vmem>>, %arg9: memref<1x128x128xbf16, #tpu.memory_space<vmem>>, %arg10: memref<1x8x128xf32, #tpu.memory_space<vmem>>) attributes {dimension_semantics = [#tpu.dimension_semantics<parallel>, #tpu.dimension_semantics<parallel>], iteration_bounds = array<i64: 2, 1>, scalar_prefetch = 0 : i64, scratch_operands = 0 : i64, tpu.core_type = #tpu.core_type<tc>, window_params = [{transform_indices = @transform_0, window_bounds = array<i64: 1, 128, 8>}, {transform_indices = @transform_1, window_bounds = array<i64: 1, 128, 8>}, {pipeline_mode = #tpu.pipeline_mode<synchronous>, transform_indices = @transform_2, window_bounds = array<i64: 8, 128>}, {pipeline_mode = #tpu.pipeline_mode<synchronous>, transform_indices = @transform_3, window_bounds = array<i64: 8, 8>}, {pipeline_mode = #tpu.pipeline_mode<synchronous>, transform_indices = @transform_4, window_bounds = array<i64: 8, 128>}, {pipeline_mode = #tpu.pipeline_mode<synchronous>, transform_indices = @transform_5, window_bounds = array<i64: 8, 128>}, {transform_indices = @transform_6, window_bounds = array<i64: 1, 128, 128>}, {transform_indices = @transform_7, window_bounds = array<i64: 1, 128, 128>}, {transform_indices = @transform_8, window_bounds = array<i64: 1, 8, 128>}]} {
    %c0 = arith.constant 0 : index
    %c0_0 = arith.constant 0 : index
    %0 = vector.load %arg4[%c0, %c0_0] : memref<8x128xf32, #tpu.memory_space<vmem>>, vector<8x128xf32>
    %c0_1 = arith.constant 0 : index
    %c0_2 = arith.constant 0 : index
    %c0_3 = arith.constant 0 : index
    %1 = vector.load %arg2[%c0_1, %c0_2, %c0_3] : memref<1x128x8xbf16, #tpu.memory_space<vmem>>, vector<1x128x8xbf16>
    %2 = vector.shape_cast %1 : vector<1x128x8xbf16> to vector<128x8xbf16>
    %c0_4 = arith.constant 0 : index
    %c0_5 = arith.constant 0 : index
    %3 = vector.load %arg5[%c0_4, %c0_5] : memref<8x8xbf16, #tpu.memory_space<vmem>>, vector<8x8xbf16>
    %cst = arith.constant dense<0.000000e+00> : vector<128x8xf32>
    %4 = tpu.matmul %2, %3, %cst {dimension_numbers = #tpu.dot_dimension_numbers<[1], [0], [0], [1], [0, 0, 1, 1], [], []>} : vector<128x8xbf16>, vector<8x8xbf16>, vector<128x8xf32> -> vector<128x8xf32>
    %5 = vector.extract_strided_slice %0 {offsets = [0, 0], sizes = [1, 8], strides = [1, 1]} : vector<8x128xf32> to vector<1x8xf32>
    %6 = vector.broadcast %5 : vector<1x8xf32> to vector<128x8xf32>
    %7 = arith.addf %4, %6 : vector<128x8xf32>
    %cst_6 = arith.constant 0.000000e+00 : f32
    %8 = vector.broadcast %cst_6 : f32 to vector<128x8xf32>
    %9 = arith.cmpf oge, %7, %8 : vector<128x8xf32>
    %cst_7 = arith.constant 1.000000e-01 : f32
    %10 = vector.broadcast %cst_7 : f32 to vector<128x8xf32>
    %11 = arith.mulf %10, %7 : vector<128x8xf32>
    %12 = arith.select %9, %7, %11 : vector<128x8xi1>, vector<128x8xf32>
    %13 = arith.truncf %12 : vector<128x8xf32> to vector<128x8xbf16>
    %c0_8 = arith.constant 0 : index
    %c0_9 = arith.constant 0 : index
    %14 = vector.load %arg6[%c0_8, %c0_9] : memref<8x128xbf16, #tpu.memory_space<vmem>>, vector<8x128xbf16>
    %cst_10 = arith.constant dense<0.000000e+00> : vector<128x128xf32>
    %15 = tpu.matmul %13, %14, %cst_10 {dimension_numbers = #tpu.dot_dimension_numbers<[1], [0], [0], [1], [0, 0, 1, 1], [], []>} : vector<128x8xbf16>, vector<8x128xbf16>, vector<128x128xf32> -> vector<128x128xf32>
    %16 = vector.extract_strided_slice %0 {offsets = [1, 0], sizes = [1, 128], strides = [1, 1]} : vector<8x128xf32> to vector<1x128xf32>
    %17 = vector.broadcast %16 : vector<1x128xf32> to vector<128x128xf32>
    %18 = arith.addf %15, %17 : vector<128x128xf32>
    %cst_11 = arith.constant 0.000000e+00 : f32
    %19 = vector.broadcast %cst_11 : f32 to vector<128x128xf32>
    %20 = arith.cmpf oge, %18, %19 : vector<128x128xf32>
    %cst_12 = arith.constant 1.000000e-01 : f32
    %21 = vector.broadcast %cst_12 : f32 to vector<128x128xf32>
    %22 = arith.mulf %21, %18 : vector<128x128xf32>
    %23 = arith.select %20, %18, %22 : vector<128x128xi1>, vector<128x128xf32>
    %c0_13 = arith.constant 0 : index
    %c0_14 = arith.constant 0 : index
    %c0_15 = arith.constant 0 : index
    %24 = vector.load %arg3[%c0_13, %c0_14, %c0_15] : memref<1x128x8xbf16, #tpu.memory_space<vmem>>, vector<1x128x8xbf16>
    %25 = vector.shape_cast %24 : vector<1x128x8xbf16> to vector<128x8xbf16>
    %c0_16 = arith.constant 0 : index
    %c0_17 = arith.constant 0 : index
    %26 = vector.load %arg7[%c0_16, %c0_17] : memref<8x128xbf16, #tpu.memory_space<vmem>>, vector<8x128xbf16>
    %cst_18 = arith.constant dense<0.000000e+00> : vector<128x128xf32>
    %27 = tpu.matmul %25, %26, %cst_18 {dimension_numbers = #tpu.dot_dimension_numbers<[1], [0], [0], [1], [0, 0, 1, 1], [], []>} : vector<128x8xbf16>, vector<8x128xbf16>, vector<128x128xf32> -> vector<128x128xf32>
    %28 = vector.extract_strided_slice %0 {offsets = [2, 0], sizes = [1, 128], strides = [1, 1]} : vector<8x128xf32> to vector<1x128xf32>
    %29 = vector.broadcast %28 : vector<1x128xf32> to vector<128x128xf32>
    %30 = arith.addf %27, %29 : vector<128x128xf32>
    %cst_19 = arith.constant 0.000000e+00 : f32
    %31 = vector.broadcast %cst_19 : f32 to vector<128x128xf32>
    %32 = arith.cmpf oge, %30, %31 : vector<128x128xf32>
    %cst_20 = arith.constant 1.000000e-01 : f32
    %33 = vector.broadcast %cst_20 : f32 to vector<128x128xf32>
    %34 = arith.mulf %33, %30 : vector<128x128xf32>
    %35 = arith.select %32, %30, %34 : vector<128x128xi1>, vector<128x128xf32>
    %c128_i32 = arith.constant 128 : i32
    %36 = arith.muli %arg1, %c128_i32 : i32
    %37 = tpu.iota {dimensions = array<i32: 0>} : vector<128x1xi32>
    %38 = vector.broadcast %36 : i32 to vector<128x1xi32>
    %39 = arith.addi %38, %37 : vector<128x1xi32>
    %c16_i32 = arith.constant 16 : i32
    %40 = vector.broadcast %c16_i32 : i32 to vector<128x1xi32>
    %41 = arith.cmpi slt, %39, %40 : vector<128x1xi32>
    %42 = arith.extui %41 : vector<128x1xi1> to vector<128x1xi32>
    %43 = arith.sitofp %42 : vector<128x1xi32> to vector<128x1xf32>
    %44 = arith.addf %23, %35 : vector<128x128xf32>
    %45 = vector.broadcast %43 : vector<128x1xf32> to vector<128x128xf32>
    %46 = arith.mulf %45, %44 : vector<128x128xf32>
    %cst_21 = arith.constant dense<0.000000e+00> : vector<128xf32>
    %47 = vector.multi_reduction <add>, %46, %cst_21 [0] : vector<128x128xf32> to vector<128xf32>
    %48 = vector.shape_cast %47 : vector<128xf32> to vector<1x128xf32>
    %49 = arith.truncf %23 : vector<128x128xf32> to vector<128x128xbf16>
    %c0_22 = arith.constant 0 : index
    %c0_23 = arith.constant 0 : index
    %c0_24 = arith.constant 0 : index
    %50 = vector.load %arg8[%c0_22, %c0_23, %c0_24] : memref<1x128x128xbf16, #tpu.memory_space<vmem>>, vector<1x128x128xbf16>
    %51 = vector.shape_cast %50 : vector<1x128x128xbf16> to vector<128x128xbf16>
    %52 = vector.shape_cast %49 : vector<128x128xbf16> to vector<1x128x128xbf16>
    tpu.vector_store %arg8[%c0_22, %c0_23, %c0_24], %52 {strides = array<i32>} : memref<1x128x128xbf16, #tpu.memory_space<vmem>>, vector<1x128x128xbf16>,
    %53 = arith.truncf %35 : vector<128x128xf32> to vector<128x128xbf16>
    %c0_25 = arith.constant 0 : index
    %c0_26 = arith.constant 0 : index
    %c0_27 = arith.constant 0 : index
    %54 = vector.load %arg9[%c0_25, %c0_26, %c0_27] : memref<1x128x128xbf16, #tpu.memory_space<vmem>>, vector<1x128x128xbf16>
    %55 = vector.shape_cast %54 : vector<1x128x128xbf16> to vector<128x128xbf16>
    %56 = vector.shape_cast %53 : vector<128x128xbf16> to vector<1x128x128xbf16>
    tpu.vector_store %arg9[%c0_25, %c0_26, %c0_27], %56 {strides = array<i32>} : memref<1x128x128xbf16, #tpu.memory_space<vmem>>, vector<1x128x128xbf16>,
    %57 = vector.shape_cast %48 : vector<1x128xf32> to vector<1x128xf32>
    %58 = vector.broadcast %57 : vector<1x128xf32> to vector<8x128xf32>
    %c0_28 = arith.constant 0 : index
    %c0_29 = arith.constant 0 : index
    %c0_30 = arith.constant 0 : index
    %59 = vector.load %arg10[%c0_28, %c0_29, %c0_30] : memref<1x8x128xf32, #tpu.memory_space<vmem>>, vector<1x8x128xf32>
    %60 = vector.shape_cast %59 : vector<1x8x128xf32> to vector<8x128xf32>
    %61 = vector.shape_cast %58 : vector<8x128xf32> to vector<1x8x128xf32>
    tpu.vector_store %arg10[%c0_28, %c0_29, %c0_30], %61 {strides = array<i32>} : memref<1x8x128xf32, #tpu.memory_space<vmem>>, vector<1x8x128xf32>,
    return
  }
  func.func @transform_0(%arg0: i32, %arg1: i32) -> (i32, i32, i32) {
    %c0_i32 = arith.constant 0 : i32
    %c0_i32_0 = arith.constant 0 : i32
    return %arg0, %arg1, %c0_i32 : i32, i32, i32
  }
  func.func @transform_1(%arg0: i32, %arg1: i32) -> (i32, i32, i32) {
    %c0_i32 = arith.constant 0 : i32
    %c0_i32_0 = arith.constant 0 : i32
    return %arg0, %arg1, %c0_i32 : i32, i32, i32
  }
  func.func @transform_2(%arg0: i32, %arg1: i32) -> (i32, i32) {
    %c0_i32 = arith.constant 0 : i32
    %c0_i32_0 = arith.constant 0 : i32
    %c0_i32_1 = arith.constant 0 : i32
    return %c0_i32, %c0_i32_0 : i32, i32
  }
  func.func @transform_3(%arg0: i32, %arg1: i32) -> (i32, i32) {
    %c0_i32 = arith.constant 0 : i32
    %c0_i32_0 = arith.constant 0 : i32
    %c0_i32_1 = arith.constant 0 : i32
    return %c0_i32, %c0_i32_0 : i32, i32
  }
  func.func @transform_4(%arg0: i32, %arg1: i32) -> (i32, i32) {
    %c0_i32 = arith.constant 0 : i32
    %c0_i32_0 = arith.constant 0 : i32
    %c0_i32_1 = arith.constant 0 : i32
    return %c0_i32, %c0_i32_0 : i32, i32
  }
  func.func @transform_5(%arg0: i32, %arg1: i32) -> (i32, i32) {
    %c0_i32 = arith.constant 0 : i32
    %c0_i32_0 = arith.constant 0 : i32
    %c0_i32_1 = arith.constant 0 : i32
    return %c0_i32, %c0_i32_0 : i32, i32
  }
  func.func @transform_6(%arg0: i32, %arg1: i32) -> (i32, i32, i32) {
    %c0_i32 = arith.constant 0 : i32
    %c0_i32_0 = arith.constant 0 : i32
    return %arg0, %arg1, %c0_i32 : i32, i32, i32
  }
  func.func @transform_7(%arg0: i32, %arg1: i32) -> (i32, i32, i32) {
    %c0_i32 = arith.constant 0 : i32
    %c0_i32_0 = arith.constant 0 : i32
    return %arg0, %arg1, %c0_i32 : i32, i32, i32
  }
  func.func @transform_8(%arg0: i32, %arg1: i32) -> (i32, i32, i32) {
    %c0_i32 = arith.constant 0 : i32
    %c0_i32_0 = arith.constant 0 : i32
    return %arg0, %arg1, %c0_i32 : i32, i32, i32
  }
}

module attributes {stable_mosaic.version = 11 : i64} {
  func.func @_blend_t_kernel(%arg0: i32, %arg1: i32, %arg2: memref<1x128x128xbf16, #tpu.memory_space<vmem>>, %arg3: memref<1x128x128xbf16, #tpu.memory_space<vmem>>, %arg4: memref<1x1x128xf32, #tpu.memory_space<vmem>>, %arg5: memref<1x1x128xf32, #tpu.memory_space<vmem>>, %arg6: memref<1x128x128xf32, #tpu.memory_space<vmem>>) attributes {dimension_semantics = [#tpu.dimension_semantics<parallel>, #tpu.dimension_semantics<parallel>], iteration_bounds = array<i64: 2, 1>, scalar_prefetch = 0 : i64, scratch_operands = 0 : i64, tpu.core_type = #tpu.core_type<tc>, window_params = [{transform_indices = @transform_0, window_bounds = array<i64: 1, 128, 128>}, {transform_indices = @transform_1, window_bounds = array<i64: 1, 128, 128>}, {transform_indices = @transform_2, window_bounds = array<i64: 1, 1, 128>}, {transform_indices = @transform_3, window_bounds = array<i64: 1, 1, 128>}, {transform_indices = @transform_4, window_bounds = array<i64: 1, 128, 128>}]} {
    %c0 = arith.constant 0 : index
    %c0_0 = arith.constant 0 : index
    %c0_1 = arith.constant 0 : index
    %0 = vector.load %arg4[%c0, %c0_0, %c0_1] : memref<1x1x128xf32, #tpu.memory_space<vmem>>, vector<1x1x128xf32>
    %1 = vector.shape_cast %0 : vector<1x1x128xf32> to vector<1x128xf32>
    %c0_2 = arith.constant 0 : index
    %c0_3 = arith.constant 0 : index
    %c0_4 = arith.constant 0 : index
    %2 = vector.load %arg5[%c0_2, %c0_3, %c0_4] : memref<1x1x128xf32, #tpu.memory_space<vmem>>, vector<1x1x128xf32>
    %3 = vector.shape_cast %2 : vector<1x1x128xf32> to vector<1x128xf32>
    %c0_5 = arith.constant 0 : index
    %c0_6 = arith.constant 0 : index
    %c0_7 = arith.constant 0 : index
    %4 = vector.load %arg2[%c0_5, %c0_6, %c0_7] : memref<1x128x128xbf16, #tpu.memory_space<vmem>>, vector<1x128x128xbf16>
    %5 = vector.shape_cast %4 : vector<1x128x128xbf16> to vector<128x128xbf16>
    %6 = arith.extf %5 : vector<128x128xbf16> to vector<128x128xf32>
    %7 = vector.broadcast %1 : vector<1x128xf32> to vector<128x128xf32>
    %8 = arith.mulf %6, %7 : vector<128x128xf32>
    %c0_8 = arith.constant 0 : index
    %c0_9 = arith.constant 0 : index
    %c0_10 = arith.constant 0 : index
    %9 = vector.load %arg3[%c0_8, %c0_9, %c0_10] : memref<1x128x128xbf16, #tpu.memory_space<vmem>>, vector<1x128x128xbf16>
    %10 = vector.shape_cast %9 : vector<1x128x128xbf16> to vector<128x128xbf16>
    %11 = arith.extf %10 : vector<128x128xbf16> to vector<128x128xf32>
    %12 = vector.broadcast %3 : vector<1x128xf32> to vector<128x128xf32>
    %13 = arith.mulf %11, %12 : vector<128x128xf32>
    %14 = arith.addf %8, %13 : vector<128x128xf32>
    %15 = tpu.transpose %14, [1, 0] : vector<128x128xf32> -> vector<128x128xf32>
    %c0_11 = arith.constant 0 : index
    %c0_12 = arith.constant 0 : index
    %c0_13 = arith.constant 0 : index
    %16 = vector.load %arg6[%c0_11, %c0_12, %c0_13] : memref<1x128x128xf32, #tpu.memory_space<vmem>>, vector<1x128x128xf32>
    %17 = vector.shape_cast %16 : vector<1x128x128xf32> to vector<128x128xf32>
    %18 = vector.shape_cast %15 : vector<128x128xf32> to vector<1x128x128xf32>
    tpu.vector_store %arg6[%c0_11, %c0_12, %c0_13], %18 {strides = array<i32>} : memref<1x128x128xf32, #tpu.memory_space<vmem>>, vector<1x128x128xf32>,
    return
  }
  func.func @transform_0(%arg0: i32, %arg1: i32) -> (i32, i32, i32) {
    %c0_i32 = arith.constant 0 : i32
    %c0_i32_0 = arith.constant 0 : i32
    return %arg0, %arg1, %c0_i32 : i32, i32, i32
  }
  func.func @transform_1(%arg0: i32, %arg1: i32) -> (i32, i32, i32) {
    %c0_i32 = arith.constant 0 : i32
    %c0_i32_0 = arith.constant 0 : i32
    return %arg0, %arg1, %c0_i32 : i32, i32, i32
  }
  func.func @transform_2(%arg0: i32, %arg1: i32) -> (i32, i32, i32) {
    %c0_i32 = arith.constant 0 : i32
    %c0_i32_0 = arith.constant 0 : i32
    %c0_i32_1 = arith.constant 0 : i32
    return %arg0, %c0_i32, %c0_i32_0 : i32, i32, i32
  }
  func.func @transform_3(%arg0: i32, %arg1: i32) -> (i32, i32, i32) {
    %c0_i32 = arith.constant 0 : i32
    %c0_i32_0 = arith.constant 0 : i32
    %c0_i32_1 = arith.constant 0 : i32
    return %arg0, %c0_i32, %c0_i32_0 : i32, i32, i32
  }
  func.func @transform_4(%arg0: i32, %arg1: i32) -> (i32, i32, i32) {
    %c0_i32 = arith.constant 0 : i32
    %c0_i32_0 = arith.constant 0 : i32
    return %arg0, %c0_i32, %arg1 : i32, i32, i32
  }
}

module attributes {stable_mosaic.version = 11 : i64} {
  func.func @_nn_kernel(%arg0: i32, %arg1: i32, %arg2: memref<2x128xf32, #tpu.memory_space<vmem>>, %arg3: memref<1x16x2xf32, #tpu.memory_space<vmem>>, %arg4: memref<1x8x128xi32, #tpu.memory_space<vmem>>) attributes {dimension_semantics = [#tpu.dimension_semantics<parallel>, #tpu.dimension_semantics<parallel>], iteration_bounds = array<i64: 2, 1>, scalar_prefetch = 0 : i64, scratch_operands = 0 : i64, tpu.core_type = #tpu.core_type<tc>, window_params = [{transform_indices = @transform_0, window_bounds = array<i64: 2, 128>}, {transform_indices = @transform_1, window_bounds = array<i64: 1, 16, 2>}, {transform_indices = @transform_2, window_bounds = array<i64: 1, 8, 128>}]} {
    %c0 = arith.constant 0 : index
    %c0_0 = arith.constant 0 : index
    %0 = vector.load %arg2[%c0, %c0_0] : memref<2x128xf32, #tpu.memory_space<vmem>>, vector<1x128xf32>
    %c1 = arith.constant 1 : index
    %c0_1 = arith.constant 0 : index
    %1 = vector.load %arg2[%c1, %c0_1] : memref<2x128xf32, #tpu.memory_space<vmem>>, vector<1x128xf32>
    %cst = arith.constant 0x7F800000 : f32
    %2 = vector.broadcast %cst : f32 to vector<1x128xf32>
    %c0_i32 = arith.constant 0 : i32
    %3 = vector.broadcast %c0_i32 : i32 to vector<1x128xi32>
    %c0_i32_2 = arith.constant 0 : i32
    %c8_i32 = arith.constant 8 : i32
    %4 = arith.muli %c0_i32_2, %c8_i32 : i32
    %5 = tpu.assume_multiple %4, 8 : i32
    %c0_3 = arith.constant 0 : index
    %6 = arith.index_cast %5 : i32 to index
    %c0_4 = arith.constant 0 : index
    %7 = vector.load %arg3[%c0_3, %6, %c0_4] : memref<1x16x2xf32, #tpu.memory_space<vmem>>, vector<1x8x2xf32>
    %8 = vector.shape_cast %7 : vector<1x8x2xf32> to vector<8x2xf32>
    %9 = vector.extract_strided_slice %8 {offsets = [0, 0], sizes = [8, 1], strides = [1, 1]} : vector<8x2xf32> to vector<8x1xf32>
    %10 = vector.extract_strided_slice %8 {offsets = [0, 1], sizes = [8, 1], strides = [1, 1]} : vector<8x2xf32> to vector<8x1xf32>
    %11 = vector.broadcast %0 : vector<1x128xf32> to vector<8x128xf32>
    %12 = vector.broadcast %9 : vector<8x1xf32> to vector<8x128xf32>
    %13 = arith.subf %11, %12 : vector<8x128xf32>
    %14 = vector.broadcast %1 : vector<1x128xf32> to vector<8x128xf32>
    %15 = vector.broadcast %10 : vector<8x1xf32> to vector<8x128xf32>
    %16 = arith.subf %14, %15 : vector<8x128xf32>
    %17 = arith.mulf %13, %13 : vector<8x128xf32>
    %18 = arith.mulf %16, %16 : vector<8x128xf32>
    %19 = arith.addf %17, %18 : vector<8x128xf32>
    %cst_5 = arith.constant dense<0x7F800000> : vector<128xf32>
    %20 = vector.multi_reduction <minimumf>, %19, %cst_5 [0] : vector<8x128xf32> to vector<128xf32>
    %21 = vector.shape_cast %20 : vector<128xf32> to vector<1x128xf32>
    %22 = tpu.iota {dimensions = array<i32: 0>} : vector<8x128xi32>
    %c8_i32_6 = arith.constant 8 : i32
    %23 = arith.muli %c0_i32_2, %c8_i32_6 : i32
    %24 = vector.broadcast %23 : i32 to vector<8x128xi32>
    %25 = arith.addi %22, %24 : vector<8x128xi32>
    %26 = vector.broadcast %21 : vector<1x128xf32> to vector<8x128xf32>
    %27 = arith.cmpf ole, %19, %26 : vector<8x128xf32>
    %c1073741824_i32 = arith.constant 1073741824 : i32
    %28 = vector.broadcast %c1073741824_i32 : i32 to vector<8x128xi32>
    %29 = arith.select %27, %25, %28 : vector<8x128xi1>, vector<8x128xi32>
    %cst_7 = arith.constant dense<2147483647> : vector<128xi32>
    %30 = vector.multi_reduction <minsi>, %29, %cst_7 [0] : vector<8x128xi32> to vector<128xi32>
    %31 = vector.shape_cast %30 : vector<128xi32> to vector<1x128xi32>
    %32 = arith.cmpf olt, %21, %2 : vector<1x128xf32>
    %33 = arith.select %32, %21, %2 : vector<1x128xi1>, vector<1x128xf32>
    %34 = arith.select %32, %31, %3 : vector<1x128xi1>, vector<1x128xi32>
    %c1_i32 = arith.constant 1 : i32
    %c8_i32_8 = arith.constant 8 : i32
    %35 = arith.muli %c1_i32, %c8_i32_8 : i32
    %36 = tpu.assume_multiple %35, 8 : i32
    %c0_9 = arith.constant 0 : index
    %37 = arith.index_cast %36 : i32 to index
    %c0_10 = arith.constant 0 : index
    %38 = vector.load %arg3[%c0_9, %37, %c0_10] : memref<1x16x2xf32, #tpu.memory_space<vmem>>, vector<1x8x2xf32>
    %39 = vector.shape_cast %38 : vector<1x8x2xf32> to vector<8x2xf32>
    %40 = vector.extract_strided_slice %39 {offsets = [0, 0], sizes = [8, 1], strides = [1, 1]} : vector<8x2xf32> to vector<8x1xf32>
    %41 = vector.extract_strided_slice %39 {offsets = [0, 1], sizes = [8, 1], strides = [1, 1]} : vector<8x2xf32> to vector<8x1xf32>
    %42 = vector.broadcast %0 : vector<1x128xf32> to vector<8x128xf32>
    %43 = vector.broadcast %40 : vector<8x1xf32> to vector<8x128xf32>
    %44 = arith.subf %42, %43 : vector<8x128xf32>
    %45 = vector.broadcast %1 : vector<1x128xf32> to vector<8x128xf32>
    %46 = vector.broadcast %41 : vector<8x1xf32> to vector<8x128xf32>
    %47 = arith.subf %45, %46 : vector<8x128xf32>
    %48 = arith.mulf %44, %44 : vector<8x128xf32>
    %49 = arith.mulf %47, %47 : vector<8x128xf32>
    %50 = arith.addf %48, %49 : vector<8x128xf32>
    %cst_11 = arith.constant dense<0x7F800000> : vector<128xf32>
    %51 = vector.multi_reduction <minimumf>, %50, %cst_11 [0] : vector<8x128xf32> to vector<128xf32>
    %52 = vector.shape_cast %51 : vector<128xf32> to vector<1x128xf32>
    %53 = tpu.iota {dimensions = array<i32: 0>} : vector<8x128xi32>
    %c8_i32_12 = arith.constant 8 : i32
    %54 = arith.muli %c1_i32, %c8_i32_12 : i32
    %55 = vector.broadcast %54 : i32 to vector<8x128xi32>
    %56 = arith.addi %53, %55 : vector<8x128xi32>
    %57 = vector.broadcast %52 : vector<1x128xf32> to vector<8x128xf32>
    %58 = arith.cmpf ole, %50, %57 : vector<8x128xf32>
    %c1073741824_i32_13 = arith.constant 1073741824 : i32
    %59 = vector.broadcast %c1073741824_i32_13 : i32 to vector<8x128xi32>
    %60 = arith.select %58, %56, %59 : vector<8x128xi1>, vector<8x128xi32>
    %cst_14 = arith.constant dense<2147483647> : vector<128xi32>
    %61 = vector.multi_reduction <minsi>, %60, %cst_14 [0] : vector<8x128xi32> to vector<128xi32>
    %62 = vector.shape_cast %61 : vector<128xi32> to vector<1x128xi32>
    %63 = arith.cmpf olt, %52, %33 : vector<1x128xf32>
    %64 = arith.select %63, %52, %33 : vector<1x128xi1>, vector<1x128xf32>
    %65 = arith.select %63, %62, %34 : vector<1x128xi1>, vector<1x128xi32>
    %c2_i32 = arith.constant 2 : i32
    %66 = vector.shape_cast %65 : vector<1x128xi32> to vector<1x128xi32>
    %67 = vector.broadcast %66 : vector<1x128xi32> to vector<8x128xi32>
    %c0_15 = arith.constant 0 : index
    %c0_16 = arith.constant 0 : index
    %c0_17 = arith.constant 0 : index
    %68 = vector.load %arg4[%c0_15, %c0_16, %c0_17] : memref<1x8x128xi32, #tpu.memory_space<vmem>>, vector<1x8x128xi32>
    %69 = vector.shape_cast %68 : vector<1x8x128xi32> to vector<8x128xi32>
    %70 = vector.shape_cast %67 : vector<8x128xi32> to vector<1x8x128xi32>
    tpu.vector_store %arg4[%c0_15, %c0_16, %c0_17], %70 {strides = array<i32>} : memref<1x8x128xi32, #tpu.memory_space<vmem>>, vector<1x8x128xi32>,
    return
  }
  func.func @transform_0(%arg0: i32, %arg1: i32) -> (i32, i32) {
    %c0_i32 = arith.constant 0 : i32
    %c0_i32_0 = arith.constant 0 : i32
    return %c0_i32, %arg1 : i32, i32
  }
  func.func @transform_1(%arg0: i32, %arg1: i32) -> (i32, i32, i32) {
    %c0_i32 = arith.constant 0 : i32
    %c0_i32_0 = arith.constant 0 : i32
    %c0_i32_1 = arith.constant 0 : i32
    return %arg0, %c0_i32, %c0_i32_0 : i32, i32, i32
  }
  func.func @transform_2(%arg0: i32, %arg1: i32) -> (i32, i32, i32) {
    %c0_i32 = arith.constant 0 : i32
    %c0_i32_0 = arith.constant 0 : i32
    return %arg0, %arg1, %c0_i32 : i32, i32, i32
  }
}

module attributes {stable_mosaic.version = 11 : i64} {
  func.func @_interp_align2d_kernel(%arg0: i32, %arg1: i32, %arg2: memref<128x2xf32, #tpu.memory_space<vmem>>, %arg3: memref<1x128x8xbf16, #tpu.memory_space<vmem>>, %arg4: memref<1x128x2xf32, #tpu.memory_space<vmem>>, %arg5: memref<1x128x8xbf16, #tpu.memory_space<vmem>>, %arg6: memref<8x128xf32, #tpu.memory_space<vmem>>, %arg7: memref<8x8xbf16, #tpu.memory_space<vmem>>, %arg8: memref<8x128xbf16, #tpu.memory_space<vmem>>, %arg9: memref<8x128xbf16, #tpu.memory_space<vmem>>, %arg10: memref<1x128x128xbf16, #tpu.memory_space<vmem>>, %arg11: memref<1x128x128xbf16, #tpu.memory_space<vmem>>, %arg12: memref<1x8x128xf32, #tpu.memory_space<vmem>>) attributes {dimension_semantics = [#tpu.dimension_semantics<parallel>, #tpu.dimension_semantics<parallel>], iteration_bounds = array<i64: 2, 1>, scalar_prefetch = 0 : i64, scratch_operands = 0 : i64, tpu.core_type = #tpu.core_type<tc>, window_params = [{transform_indices = @transform_0, window_bounds = array<i64: 128, 2>}, {transform_indices = @transform_1, window_bounds = array<i64: 1, 128, 8>}, {transform_indices = @transform_2, window_bounds = array<i64: 1, 128, 2>}, {transform_indices = @transform_3, window_bounds = array<i64: 1, 128, 8>}, {pipeline_mode = #tpu.pipeline_mode<synchronous>, transform_indices = @transform_4, window_bounds = array<i64: 8, 128>}, {pipeline_mode = #tpu.pipeline_mode<synchronous>, transform_indices = @transform_5, window_bounds = array<i64: 8, 8>}, {pipeline_mode = #tpu.pipeline_mode<synchronous>, transform_indices = @transform_6, window_bounds = array<i64: 8, 128>}, {pipeline_mode = #tpu.pipeline_mode<synchronous>, transform_indices = @transform_7, window_bounds = array<i64: 8, 128>}, {transform_indices = @transform_8, window_bounds = array<i64: 1, 128, 128>}, {transform_indices = @transform_9, window_bounds = array<i64: 1, 128, 128>}, {transform_indices = @transform_10, window_bounds = array<i64: 1, 8, 128>}]} {
    %c0 = arith.constant 0 : index
    %c0_0 = arith.constant 0 : index
    %0 = vector.load %arg2[%c0, %c0_0] : memref<128x2xf32, #tpu.memory_space<vmem>>, vector<128x1xf32>
    %c0_1 = arith.constant 0 : index
    %c1 = arith.constant 1 : index
    %1 = vector.load %arg2[%c0_1, %c1] : memref<128x2xf32, #tpu.memory_space<vmem>>, vector<128x1xf32>
    %c0_2 = arith.constant 0 : index
    %c0_3 = arith.constant 0 : index
    %c0_4 = arith.constant 0 : index
    %2 = vector.load %arg4[%c0_2, %c0_3, %c0_4] : memref<1x128x2xf32, #tpu.memory_space<vmem>>, vector<1x128x2xf32>
    %3 = vector.shape_cast %2 : vector<1x128x2xf32> to vector<128x2xf32>
    %4 = vector.extract_strided_slice %3 {offsets = [0, 0], sizes = [128, 1], strides = [1, 1]} : vector<128x2xf32> to vector<128x1xf32>
    %5 = vector.extract_strided_slice %3 {offsets = [0, 1], sizes = [128, 1], strides = [1, 1]} : vector<128x2xf32> to vector<128x1xf32>
    %c0_5 = arith.constant 0 : index
    %c0_6 = arith.constant 0 : index
    %c0_7 = arith.constant 0 : index
    %6 = vector.load %arg3[%c0_5, %c0_6, %c0_7] : memref<1x128x8xbf16, #tpu.memory_space<vmem>>, vector<1x128x8xbf16>
    %7 = vector.shape_cast %6 : vector<1x128x8xbf16> to vector<128x8xbf16>
    %8 = arith.extf %7 : vector<128x8xbf16> to vector<128x8xf32>
    %c0_8 = arith.constant 0 : index
    %c0_9 = arith.constant 0 : index
    %9 = vector.load %arg6[%c0_8, %c0_9] : memref<8x128xf32, #tpu.memory_space<vmem>>, vector<8x128xf32>
    %10 = arith.subf %4, %0 : vector<128x1xf32>
    %11 = arith.subf %5, %1 : vector<128x1xf32>
    %12 = arith.mulf %10, %10 : vector<128x1xf32>
    %13 = arith.mulf %11, %11 : vector<128x1xf32>
    %14 = arith.addf %12, %13 : vector<128x1xf32>
    %15 = math.sqrt %14 : vector<128x1xf32>
    %16 = vector.extract_strided_slice %9 {offsets = [0, 0], sizes = [1, 1], strides = [1, 1]} : vector<8x128xf32> to vector<1x1xf32>
    %17 = vector.broadcast %16 : vector<1x1xf32> to vector<128x1xf32>
    %18 = arith.mulf %10, %17 : vector<128x1xf32>
    %19 = vector.extract_strided_slice %9 {offsets = [0, 1], sizes = [1, 1], strides = [1, 1]} : vector<8x128xf32> to vector<1x1xf32>
    %20 = vector.broadcast %19 : vector<1x1xf32> to vector<128x1xf32>
    %21 = arith.mulf %11, %20 : vector<128x1xf32>
    %22 = arith.addf %18, %21 : vector<128x1xf32>
    %23 = vector.extract_strided_slice %9 {offsets = [0, 2], sizes = [1, 1], strides = [1, 1]} : vector<8x128xf32> to vector<1x1xf32>
    %24 = vector.broadcast %23 : vector<1x1xf32> to vector<128x1xf32>
    %25 = arith.mulf %15, %24 : vector<128x1xf32>
    %26 = arith.addf %22, %25 : vector<128x1xf32>
    %27 = vector.extract_strided_slice %9 {offsets = [0, 3], sizes = [1, 1], strides = [1, 1]} : vector<8x128xf32> to vector<1x1xf32>
    %28 = vector.broadcast %27 : vector<1x1xf32> to vector<128x1xf32>
    %29 = arith.addf %26, %28 : vector<128x1xf32>
    %cst = arith.constant 0.000000e+00 : f32
    %30 = vector.broadcast %cst : f32 to vector<128x1xf32>
    %31 = arith.cmpf oge, %29, %30 : vector<128x1xf32>
    %cst_10 = arith.constant 1.000000e-01 : f32
    %32 = vector.broadcast %cst_10 : f32 to vector<128x1xf32>
    %33 = arith.mulf %32, %29 : vector<128x1xf32>
    %34 = arith.select %31, %29, %33 : vector<128x1xi1>, vector<128x1xf32>
    %35 = vector.extract_strided_slice %9 {offsets = [1, 0], sizes = [1, 8], strides = [1, 1]} : vector<8x128xf32> to vector<1x8xf32>
    %36 = vector.broadcast %34 : vector<128x1xf32> to vector<128x8xf32>
    %37 = vector.broadcast %35 : vector<1x8xf32> to vector<128x8xf32>
    %38 = arith.mulf %36, %37 : vector<128x8xf32>
    %39 = vector.extract_strided_slice %9 {offsets = [2, 0], sizes = [1, 8], strides = [1, 1]} : vector<8x128xf32> to vector<1x8xf32>
    %40 = vector.broadcast %39 : vector<1x8xf32> to vector<128x8xf32>
    %41 = arith.addf %38, %40 : vector<128x8xf32>
    %42 = arith.negf %41 : vector<128x8xf32>
    %43 = math.exp %42 : vector<128x8xf32>
    %cst_11 = arith.constant 1.000000e+00 : f32
    %44 = vector.broadcast %cst_11 : f32 to vector<128x8xf32>
    %45 = arith.addf %44, %43 : vector<128x8xf32>
    %46 = arith.divf %44, %45 : vector<128x8xf32>
    %47 = arith.mulf %46, %8 : vector<128x8xf32>
    %48 = arith.truncf %47 : vector<128x8xf32> to vector<128x8xbf16>
    %c0_12 = arith.constant 0 : index
    %c0_13 = arith.constant 0 : index
    %49 = vector.load %arg7[%c0_12, %c0_13] : memref<8x8xbf16, #tpu.memory_space<vmem>>, vector<8x8xbf16>
    %cst_14 = arith.constant dense<0.000000e+00> : vector<128x8xf32>
    %50 = tpu.matmul %48, %49, %cst_14 {dimension_numbers = #tpu.dot_dimension_numbers<[1], [0], [0], [1], [0, 0, 1, 1], [], []>} : vector<128x8xbf16>, vector<8x8xbf16>, vector<128x8xf32> -> vector<128x8xf32>
    %51 = vector.extract_strided_slice %9 {offsets = [3, 0], sizes = [1, 8], strides = [1, 1]} : vector<8x128xf32> to vector<1x8xf32>
    %52 = vector.broadcast %51 : vector<1x8xf32> to vector<128x8xf32>
    %53 = arith.addf %50, %52 : vector<128x8xf32>
    %cst_15 = arith.constant 0.000000e+00 : f32
    %54 = vector.broadcast %cst_15 : f32 to vector<128x8xf32>
    %55 = arith.cmpf oge, %53, %54 : vector<128x8xf32>
    %cst_16 = arith.constant 1.000000e-01 : f32
    %56 = vector.broadcast %cst_16 : f32 to vector<128x8xf32>
    %57 = arith.mulf %56, %53 : vector<128x8xf32>
    %58 = arith.select %55, %53, %57 : vector<128x8xi1>, vector<128x8xf32>
    %59 = arith.truncf %58 : vector<128x8xf32> to vector<128x8xbf16>
    %c0_17 = arith.constant 0 : index
    %c0_18 = arith.constant 0 : index
    %60 = vector.load %arg8[%c0_17, %c0_18] : memref<8x128xbf16, #tpu.memory_space<vmem>>, vector<8x128xbf16>
    %cst_19 = arith.constant dense<0.000000e+00> : vector<128x128xf32>
    %61 = tpu.matmul %59, %60, %cst_19 {dimension_numbers = #tpu.dot_dimension_numbers<[1], [0], [0], [1], [0, 0, 1, 1], [], []>} : vector<128x8xbf16>, vector<8x128xbf16>, vector<128x128xf32> -> vector<128x128xf32>
    %62 = vector.extract_strided_slice %9 {offsets = [4, 0], sizes = [1, 128], strides = [1, 1]} : vector<8x128xf32> to vector<1x128xf32>
    %63 = vector.broadcast %62 : vector<1x128xf32> to vector<128x128xf32>
    %64 = arith.addf %61, %63 : vector<128x128xf32>
    %cst_20 = arith.constant 0.000000e+00 : f32
    %65 = vector.broadcast %cst_20 : f32 to vector<128x128xf32>
    %66 = arith.cmpf oge, %64, %65 : vector<128x128xf32>
    %cst_21 = arith.constant 1.000000e-01 : f32
    %67 = vector.broadcast %cst_21 : f32 to vector<128x128xf32>
    %68 = arith.mulf %67, %64 : vector<128x128xf32>
    %69 = arith.select %66, %64, %68 : vector<128x128xi1>, vector<128x128xf32>
    %c0_22 = arith.constant 0 : index
    %c0_23 = arith.constant 0 : index
    %c0_24 = arith.constant 0 : index
    %70 = vector.load %arg5[%c0_22, %c0_23, %c0_24] : memref<1x128x8xbf16, #tpu.memory_space<vmem>>, vector<1x128x8xbf16>
    %71 = vector.shape_cast %70 : vector<1x128x8xbf16> to vector<128x8xbf16>
    %c0_25 = arith.constant 0 : index
    %c0_26 = arith.constant 0 : index
    %72 = vector.load %arg9[%c0_25, %c0_26] : memref<8x128xbf16, #tpu.memory_space<vmem>>, vector<8x128xbf16>
    %cst_27 = arith.constant dense<0.000000e+00> : vector<128x128xf32>
    %73 = tpu.matmul %71, %72, %cst_27 {dimension_numbers = #tpu.dot_dimension_numbers<[1], [0], [0], [1], [0, 0, 1, 1], [], []>} : vector<128x8xbf16>, vector<8x128xbf16>, vector<128x128xf32> -> vector<128x128xf32>
    %74 = vector.extract_strided_slice %9 {offsets = [5, 0], sizes = [1, 128], strides = [1, 1]} : vector<8x128xf32> to vector<1x128xf32>
    %75 = vector.broadcast %74 : vector<1x128xf32> to vector<128x128xf32>
    %76 = arith.addf %73, %75 : vector<128x128xf32>
    %cst_28 = arith.constant 0.000000e+00 : f32
    %77 = vector.broadcast %cst_28 : f32 to vector<128x128xf32>
    %78 = arith.cmpf oge, %76, %77 : vector<128x128xf32>
    %cst_29 = arith.constant 1.000000e-01 : f32
    %79 = vector.broadcast %cst_29 : f32 to vector<128x128xf32>
    %80 = arith.mulf %79, %76 : vector<128x128xf32>
    %81 = arith.select %78, %76, %80 : vector<128x128xi1>, vector<128x128xf32>
    %c128_i32 = arith.constant 128 : i32
    %82 = arith.muli %arg1, %c128_i32 : i32
    %83 = tpu.iota {dimensions = array<i32: 0>} : vector<128x1xi32>
    %84 = vector.broadcast %82 : i32 to vector<128x1xi32>
    %85 = arith.addi %84, %83 : vector<128x1xi32>
    %c128_i32_30 = arith.constant 128 : i32
    %86 = vector.broadcast %c128_i32_30 : i32 to vector<128x1xi32>
    %87 = arith.cmpi slt, %85, %86 : vector<128x1xi32>
    %88 = arith.extui %87 : vector<128x1xi1> to vector<128x1xi32>
    %89 = arith.sitofp %88 : vector<128x1xi32> to vector<128x1xf32>
    %90 = arith.addf %81, %69 : vector<128x128xf32>
    %91 = vector.broadcast %89 : vector<128x1xf32> to vector<128x128xf32>
    %92 = arith.mulf %91, %90 : vector<128x128xf32>
    %cst_31 = arith.constant dense<0.000000e+00> : vector<128xf32>
    %93 = vector.multi_reduction <add>, %92, %cst_31 [0] : vector<128x128xf32> to vector<128xf32>
    %94 = vector.shape_cast %93 : vector<128xf32> to vector<1x128xf32>
    %95 = arith.truncf %81 : vector<128x128xf32> to vector<128x128xbf16>
    %c0_32 = arith.constant 0 : index
    %c0_33 = arith.constant 0 : index
    %c0_34 = arith.constant 0 : index
    %96 = vector.load %arg10[%c0_32, %c0_33, %c0_34] : memref<1x128x128xbf16, #tpu.memory_space<vmem>>, vector<1x128x128xbf16>
    %97 = vector.shape_cast %96 : vector<1x128x128xbf16> to vector<128x128xbf16>
    %98 = vector.shape_cast %95 : vector<128x128xbf16> to vector<1x128x128xbf16>
    tpu.vector_store %arg10[%c0_32, %c0_33, %c0_34], %98 {strides = array<i32>} : memref<1x128x128xbf16, #tpu.memory_space<vmem>>, vector<1x128x128xbf16>,
    %99 = arith.truncf %69 : vector<128x128xf32> to vector<128x128xbf16>
    %c0_35 = arith.constant 0 : index
    %c0_36 = arith.constant 0 : index
    %c0_37 = arith.constant 0 : index
    %100 = vector.load %arg11[%c0_35, %c0_36, %c0_37] : memref<1x128x128xbf16, #tpu.memory_space<vmem>>, vector<1x128x128xbf16>
    %101 = vector.shape_cast %100 : vector<1x128x128xbf16> to vector<128x128xbf16>
    %102 = vector.shape_cast %99 : vector<128x128xbf16> to vector<1x128x128xbf16>
    tpu.vector_store %arg11[%c0_35, %c0_36, %c0_37], %102 {strides = array<i32>} : memref<1x128x128xbf16, #tpu.memory_space<vmem>>, vector<1x128x128xbf16>,
    %103 = vector.shape_cast %94 : vector<1x128xf32> to vector<1x128xf32>
    %104 = vector.broadcast %103 : vector<1x128xf32> to vector<8x128xf32>
    %c0_38 = arith.constant 0 : index
    %c0_39 = arith.constant 0 : index
    %c0_40 = arith.constant 0 : index
    %105 = vector.load %arg12[%c0_38, %c0_39, %c0_40] : memref<1x8x128xf32, #tpu.memory_space<vmem>>, vector<1x8x128xf32>
    %106 = vector.shape_cast %105 : vector<1x8x128xf32> to vector<8x128xf32>
    %107 = vector.shape_cast %104 : vector<8x128xf32> to vector<1x8x128xf32>
    tpu.vector_store %arg12[%c0_38, %c0_39, %c0_40], %107 {strides = array<i32>} : memref<1x8x128xf32, #tpu.memory_space<vmem>>, vector<1x8x128xf32>,
    return
  }
  func.func @transform_0(%arg0: i32, %arg1: i32) -> (i32, i32) {
    %c0_i32 = arith.constant 0 : i32
    %c0_i32_0 = arith.constant 0 : i32
    return %arg1, %c0_i32 : i32, i32
  }
  func.func @transform_1(%arg0: i32, %arg1: i32) -> (i32, i32, i32) {
    %c0_i32 = arith.constant 0 : i32
    %c0_i32_0 = arith.constant 0 : i32
    return %arg0, %arg1, %c0_i32 : i32, i32, i32
  }
  func.func @transform_2(%arg0: i32, %arg1: i32) -> (i32, i32, i32) {
    %c0_i32 = arith.constant 0 : i32
    %c0_i32_0 = arith.constant 0 : i32
    return %arg0, %arg1, %c0_i32 : i32, i32, i32
  }
  func.func @transform_3(%arg0: i32, %arg1: i32) -> (i32, i32, i32) {
    %c0_i32 = arith.constant 0 : i32
    %c0_i32_0 = arith.constant 0 : i32
    return %arg0, %arg1, %c0_i32 : i32, i32, i32
  }
  func.func @transform_4(%arg0: i32, %arg1: i32) -> (i32, i32) {
    %c0_i32 = arith.constant 0 : i32
    %c0_i32_0 = arith.constant 0 : i32
    %c0_i32_1 = arith.constant 0 : i32
    return %c0_i32, %c0_i32_0 : i32, i32
  }
  func.func @transform_5(%arg0: i32, %arg1: i32) -> (i32, i32) {
    %c0_i32 = arith.constant 0 : i32
    %c0_i32_0 = arith.constant 0 : i32
    %c0_i32_1 = arith.constant 0 : i32
    return %c0_i32, %c0_i32_0 : i32, i32
  }
  func.func @transform_6(%arg0: i32, %arg1: i32) -> (i32, i32) {
    %c0_i32 = arith.constant 0 : i32
    %c0_i32_0 = arith.constant 0 : i32
    %c0_i32_1 = arith.constant 0 : i32
    return %c0_i32, %c0_i32_0 : i32, i32
  }
  func.func @transform_7(%arg0: i32, %arg1: i32) -> (i32, i32) {
    %c0_i32 = arith.constant 0 : i32
    %c0_i32_0 = arith.constant 0 : i32
    %c0_i32_1 = arith.constant 0 : i32
    return %c0_i32, %c0_i32_0 : i32, i32
  }
  func.func @transform_8(%arg0: i32, %arg1: i32) -> (i32, i32, i32) {
    %c0_i32 = arith.constant 0 : i32
    %c0_i32_0 = arith.constant 0 : i32
    return %arg0, %arg1, %c0_i32 : i32, i32, i32
  }
  func.func @transform_9(%arg0: i32, %arg1: i32) -> (i32, i32, i32) {
    %c0_i32 = arith.constant 0 : i32
    %c0_i32_0 = arith.constant 0 : i32
    return %arg0, %arg1, %c0_i32 : i32, i32, i32
  }
  func.func @transform_10(%arg0: i32, %arg1: i32) -> (i32, i32, i32) {
    %c0_i32 = arith.constant 0 : i32
    %c0_i32_0 = arith.constant 0 : i32
    return %arg0, %arg1, %c0_i32 : i32, i32, i32
  }
}

</mosaic_0001>

<llo_original>
// kernel: clfm_forward.8
$region0: #{clfm_forward.8}
  #allocation0 [shape = 'u32[]', space=smem, size = 0x4, offset = 0x4, fixed_abs, tag = 'smem constant byte address 0x4 - core index']
  #allocation1 [shape = 'u32[144,128]{1,0:T(1,128)}', space=vmem, size = 0x12000, scoped, tag = 'internal scratch']
  %s0 = inlined_call_operand.vmem [shape: bf16[2,128,8], index: 0, kind: input, shape index: {}]
  %s1 = inlined_call_operand.vmem [shape: bf16[2,128,8], index: 1, kind: input, shape index: {}]
  %s2 = inlined_call_operand.vmem [shape: f32[8,128], index: 2, kind: input, shape index: {}]
  %s3 = inlined_call_operand.vmem [shape: bf16[8,8], index: 3, kind: input, shape index: {}]
  %s4 = inlined_call_operand.vmem [shape: bf16[8,128], index: 4, kind: input, shape index: {}]
  %s5 = inlined_call_operand.vmem [shape: bf16[8,128], index: 5, kind: input, shape index: {}]
  %s6 = inlined_call_operand.vmem [shape: bf16[2,128,128], index: 6, kind: output, shape index: {0}]
  %s7 = inlined_call_operand.vmem [shape: bf16[2,128,128], index: 7, kind: output, shape index: {1}]
  %s8 = inlined_call_operand.vmem [shape: f32[2,8,128], index: 8, kind: output, shape index: {2}]
  %9 = xla_tuple %s6, %s7, %s8
  %s10 = sld [smem:[#allocation0]]
  $region73: #{clfm_forward.8} parent=0
    _
  %s12 = ssub.s32 1, %s10
  %s13 = scalar_select 0, %s12, %s10
  loop: start=0, step=1, limit=4
  $region2: #{clfm_forward.8} parent=0 // loop_pre_header
    _
  $region3: #{clfm_forward.8} parent=0 // loop_header
    %s15 = sphi 0, %s19
    %p16 = scmp.ge.s32.totalorder %s15, 4
    %s22 = sphi 0, %s34
    %s23 = sphi 0, %s30
    %s24 = sphi 0, %s22
    %s25 = sphi 0, %s23
    %s26 = sphi 0, %s24
    %s27 = sphi 0, %s25
    %s39 = sphi 0, %s41
    %s42 = sphi 0, %s39
    %s43 = sphi 0, %s42
    %s59 = sphi 0, %s43
    %s67 = sphi 0, %s69
    %s70 = sphi 0, %s67
    %s71 = sphi 0, %s70
    %s87 = sphi 0, %s71
    %s91 = sphi 0, %s91
    %s93 = sphi 0, %s91
    %s94 = sphi 0, %s93
    %s108 = sphi 0, %s94
    %s112 = sphi 0, %s112
    %s114 = sphi 0, %s112
    %s115 = sphi 0, %s114
    %s129 = sphi 0, %s115
    %s133 = sphi 0, %s133
    %s135 = sphi 0, %s133
    %s136 = sphi 0, %s135
    %s150 = sphi 0, %s136
    %s154 = sphi 0, %s154
    %s156 = sphi 0, %s154
    %s157 = sphi 0, %s156
    %s171 = sphi 0, %s157
    %s179 = sphi 0, %s181
    %s182 = sphi 0, %s179
    %s183 = sphi 0, %s182
    %s199 = sphi 0, %s183
    %s207 = sphi 0, %s209
    %s210 = sphi 0, %s207
    %s211 = sphi 0, %s210
    %s227 = sphi 0, %s211
    %s235 = sphi 0, %s237
    %s238 = sphi 0, %s235
    %s239 = sphi 0, %s238
    %s255 = sphi 0, %s239
  $region4: #{clfm_forward.8} parent=0 // loop_header_branch
    %18 = sbr.rel (%p16) target = $region8
  $region5: #{clfm_forward.8} parent=0 // loop_body
    %s20 = ssub.s32 %s15, 1
    %s21 = ssub.s32 %s15, 2
    %s28 = sadd.s32 1, %s23
    %p29 = scmp.ge.s32.totalorder %s28, 1
    %s30 = scalar_select %p29, 0, %s28
    %s31 = sadd.s32 1, %s22
    %s32 = scalar_select %p29, %s31, %s22
    %p33 = scmp.ge.s32.totalorder %s32, 2
    %s34 = scalar_select %p33, 0, %s32
    %s35 = ssub.s32 %s22, %s34
    %s36 = ssub.s32 %s23, %s30
    %s37 = sor.u32 %s35, %s36
    %p38 = scmp.eq.s32.totalorder %s37, 0
    %s40 = sadd.s32 %s39, 1
    %s41 = scalar_select %p38, %s39, %s40
    %p44 = pneg %p38
    %p45 = scmp.eq.s32.totalorder %s15, 1
    %p46 = por %p44, %p45
    %p47 = scmp.ne.s32.totalorder %s39, %s42
    %p48 = scmp.eq.s32.totalorder %s15, 0
    %p49 = por %p47, %p48
    %p50 = scmp.ne.s32.totalorder %s39, %s42
    %p51 = scmp.eq.s32.totalorder %s20, 1
    %p52 = por %p50, %p51
    %p53 = scmp.ne.s32.totalorder %s42, %s43
    %p54 = scmp.eq.s32.totalorder %s20, 0
    %p55 = por %p53, %p54
    %p56 = scmp.ne.s32.totalorder %s42, %s43
    %p57 = scmp.eq.s32.totalorder %s21, 1
    %p58 = por %p56, %p57
    %p60 = scmp.ne.s32.totalorder %s43, %s59
    %p61 = scmp.eq.s32.totalorder %s21, 0
    %p62 = por %p60, %p61
    %s63 = ssub.s32 %s22, %s34
    %s64 = ssub.s32 %s23, %s30
    %s65 = sor.u32 %s63, %s64
    %p66 = scmp.eq.s32.totalorder %s65, 0
    %s68 = sadd.s32 %s67, 1
    %s69 = scalar_select %p66, %s67, %s68
    %p72 = pneg %p66
    %p73 = scmp.eq.s32.totalorder %s15, 1
    %p74 = por %p72, %p73
    %p75 = scmp.ne.s32.totalorder %s67, %s70
    %p76 = scmp.eq.s32.totalorder %s15, 0
    %p77 = por %p75, %p76
    %p78 = scmp.ne.s32.totalorder %s67, %s70
    %p79 = scmp.eq.s32.totalorder %s20, 1
    %p80 = por %p78, %p79
    %p81 = scmp.ne.s32.totalorder %s70, %s71
    %p82 = scmp.eq.s32.totalorder %s20, 0
    %p83 = por %p81, %p82
    %p84 = scmp.ne.s32.totalorder %s70, %s71
    %p85 = scmp.eq.s32.totalorder %s21, 1
    %p86 = por %p84, %p85
    %p88 = scmp.ne.s32.totalorder %s71, %s87
    %p89 = scmp.eq.s32.totalorder %s21, 0
    %p90 = por %p88, %p89
    %s92 = sadd.s32 %s91, 1
    %p95 = scmp.eq.s32.totalorder %s15, 1
    %p96 = scmp.ne.s32.totalorder %s91, %s93
    %p97 = scmp.eq.s32.totalorder %s15, 0
    %p98 = por %p96, %p97
    %p99 = scmp.ne.s32.totalorder %s91, %s93
    %p100 = scmp.eq.s32.totalorder %s20, 1
    %p101 = por %p99, %p100
    %p102 = scmp.ne.s32.totalorder %s93, %s94
    %p103 = scmp.eq.s32.totalorder %s20, 0
    %p104 = por %p102, %p103
    %p105 = scmp.ne.s32.totalorder %s93, %s94
    %p106 = scmp.eq.s32.totalorder %s21, 1
    %p107 = por %p105, %p106
    %p109 = scmp.ne.s32.totalorder %s94, %s108
    %p110 = scmp.eq.s32.totalorder %s21, 0
    %p111 = por %p109, %p110
    %s113 = sadd.s32 %s112, 1
    %p116 = scmp.eq.s32.totalorder %s15, 1
    %p117 = scmp.ne.s32.totalorder %s112, %s114
    %p118 = scmp.eq.s32.totalorder %s15, 0
    %p119 = por %p117, %p118
    %p120 = scmp.ne.s32.totalorder %s112, %s114
    %p121 = scmp.eq.s32.totalorder %s20, 1
    %p122 = por %p120, %p121
    %p123 = scmp.ne.s32.totalorder %s114, %s115
    %p124 = scmp.eq.s32.totalorder %s20, 0
    %p125 = por %p123, %p124
    %p126 = scmp.ne.s32.totalorder %s114, %s115
    %p127 = scmp.eq.s32.totalorder %s21, 1
    %p128 = por %p126, %p127
    %p130 = scmp.ne.s32.totalorder %s115, %s129
    %p131 = scmp.eq.s32.totalorder %s21, 0
    %p132 = por %p130, %p131
    %s134 = sadd.s32 %s133, 1
    %p137 = scmp.eq.s32.totalorder %s15, 1
    %p138 = scmp.ne.s32.totalorder %s133, %s135
    %p139 = scmp.eq.s32.totalorder %s15, 0
    %p140 = por %p138, %p139
    %p141 = scmp.ne.s32.totalorder %s133, %s135
    %p142 = scmp.eq.s32.totalorder %s20, 1
    %p143 = por %p141, %p142
    %p144 = scmp.ne.s32.totalorder %s135, %s136
    %p145 = scmp.eq.s32.totalorder %s20, 0
    %p146 = por %p144, %p145
    %p147 = scmp.ne.s32.totalorder %s135, %s136
    %p148 = scmp.eq.s32.totalorder %s21, 1
    %p149 = por %p147, %p148
    %p151 = scmp.ne.s32.totalorder %s136, %s150
    %p152 = scmp.eq.s32.totalorder %s21, 0
    %p153 = por %p151, %p152
    %s155 = sadd.s32 %s154, 1
    %p158 = scmp.eq.s32.totalorder %s15, 1
    %p159 = scmp.ne.s32.totalorder %s154, %s156
    %p160 = scmp.eq.s32.totalorder %s15, 0
    %p161 = por %p159, %p160
    %p162 = scmp.ne.s32.totalorder %s154, %s156
    %p163 = scmp.eq.s32.totalorder %s20, 1
    %p164 = por %p162, %p163
    %p165 = scmp.ne.s32.totalorder %s156, %s157
    %p166 = scmp.eq.s32.totalorder %s20, 0
    %p167 = por %p165, %p166
    %p168 = scmp.ne.s32.totalorder %s156, %s157
    %p169 = scmp.eq.s32.totalorder %s21, 1
    %p170 = por %p168, %p169
    %p172 = scmp.ne.s32.totalorder %s157, %s171
    %p173 = scmp.eq.s32.totalorder %s21, 0
    %p174 = por %p172, %p173
    %s175 = ssub.s32 %s22, %s34
    %s176 = ssub.s32 %s23, %s30
    %s177 = sor.u32 %s175, %s176
    %p178 = scmp.eq.s32.totalorder %s177, 0
    %s180 = sadd.s32 %s179, 1
    %s181 = scalar_select %p178, %s179, %s180
    %p184 = pneg %p178
    %p185 = scmp.eq.s32.totalorder %s15, 1
    %p186 = por %p184, %p185
    %p187 = scmp.ne.s32.totalorder %s179, %s182
    %p188 = scmp.eq.s32.totalorder %s15, 0
    %p189 = por %p187, %p188
    %p190 = scmp.ne.s32.totalorder %s179, %s182
    %p191 = scmp.eq.s32.totalorder %s20, 1
    %p192 = por %p190, %p191
    %p193 = scmp.ne.s32.totalorder %s182, %s183
    %p194 = scmp.eq.s32.totalorder %s20, 0
    %p195 = por %p193, %p194
    %p196 = scmp.ne.s32.totalorder %s182, %s183
    %p197 = scmp.eq.s32.totalorder %s21, 1
    %p198 = por %p196, %p197
    %p200 = scmp.ne.s32.totalorder %s183, %s199
    %p201 = scmp.eq.s32.totalorder %s21, 0
    %p202 = por %p200, %p201
    %s203 = ssub.s32 %s22, %s34
    %s204 = ssub.s32 %s23, %s30
    %s205 = sor.u32 %s203, %s204
    %p206 = scmp.eq.s32.totalorder %s205, 0
    %s208 = sadd.s32 %s207, 1
    %s209 = scalar_select %p206, %s207, %s208
    %p212 = pneg %p206
    %p213 = scmp.eq.s32.totalorder %s15, 1
    %p214 = por %p212, %p213
    %p215 = scmp.ne.s32.totalorder %s207, %s210
    %p216 = scmp.eq.s32.totalorder %s15, 0
    %p217 = por %p215, %p216
    %p218 = scmp.ne.s32.totalorder %s207, %s210
    %p219 = scmp.eq.s32.totalorder %s20, 1
    %p220 = por %p218, %p219
    %p221 = scmp.ne.s32.totalorder %s210, %s211
    %p222 = scmp.eq.s32.totalorder %s20, 0
    %p223 = por %p221, %p222
    %p224 = scmp.ne.s32.totalorder %s210, %s211
    %p225 = scmp.eq.s32.totalorder %s21, 1
    %p226 = por %p224, %p225
    %p228 = scmp.ne.s32.totalorder %s211, %s227
    %p229 = scmp.eq.s32.totalorder %s21, 0
    %p230 = por %p228, %p229
    %s231 = ssub.s32 %s22, %s34
    %s232 = ssub.s32 %s23, %s30
    %s233 = sor.u32 %s231, %s232
    %p234 = scmp.eq.s32.totalorder %s233, 0
    %s236 = sadd.s32 %s235, 1
    %s237 = scalar_select %p234, %s235, %s236
    %p240 = pneg %p234
    %p241 = scmp.eq.s32.totalorder %s15, 1
    %p242 = por %p240, %p241
    %p243 = scmp.ne.s32.totalorder %s235, %s238
    %p244 = scmp.eq.s32.totalorder %s15, 0
    %p245 = por %p243, %p244
    %p246 = scmp.ne.s32.totalorder %s235, %s238
    %p247 = scmp.eq.s32.totalorder %s20, 1
    %p248 = por %p246, %p247
    %p249 = scmp.ne.s32.totalorder %s238, %s239
    %p250 = scmp.eq.s32.totalorder %s20, 0
    %p251 = por %p249, %p250
    %p252 = scmp.ne.s32.totalorder %s238, %s239
    %p253 = scmp.eq.s32.totalorder %s21, 1
    %p254 = por %p252, %p253
    %p256 = scmp.ne.s32.totalorder %s239, %s255
    %p257 = scmp.eq.s32.totalorder %s21, 0
    %p258 = por %p256, %p257
    %p259 = scmp.le.s32.totalorder 1, %s15
    %p260 = scmp.lt.s32.totalorder %s15, 3
    %p261 = pnand %p259, %p260
    %p262 = pneg %p261
    // Predicated region
    $region9: #{clfm_forward.8} parent=5 // pred_check
      _
    $region10: #{clfm_forward.8} parent=5 // pred_check_branch
      %264 = sbr.rel (%p261) target = $region12
    $region11: #{clfm_forward.8} parent=5 // pred_region
      %s265 = ssub.s32 %s15, 1
      // Predicated region
      $region13: #{clfm_forward.8} parent=11 // pred_check
        %p266 = pneg %p104
      $region14: #{clfm_forward.8} parent=11 // pred_check_branch
        %268 = sbr.rel (%p266) target = $region16
      $region15: #{clfm_forward.8} parent=11 // pred_region
        _
      $region16: #{clfm_forward.8} parent=11 // pred_fallthru
        _
      // Predicated region
      $region17: #{clfm_forward.8} parent=11 // pred_check
        %p269 = pneg %p125
      $region18: #{clfm_forward.8} parent=11 // pred_check_branch
        %271 = sbr.rel (%p269) target = $region20
      $region19: #{clfm_forward.8} parent=11 // pred_region
        _
      $region20: #{clfm_forward.8} parent=11 // pred_fallthru
        _
      // Predicated region
      $region21: #{clfm_forward.8} parent=11 // pred_check
        %p272 = pneg %p146
      $region22: #{clfm_forward.8} parent=11 // pred_check_branch
        %274 = sbr.rel (%p272) target = $region24
      $region23: #{clfm_forward.8} parent=11 // pred_region
        _
      $region24: #{clfm_forward.8} parent=11 // pred_fallthru
        _
      // Predicated region
      $region25: #{clfm_forward.8} parent=11 // pred_check
        %p275 = pneg %p167
      $region26: #{clfm_forward.8} parent=11 // pred_check_branch
        %277 = sbr.rel (%p275) target = $region28
      $region27: #{clfm_forward.8} parent=11 // pred_region
        _
      $region28: #{clfm_forward.8} parent=11 // pred_fallthru
        _
    $region12: #{clfm_forward.8} parent=5 // pred_fallthru
      _
    %p278 = scmp.lt.s32.totalorder %s15, 2
    // Predicated region
    $region29: #{clfm_forward.8} parent=5 // pred_check
      %p279 = pneg %p278
    $region30: #{clfm_forward.8} parent=5 // pred_check_branch
      %281 = sbr.rel (%p279) target = $region32
    $region31: #{clfm_forward.8} parent=5 // pred_region
      // Predicated region
      $region33: #{clfm_forward.8} parent=31 // pred_check
        %p282 = pneg %p49
      $region34: #{clfm_forward.8} parent=31 // pred_check_branch
        %284 = sbr.rel (%p282) target = $region36
      $region35: #{clfm_forward.8} parent=31 // pred_region
        %s285 = smul.u32 16, %s23
        %p286 = scmp.lt.s32.totalorder %s22, 1
        %s287 = scalar_select %p286, %s22, 1
        %p288 = scmp.lt.s32.totalorder %s285, 15
        %s289 = scalar_select %p288, %s285, 15
        %s290 = smul.addr %s287, 16
        %s291 = sadd.s32 %s289, %s290
        %s292 = smul.addr %s291, 4
        %s293 = scalar_lea.vmem %s0, %s292
        %s294 = smul.u32 16, %s23
      $region36: #{clfm_forward.8} parent=31 // pred_fallthru
        _
      // Predicated region
      $region37: #{clfm_forward.8} parent=31 // pred_check
        %p295 = pneg %p77
      $region38: #{clfm_forward.8} parent=31 // pred_check_branch
        %297 = sbr.rel (%p295) target = $region40
      $region39: #{clfm_forward.8} parent=31 // pred_region
        %s298 = smul.u32 16, %s23
        %p299 = scmp.lt.s32.totalorder %s22, 1
        %s300 = scalar_select %p299, %s22, 1
        %p301 = scmp.lt.s32.totalorder %s298, 15
        %s302 = scalar_select %p301, %s298, 15
        %s303 = smul.addr %s300, 16
        %s304 = sadd.s32 %s302, %s303
        %s305 = smul.addr %s304, 4
        %s306 = scalar_lea.vmem %s1, %s305
        %s307 = smul.u32 16, %s23
      $region40: #{clfm_forward.8} parent=31 // pred_fallthru
        _
    $region32: #{clfm_forward.8} parent=5 // pred_fallthru
      _
    %p308 = scmp.le.s32.totalorder 1, %s15
    %p309 = scmp.lt.s32.totalorder %s15, 3
    %p310 = pnand %p308, %p309
    %p311 = pneg %p310
    // Predicated region
    $region41: #{clfm_forward.8} parent=5 // pred_check
      _
    $region42: #{clfm_forward.8} parent=5 // pred_check_branch
      %313 = sbr.rel (%p310) target = $region44
    $region43: #{clfm_forward.8} parent=5 // pred_region
      %s314 = ssub.s32 %s15, 1
      %s315 = smul.u32 16, %s25
      %p316 = scmp.lt.s32.totalorder %s24, 1
      %s317 = scalar_select %p316, %s24, 1
      %p318 = scmp.lt.s32.totalorder %s315, 15
      %s319 = scalar_select %p318, %s315, 15
      %s320 = smul.addr %s317, 16
      %s321 = sadd.s32 %s319, %s320
      %s322 = smul.addr %s321, 4
      %s323 = scalar_lea.vmem %s0, %s322
      %p324 = pneg %p55
      %p325 = pneg %p52
      %s326 = smul.u32 16, %s25
      %p327 = scmp.lt.s32.totalorder %s24, 1
      %s328 = scalar_select %p327, %s24, 1
      %p329 = scmp.lt.s32.totalorder %s326, 15
      %s330 = scalar_select %p329, %s326, 15
      %s331 = smul.addr %s328, 16
      %s332 = sadd.s32 %s330, %s331
      %s333 = smul.addr %s332, 4
      %s334 = scalar_lea.vmem %s1, %s333
      %p335 = pneg %p83
      %p336 = pneg %p80
      %p337 = pneg %p104
      %p338 = pneg %p101
      %p339 = pneg %p125
      %p340 = pneg %p122
      %p341 = pneg %p146
      %p342 = pneg %p143
      %p343 = pneg %p167
      %p344 = pneg %p164
      %p345 = pneg %p195
      %p346 = pneg %p192
      %s347 = smul.u32 16, %s25
      %p348 = scmp.lt.s32.totalorder %s24, 1
      %s349 = scalar_select %p348, %s24, 1
      %p350 = scmp.lt.s32.totalorder %s347, 15
      %s351 = scalar_select %p350, %s347, 15
      %s352 = smul.addr %s349, 16
      %s353 = sadd.s32 %s351, %s352
      %s354 = smul.addr %s353, 4
      %s355 = scalar_lea.vmem %s6, %s354
      %p356 = pneg %p223
      %p357 = pneg %p220
      %s358 = smul.u32 16, %s25
      %p359 = scmp.lt.s32.totalorder %s24, 1
      %s360 = scalar_select %p359, %s24, 1
      %p361 = scmp.lt.s32.totalorder %s358, 15
      %s362 = scalar_select %p361, %s358, 15
      %s363 = smul.addr %s360, 16
      %s364 = sadd.s32 %s362, %s363
      %s365 = smul.addr %s364, 4
      %s366 = scalar_lea.vmem %s7, %s365
      %p367 = pneg %p251
      %p368 = pneg %p248
      %p369 = scmp.lt.s32.totalorder %s24, 1
      %s370 = scalar_select %p369, %s24, 1
      %p371 = scmp.lt.s32.totalorder %s25, 0
      %s372 = scalar_select %p371, %s25, 0
      %s373 = sadd.s32 %s372, %s370
      %s374 = smul.addr %s373, 8
      %s375 = scalar_lea.vmem %s8, %s374
      %s376 = smul.u32 16, %s25
      %p377 = scmp.lt.s32.totalorder %s24, 1
      %s378 = scalar_select %p377, %s24, 1
      %p379 = scmp.lt.s32.totalorder %s376, 15
      %s380 = scalar_select %p379, %s376, 15
      %s381 = smul.addr %s378, 16
      %s382 = sadd.s32 %s380, %s381
      %s383 = smul.addr %s382, 4
      %s384 = scalar_lea.vmem %s0, %s383
      %s385 = smul.u32 16, %s25
      %s386 = smul.u32 16, %s25
      %p387 = scmp.lt.s32.totalorder %s24, 1
      %s388 = scalar_select %p387, %s24, 1
      %p389 = scmp.lt.s32.totalorder %s386, 15
      %s390 = scalar_select %p389, %s386, 15
      %s391 = smul.addr %s388, 16
      %s392 = sadd.s32 %s390, %s391
      %s393 = smul.addr %s392, 4
      %s394 = scalar_lea.vmem %s1, %s393
      %s395 = smul.u32 16, %s25
      %s396 = smul.u32 16, %s25
      %p397 = scmp.lt.s32.totalorder %s24, 1
      %s398 = scalar_select %p397, %s24, 1
      %p399 = scmp.lt.s32.totalorder %s396, 15
      %s400 = scalar_select %p399, %s396, 15
      %s401 = smul.addr %s398, 16
      %s402 = sadd.s32 %s400, %s401
      %s403 = smul.addr %s402, 4
      %s404 = scalar_lea.vmem %s6, %s403
      %s405 = smul.u32 16, %s25
      %s406 = smul.u32 16, %s25
      %p407 = scmp.lt.s32.totalorder %s24, 1
      %s408 = scalar_select %p407, %s24, 1
      %p409 = scmp.lt.s32.totalorder %s406, 15
      %s410 = scalar_select %p409, %s406, 15
      %s411 = smul.addr %s408, 16
      %s412 = sadd.s32 %s410, %s411
      %s413 = smul.addr %s412, 4
      %s414 = scalar_lea.vmem %s7, %s413
      %s415 = smul.u32 16, %s25
      %p416 = scmp.lt.s32.totalorder %s24, 1
      %s417 = scalar_select %p416, %s24, 1
      %p418 = scmp.lt.s32.totalorder %s25, 0
      %s419 = scalar_select %p418, %s25, 0
      %s420 = sadd.s32 %s419, %s417
      %s421 = smul.addr %s420, 8
      %s422 = scalar_lea.vmem %s8, %s421
      %v424 = vld [vmem:[%s2] sm:$0xff]
      %v425 = vld [vmem:[%s384] sm:$0xf]
      %v426 = vld [vmem:[%s384 + $0x4] sm:$0xf]
      %v427 = vld [vmem:[%s384 + $0x8] sm:$0xf]
      %v428 = vld [vmem:[%s384 + $0xc] sm:$0xf]
      %v429 = vld [vmem:[%s384 + $0x10] sm:$0xf]
      %v430 = vld [vmem:[%s384 + $0x14] sm:$0xf]
      %v431 = vld [vmem:[%s384 + $0x18] sm:$0xf]
      %v432 = vld [vmem:[%s384 + $0x1c] sm:$0xf]
      %v433 = vld [vmem:[%s384 + $0x20] sm:$0xf]
      %v434 = vld [vmem:[%s384 + $0x24] sm:$0xf]
      %v435 = vld [vmem:[%s384 + $0x28] sm:$0xf]
      %v436 = vld [vmem:[%s384 + $0x2c] sm:$0xf]
      %v437 = vld [vmem:[%s384 + $0x30] sm:$0xf]
      %v438 = vld [vmem:[%s384 + $0x34] sm:$0xf]
      %v439 = vld [vmem:[%s384 + $0x38] sm:$0xf]
      %v440 = vld [vmem:[%s384 + $0x3c] sm:$0xf]
      %v441 = vld [vmem:[%s3] sm:$0xf]
      %v442 = vlaneseq
      %v443 = vshrl.u32 %v442, 7
      %v444 = vsub.s32 0, %v443
      %v445 = vrot.slane %v424, %v444
      %v462 = vunpack.c.l.b16 %v425
      %v463 = vunpack.c.l.b16 %v426
      %v464 = vunpack.c.l.b16 %v427
      %v465 = vunpack.c.l.b16 %v428
      %v466 = vunpack.c.l.b16 %v429
      %v467 = vunpack.c.l.b16 %v430
      %v468 = vunpack.c.l.b16 %v431
      %v469 = vunpack.c.l.b16 %v432
      %v470 = vunpack.c.l.b16 %v433
      %v471 = vunpack.c.l.b16 %v434
      %v472 = vunpack.c.l.b16 %v435
      %v473 = vunpack.c.l.b16 %v436
      %v474 = vunpack.c.l.b16 %v437
      %v475 = vunpack.c.l.b16 %v438
      %v476 = vunpack.c.l.b16 %v439
      %v477 = vunpack.c.l.b16 %v440
      %v478 = vpack.c.b16 %v463, %v462
      %v479 = vpack.c.b16 %v465, %v464
      %v480 = vpack.c.b16 %v467, %v466
      %v481 = vpack.c.b16 %v469, %v468
      %v482 = vpack.c.b16 %v471, %v470
      %v483 = vpack.c.b16 %v473, %v472
      %v484 = vpack.c.b16 %v475, %v474
      %v485 = vpack.c.b16 %v477, %v476
      %vm486 = vcmask 64512
      %v488 = vsel %vm486, %v478, 0
      %v491 = vsel %vm486, %v479, 0
      %v494 = vsel %vm486, %v480, 0
      %v497 = vsel %vm486, %v481, 0
      %v500 = vsel %vm486, %v482, 0
      %v503 = vsel %vm486, %v483, 0
      %v506 = vsel %vm486, %v484, 0
      %v509 = vsel %vm486, %v485, 0
      %vm511 = vcmask 1043456
      %v513 = vsel %vm511, %v441, 0
      %515 = vmatprep.subr.bf16.mxu0 0
      %516 = vmatpush1.bf16.msra.mxu0 %v513
      %517 = vmatprep.subr.bf16.mxu0 0
      %518 = vmatpush1.bf16.msra.mxu0 0
      %519 = vmatprep.subr.bf16.mxu0 0
      %520 = vmatpush1.bf16.msra.mxu0 0
      %521 = vmatprep.subr.bf16.mxu0 0
      %522 = vmatpush1.bf16.msra.mxu0 0
      %523 = vmatprep.subr.bf16.mxu0 0
      %524 = vmatpush1.bf16.msra.mxu0 0
      %525 = vmatprep.subr.bf16.mxu0 0
      %526 = vmatpush1.bf16.msra.mxu0 0
      %527 = vmatprep.subr.bf16.mxu0 0
      %528 = vmatpush1.bf16.msra.mxu0 0
      %529 = vmatprep.subr.bf16.mxu0 0
      %530 = vmatpush1.bf16.msra.mxu0 0
      %531 = vmatprep.subr.bf16.mxu0 0
      %532 = vmatpush1.bf16.msra.mxu0 0
      %533 = vmatprep.subr.bf16.mxu0 0
      %534 = vmatpush1.bf16.msra.mxu0 0
      %535 = vmatprep.subr.bf16.mxu0 0
      %536 = vmatpush1.bf16.msra.mxu0 0
      %537 = vmatprep.subr.bf16.mxu0 0
      %538 = vmatpush1.bf16.msra.mxu0 0
      %539 = vmatprep.subr.bf16.mxu0 0
      %540 = vmatpush1.bf16.msra.mxu0 0
      %541 = vmatprep.subr.bf16.mxu0 0
      %542 = vmatpush1.bf16.msra.mxu0 0
      %543 = vmatprep.subr.bf16.mxu0 0
      %544 = vmatpush1.bf16.msra.mxu0 0
      %545 = vmatprep.subr.bf16.mxu0 0
      %546 = vmatpush1.bf16.msra.mxu0 0
      %547 = vmatprep.mubr.bf16.mxu0 0
      %548 = vmatmul.mubr.bf16.gmra.mrb[0].mxu0 %v488
      %v549 = vpop.f32.mrb[0].mxu0
      %v550 = vadd.f32 %v445, %v549
      %v551 = vpop.f32.mrb[0].mxu0
      %v552 = vpop.f32.mrb[0].mxu0
      %v553 = vadd.f32 %v445, %v552
      %v554 = vpop.f32.mrb[0].mxu0
      %555 = vmatprep.mubr.bf16.mxu0 0
      %556 = vmatmul.mubr.bf16.gmra.mrb[0].mxu0 %v491
      %v557 = vpop.f32.mrb[0].mxu0
      %v558 = vadd.f32 %v445, %v557
      %v559 = vpop.f32.mrb[0].mxu0
      %v560 = vpop.f32.mrb[0].mxu0
      %v561 = vadd.f32 %v445, %v560
      %v562 = vpop.f32.mrb[0].mxu0
      %563 = vmatprep.mubr.bf16.mxu0 0
      %564 = vmatmul.mubr.bf16.gmra.mrb[0].mxu0 %v494
      %v565 = vpop.f32.mrb[0].mxu0
      %v566 = vadd.f32 %v445, %v565
      %v567 = vpop.f32.mrb[0].mxu0
      %v568 = vpop.f32.mrb[0].mxu0
      %v569 = vadd.f32 %v445, %v568
      %v570 = vpop.f32.mrb[0].mxu0
      %571 = vmatprep.mubr.bf16.mxu0 0
      %572 = vmatmul.mubr.bf16.gmra.mrb[0].mxu0 %v497
      %v573 = vpop.f32.mrb[0].mxu0
      %v574 = vadd.f32 %v445, %v573
      %v575 = vpop.f32.mrb[0].mxu0
      %v576 = vpop.f32.mrb[0].mxu0
      %v577 = vadd.f32 %v445, %v576
      %v578 = vpop.f32.mrb[0].mxu0
      %579 = vmatprep.mubr.bf16.mxu0 0
      %580 = vmatmul.mubr.bf16.gmra.mrb[0].mxu0 %v500
      %v581 = vpop.f32.mrb[0].mxu0
      %v582 = vadd.f32 %v445, %v581
      %v583 = vpop.f32.mrb[0].mxu0
      %v584 = vpop.f32.mrb[0].mxu0
      %v585 = vadd.f32 %v445, %v584
      %v586 = vpop.f32.mrb[0].mxu0
      %587 = vmatprep.mubr.bf16.mxu0 0
      %588 = vmatmul.mubr.bf16.gmra.mrb[0].mxu0 %v503
      %v589 = vpop.f32.mrb[0].mxu0
      %v590 = vadd.f32 %v445, %v589
      %v591 = vpop.f32.mrb[0].mxu0
      %v592 = vpop.f32.mrb[0].mxu0
      %v593 = vadd.f32 %v445, %v592
      %v594 = vpop.f32.mrb[0].mxu0
      %595 = vmatprep.mubr.bf16.mxu0 0
      %596 = vmatmul.mubr.bf16.gmra.mrb[0].mxu0 %v506
      %v597 = vpop.f32.mrb[0].mxu0
      %v598 = vadd.f32 %v445, %v597
      %v599 = vpop.f32.mrb[0].mxu0
      %v600 = vpop.f32.mrb[0].mxu0
      %v601 = vadd.f32 %v445, %v600
      %v602 = vpop.f32.mrb[0].mxu0
      %603 = vmatprep.mubr.bf16.mxu0 0
      %604 = vmatmul.mubr.bf16.gmra.mrb[0].mxu0 %v509
      %v605 = vpop.f32.mrb[0].mxu0
      %v606 = vadd.f32 %v445, %v605
      %v607 = vpop.f32.mrb[0].mxu0
      %v608 = vpop.f32.mrb[0].mxu0
      %v609 = vadd.f32 %v445, %v608
      %v610 = vpop.f32.mrb[0].mxu0
      %611 = vdwg.mxu0
      %vm612 = vcmp.ge.f32.partialorder %v550, 0.0
      %vm613 = vcmp.ge.f32.partialorder %v553, 0.0
      %vm614 = vcmp.ge.f32.partialorder %v558, 0.0
      %vm615 = vcmp.ge.f32.partialorder %v561, 0.0
      %vm616 = vcmp.ge.f32.partialorder %v566, 0.0
      %vm617 = vcmp.ge.f32.partialorder %v569, 0.0
      %vm618 = vcmp.ge.f32.partialorder %v574, 0.0
      %vm619 = vcmp.ge.f32.partialorder %v577, 0.0
      %vm620 = vcmp.ge.f32.partialorder %v582, 0.0
      %vm621 = vcmp.ge.f32.partialorder %v585, 0.0
      %vm622 = vcmp.ge.f32.partialorder %v590, 0.0
      %vm623 = vcmp.ge.f32.partialorder %v593, 0.0
      %vm624 = vcmp.ge.f32.partialorder %v598, 0.0
      %vm625 = vcmp.ge.f32.partialorder %v601, 0.0
      %vm626 = vcmp.ge.f32.partialorder %v606, 0.0
      %vm627 = vcmp.ge.f32.partialorder %v609, 0.0
      %v628 = vmul.f32 %v550, 0.1
      %v629 = vmul.f32 %v553, 0.1
      %v630 = vmul.f32 %v558, 0.1
      %v631 = vmul.f32 %v561, 0.1
      %v632 = vmul.f32 %v566, 0.1
      %v633 = vmul.f32 %v569, 0.1
      %v634 = vmul.f32 %v574, 0.1
      %v635 = vmul.f32 %v577, 0.1
      %v636 = vmul.f32 %v582, 0.1
      %v637 = vmul.f32 %v585, 0.1
      %v638 = vmul.f32 %v590, 0.1
      %v639 = vmul.f32 %v593, 0.1
      %v640 = vmul.f32 %v598, 0.1
      %v641 = vmul.f32 %v601, 0.1
      %v642 = vmul.f32 %v606, 0.1
      %v643 = vmul.f32 %v609, 0.1
      %v644 = vsel %vm612, %v550, %v628
      %v645 = vsel %vm613, %v553, %v629
      %v646 = vsel %vm614, %v558, %v630
      %v647 = vsel %vm615, %v561, %v631
      %v648 = vsel %vm616, %v566, %v632
      %v649 = vsel %vm617, %v569, %v633
      %v650 = vsel %vm618, %v574, %v634
      %v651 = vsel %vm619, %v577, %v635
      %v652 = vsel %vm620, %v582, %v636
      %v653 = vsel %vm621, %v585, %v637
      %v654 = vsel %vm622, %v590, %v638
      %v655 = vsel %vm623, %v593, %v639
      %v656 = vsel %vm624, %v598, %v640
      %v657 = vsel %vm625, %v601, %v641
      %v658 = vsel %vm626, %v606, %v642
      %v659 = vsel %vm627, %v609, %v643
      %v660 = vpack.c.bf16 %v645, %v644
      %v661 = vpack.c.bf16 %v647, %v646
      %v662 = vpack.c.bf16 %v649, %v648
      %v663 = vpack.c.bf16 %v651, %v650
      %v664 = vpack.c.bf16 %v653, %v652
      %v665 = vpack.c.bf16 %v655, %v654
      %v666 = vpack.c.bf16 %v657, %v656
      %v667 = vpack.c.bf16 %v659, %v658
      %v668 = vld [vmem:[%s4] sm:$0xf]
      %v669 = vlaneseq
      %v670 = vshrl.u32 %v669, 7
      %v671 = vsub.s32 1, %v670
      %v672 = vrot.slane %v424, %v671
      %v674 = vsel %vm486, %v660, 0
      %v677 = vsel %vm486, %v661, 0
      %v680 = vsel %vm486, %v662, 0
      %v683 = vsel %vm486, %v663, 0
      %v686 = vsel %vm486, %v664, 0
      %v689 = vsel %vm486, %v665, 0
      %v692 = vsel %vm486, %v666, 0
      %v695 = vsel %vm486, %v667, 0
      %v698 = vsel %vm511, %v668, 0
      %700 = vmatprep.subr.bf16.mxu0 0
      %701 = vmatpush1.bf16.msra.mxu0 %v698
      %702 = vmatprep.subr.bf16.mxu0 0
      %703 = vmatpush1.bf16.msra.mxu0 0
      %704 = vmatprep.subr.bf16.mxu0 0
      %705 = vmatpush1.bf16.msra.mxu0 0
      %706 = vmatprep.subr.bf16.mxu0 0
      %707 = vmatpush1.bf16.msra.mxu0 0
      %708 = vmatprep.subr.bf16.mxu0 0
      %709 = vmatpush1.bf16.msra.mxu0 0
      %710 = vmatprep.subr.bf16.mxu0 0
      %711 = vmatpush1.bf16.msra.mxu0 0
      %712 = vmatprep.subr.bf16.mxu0 0
      %713 = vmatpush1.bf16.msra.mxu0 0
      %714 = vmatprep.subr.bf16.mxu0 0
      %715 = vmatpush1.bf16.msra.mxu0 0
      %716 = vmatprep.subr.bf16.mxu0 0
      %717 = vmatpush1.bf16.msra.mxu0 0
      %718 = vmatprep.subr.bf16.mxu0 0
      %719 = vmatpush1.bf16.msra.mxu0 0
      %720 = vmatprep.subr.bf16.mxu0 0
      %721 = vmatpush1.bf16.msra.mxu0 0
      %722 = vmatprep.subr.bf16.mxu0 0
      %723 = vmatpush1.bf16.msra.mxu0 0
      %724 = vmatprep.subr.bf16.mxu0 0
      %725 = vmatpush1.bf16.msra.mxu0 0
      %726 = vmatprep.subr.bf16.mxu0 0
      %727 = vmatpush1.bf16.msra.mxu0 0
      %728 = vmatprep.subr.bf16.mxu0 0
      %729 = vmatpush1.bf16.msra.mxu0 0
      %730 = vmatprep.subr.bf16.mxu0 0
      %731 = vmatpush1.bf16.msra.mxu0 0
      %732 = vmatprep.mubr.bf16.mxu0 0
      %733 = vmatmul.mubr.bf16.gmra.mrb[0].mxu0 %v674
      %v734 = vpop.f32.mrb[0].mxu0
      %v735 = vadd.f32 %v672, %v734
      %v736 = vpop.f32.mrb[0].mxu0
      %v737 = vpop.f32.mrb[0].mxu0
      %v738 = vadd.f32 %v672, %v737
      %v739 = vpop.f32.mrb[0].mxu0
      %740 = vmatprep.mubr.bf16.mxu0 0
      %741 = vmatmul.mubr.bf16.gmra.mrb[0].mxu0 %v677
      %v742 = vpop.f32.mrb[0].mxu0
      %v743 = vadd.f32 %v672, %v742
      %v744 = vpop.f32.mrb[0].mxu0
      %v745 = vpop.f32.mrb[0].mxu0
      %v746 = vadd.f32 %v672, %v745
      %v747 = vpop.f32.mrb[0].mxu0
      %748 = vmatprep.mubr.bf16.mxu0 0
      %749 = vmatmul.mubr.bf16.gmra.mrb[0].mxu0 %v680
      %v750 = vpop.f32.mrb[0].mxu0
      %v751 = vadd.f32 %v672, %v750
      %v752 = vpop.f32.mrb[0].mxu0
      %v753 = vpop.f32.mrb[0].mxu0
      %v754 = vadd.f32 %v672, %v753
      %v755 = vpop.f32.mrb[0].mxu0
      %756 = vmatprep.mubr.bf16.mxu0 0
      %757 = vmatmul.mubr.bf16.gmra.mrb[0].mxu0 %v683
      %v758 = vpop.f32.mrb[0].mxu0
      %v759 = vadd.f32 %v672, %v758
      %v760 = vpop.f32.mrb[0].mxu0
      %v761 = vpop.f32.mrb[0].mxu0
      %v762 = vadd.f32 %v672, %v761
      %v763 = vpop.f32.mrb[0].mxu0
      %764 = vmatprep.mubr.bf16.mxu0 0
      %765 = vmatmul.mubr.bf16.gmra.mrb[0].mxu0 %v686
      %v766 = vpop.f32.mrb[0].mxu0
      %v767 = vadd.f32 %v672, %v766
      %v768 = vpop.f32.mrb[0].mxu0
      %v769 = vpop.f32.mrb[0].mxu0
      %v770 = vadd.f32 %v672, %v769
      %v771 = vpop.f32.mrb[0].mxu0
      %772 = vmatprep.mubr.bf16.mxu0 0
      %773 = vmatmul.mubr.bf16.gmra.mrb[0].mxu0 %v689
      %v774 = vpop.f32.mrb[0].mxu0
      %v775 = vadd.f32 %v672, %v774
      %v776 = vpop.f32.mrb[0].mxu0
      %v777 = vpop.f32.mrb[0].mxu0
      %v778 = vadd.f32 %v672, %v777
      %v779 = vpop.f32.mrb[0].mxu0
      %780 = vmatprep.mubr.bf16.mxu0 0
      %781 = vmatmul.mubr.bf16.gmra.mrb[0].mxu0 %v692
      %v782 = vpop.f32.mrb[0].mxu0
      %v783 = vadd.f32 %v672, %v782
      %v784 = vpop.f32.mrb[0].mxu0
      %v785 = vpop.f32.mrb[0].mxu0
      %v786 = vadd.f32 %v672, %v785
      %v787 = vpop.f32.mrb[0].mxu0
      %788 = vmatprep.mubr.bf16.mxu0 0
      %789 = vmatmul.mubr.bf16.gmra.mrb[0].mxu0 %v695
      %v790 = vpop.f32.mrb[0].mxu0
      %v791 = vadd.f32 %v672, %v790
      %v792 = vpop.f32.mrb[0].mxu0
      %v793 = vpop.f32.mrb[0].mxu0
      %v794 = vadd.f32 %v672, %v793
      %v795 = vpop.f32.mrb[0].mxu0
      %796 = vdwg.mxu0
      %vm797 = vcmp.ge.f32.partialorder %v735, 0.0
      %vm798 = vcmp.ge.f32.partialorder %v738, 0.0
      %vm799 = vcmp.ge.f32.partialorder %v743, 0.0
      %vm800 = vcmp.ge.f32.partialorder %v746, 0.0
      %vm801 = vcmp.ge.f32.partialorder %v751, 0.0
      %vm802 = vcmp.ge.f32.partialorder %v754, 0.0
      %vm803 = vcmp.ge.f32.partialorder %v759, 0.0
      %vm804 = vcmp.ge.f32.partialorder %v762, 0.0
      %vm805 = vcmp.ge.f32.partialorder %v767, 0.0
      %vm806 = vcmp.ge.f32.partialorder %v770, 0.0
      %vm807 = vcmp.ge.f32.partialorder %v775, 0.0
      %vm808 = vcmp.ge.f32.partialorder %v778, 0.0
      %vm809 = vcmp.ge.f32.partialorder %v783, 0.0
      %vm810 = vcmp.ge.f32.partialorder %v786, 0.0
      %vm811 = vcmp.ge.f32.partialorder %v791, 0.0
      %vm812 = vcmp.ge.f32.partialorder %v794, 0.0
      %v813 = vmul.f32 %v735, 0.1
      %v814 = vmul.f32 %v738, 0.1
      %v815 = vmul.f32 %v743, 0.1
      %v816 = vmul.f32 %v746, 0.1
      %v817 = vmul.f32 %v751, 0.1
      %v818 = vmul.f32 %v754, 0.1
      %v819 = vmul.f32 %v759, 0.1
      %v820 = vmul.f32 %v762, 0.1
      %v821 = vmul.f32 %v767, 0.1
      %v822 = vmul.f32 %v770, 0.1
      %v823 = vmul.f32 %v775, 0.1
      %v824 = vmul.f32 %v778, 0.1
      %v825 = vmul.f32 %v783, 0.1
      %v826 = vmul.f32 %v786, 0.1
      %v827 = vmul.f32 %v791, 0.1
      %v828 = vmul.f32 %v794, 0.1
      %v829 = vsel %vm797, %v735, %v813
      %v830 = vsel %vm798, %v738, %v814
      %v831 = vsel %vm799, %v743, %v815
      %v832 = vsel %vm800, %v746, %v816
      %v833 = vsel %vm801, %v751, %v817
      %v834 = vsel %vm802, %v754, %v818
      %v835 = vsel %vm803, %v759, %v819
      %v836 = vsel %vm804, %v762, %v820
      %v837 = vsel %vm805, %v767, %v821
      %v838 = vsel %vm806, %v770, %v822
      %v839 = vsel %vm807, %v775, %v823
      %v840 = vsel %vm808, %v778, %v824
      %v841 = vsel %vm809, %v783, %v825
      %v842 = vsel %vm810, %v786, %v826
      %v843 = vsel %vm811, %v791, %v827
      %v844 = vsel %vm812, %v794, %v828
      %v845 = vld [vmem:[%s394] sm:$0xf]
      %v846 = vld [vmem:[%s394 + $0x4] sm:$0xf]
      %v847 = vld [vmem:[%s394 + $0x8] sm:$0xf]
      %v848 = vld [vmem:[%s394 + $0xc] sm:$0xf]
      %v849 = vld [vmem:[%s394 + $0x10] sm:$0xf]
      %v850 = vld [vmem:[%s394 + $0x14] sm:$0xf]
      %v851 = vld [vmem:[%s394 + $0x18] sm:$0xf]
      %v852 = vld [vmem:[%s394 + $0x1c] sm:$0xf]
      %v853 = vld [vmem:[%s394 + $0x20] sm:$0xf]
      %v854 = vld [vmem:[%s394 + $0x24] sm:$0xf]
      %v855 = vld [vmem:[%s394 + $0x28] sm:$0xf]
      %v856 = vld [vmem:[%s394 + $0x2c] sm:$0xf]
      %v857 = vld [vmem:[%s394 + $0x30] sm:$0xf]
      %v858 = vld [vmem:[%s394 + $0x34] sm:$0xf]
      %v859 = vld [vmem:[%s394 + $0x38] sm:$0xf]
      %v860 = vld [vmem:[%s394 + $0x3c] sm:$0xf]
      %v861 = vld [vmem:[%s5] sm:$0xf]
      %v862 = vlaneseq
      %v863 = vshrl.u32 %v862, 7
      %v864 = vsub.s32 2, %v863
      %v865 = vrot.slane %v424, %v864
      %v882 = vunpack.c.l.b16 %v845
      %v883 = vunpack.c.l.b16 %v846
      %v884 = vunpack.c.l.b16 %v847
      %v885 = vunpack.c.l.b16 %v848
      %v886 = vunpack.c.l.b16 %v849
      %v887 = vunpack.c.l.b16 %v850
      %v888 = vunpack.c.l.b16 %v851
      %v889 = vunpack.c.l.b16 %v852
      %v890 = vunpack.c.l.b16 %v853
      %v891 = vunpack.c.l.b16 %v854
      %v892 = vunpack.c.l.b16 %v855
      %v893 = vunpack.c.l.b16 %v856
      %v894 = vunpack.c.l.b16 %v857
      %v895 = vunpack.c.l.b16 %v858
      %v896 = vunpack.c.l.b16 %v859
      %v897 = vunpack.c.l.b16 %v860
      %v898 = vpack.c.b16 %v883, %v882
      %v899 = vpack.c.b16 %v885, %v884
      %v900 = vpack.c.b16 %v887, %v886
      %v901 = vpack.c.b16 %v889, %v888
      %v902 = vpack.c.b16 %v891, %v890
      %v903 = vpack.c.b16 %v893, %v892
      %v904 = vpack.c.b16 %v895, %v894
      %v905 = vpack.c.b16 %v897, %v896
      %v907 = vsel %vm486, %v898, 0
      %v910 = vsel %vm486, %v899, 0
      %v913 = vsel %vm486, %v900, 0
      %v916 = vsel %vm486, %v901, 0
      %v919 = vsel %vm486, %v902, 0
      %v922 = vsel %vm486, %v903, 0
      %v925 = vsel %vm486, %v904, 0
      %v928 = vsel %vm486, %v905, 0
      %v931 = vsel %vm511, %v861, 0
      %933 = vmatprep.subr.bf16.mxu0 0
      %934 = vmatpush1.bf16.msra.mxu0 %v931
      %935 = vmatprep.subr.bf16.mxu0 0
      %936 = vmatpush1.bf16.msra.mxu0 0
      %937 = vmatprep.subr.bf16.mxu0 0
      %938 = vmatpush1.bf16.msra.mxu0 0
      %939 = vmatprep.subr.bf16.mxu0 0
      %940 = vmatpush1.bf16.msra.mxu0 0
      %941 = vmatprep.subr.bf16.mxu0 0
      %942 = vmatpush1.bf16.msra.mxu0 0
      %943 = vmatprep.subr.bf16.mxu0 0
      %944 = vmatpush1.bf16.msra.mxu0 0
      %945 = vmatprep.subr.bf16.mxu0 0
      %946 = vmatpush1.bf16.msra.mxu0 0
      %947 = vmatprep.subr.bf16.mxu0 0
      %948 = vmatpush1.bf16.msra.mxu0 0
      %949 = vmatprep.subr.bf16.mxu0 0
      %950 = vmatpush1.bf16.msra.mxu0 0
      %951 = vmatprep.subr.bf16.mxu0 0
      %952 = vmatpush1.bf16.msra.mxu0 0
      %953 = vmatprep.subr.bf16.mxu0 0
      %954 = vmatpush1.bf16.msra.mxu0 0
      %955 = vmatprep.subr.bf16.mxu0 0
      %956 = vmatpush1.bf16.msra.mxu0 0
      %957 = vmatprep.subr.bf16.mxu0 0
      %958 = vmatpush1.bf16.msra.mxu0 0
      %959 = vmatprep.subr.bf16.mxu0 0
      %960 = vmatpush1.bf16.msra.mxu0 0
      %961 = vmatprep.subr.bf16.mxu0 0
      %962 = vmatpush1.bf16.msra.mxu0 0
      %963 = vmatprep.subr.bf16.mxu0 0
      %964 = vmatpush1.bf16.msra.mxu0 0
      %965 = vmatprep.mubr.bf16.mxu0 0
      %966 = vmatmul.mubr.bf16.gmra.mrb[0].mxu0 %v907
      %v967 = vpop.f32.mrb[0].mxu0
      %v968 = vadd.f32 %v865, %v967
      %v969 = vpop.f32.mrb[0].mxu0
      %v970 = vpop.f32.mrb[0].mxu0
      %v971 = vadd.f32 %v865, %v970
      %v972 = vpop.f32.mrb[0].mxu0
      %973 = vmatprep.mubr.bf16.mxu0 0
      %974 = vmatmul.mubr.bf16.gmra.mrb[0].mxu0 %v910
      %v975 = vpop.f32.mrb[0].mxu0
      %v976 = vadd.f32 %v865, %v975
      %v977 = vpop.f32.mrb[0].mxu0
      %v978 = vpop.f32.mrb[0].mxu0
      %v979 = vadd.f32 %v865, %v978
      %v980 = vpop.f32.mrb[0].mxu0
      %981 = vmatprep.mubr.bf16.mxu0 0
      %982 = vmatmul.mubr.bf16.gmra.mrb[0].mxu0 %v913
      %v983 = vpop.f32.mrb[0].mxu0
      %v984 = vadd.f32 %v865, %v983
      %v985 = vpop.f32.mrb[0].mxu0
      %v986 = vpop.f32.mrb[0].mxu0
      %v987 = vadd.f32 %v865, %v986
      %v988 = vpop.f32.mrb[0].mxu0
      %989 = vmatprep.mubr.bf16.mxu0 0
      %990 = vmatmul.mubr.bf16.gmra.mrb[0].mxu0 %v916
      %v991 = vpop.f32.mrb[0].mxu0
      %v992 = vadd.f32 %v865, %v991
      %v993 = vpop.f32.mrb[0].mxu0
      %v994 = vpop.f32.mrb[0].mxu0
      %v995 = vadd.f32 %v865, %v994
      %v996 = vpop.f32.mrb[0].mxu0
      %997 = vmatprep.mubr.bf16.mxu0 0
      %998 = vmatmul.mubr.bf16.gmra.mrb[0].mxu0 %v919
      %v999 = vpop.f32.mrb[0].mxu0
      %v1000 = vadd.f32 %v865, %v999
      %v1001 = vpop.f32.mrb[0].mxu0
      %v1002 = vpop.f32.mrb[0].mxu0
      %v1003 = vadd.f32 %v865, %v1002
      %v1004 = vpop.f32.mrb[0].mxu0
      %1005 = vmatprep.mubr.bf16.mxu0 0
      %1006 = vmatmul.mubr.bf16.gmra.mrb[0].mxu0 %v922
      %v1007 = vpop.f32.mrb[0].mxu0
      %v1008 = vadd.f32 %v865, %v1007
      %v1009 = vpop.f32.mrb[0].mxu0
      %v1010 = vpop.f32.mrb[0].mxu0
      %v1011 = vadd.f32 %v865, %v1010
      %v1012 = vpop.f32.mrb[0].mxu0
      %1013 = vmatprep.mubr.bf16.mxu0 0
      %1014 = vmatmul.mubr.bf16.gmra.mrb[0].mxu0 %v925
      %v1015 = vpop.f32.mrb[0].mxu0
      %v1016 = vadd.f32 %v865, %v1015
      %v1017 = vpop.f32.mrb[0].mxu0
      %v1018 = vpop.f32.mrb[0].mxu0
      %v1019 = vadd.f32 %v865, %v1018
      %v1020 = vpop.f32.mrb[0].mxu0
      %1021 = vmatprep.mubr.bf16.mxu0 0
      %1022 = vmatmul.mubr.bf16.gmra.mrb[0].mxu0 %v928
      %v1023 = vpop.f32.mrb[0].mxu0
      %v1024 = vadd.f32 %v865, %v1023
      %v1025 = vpop.f32.mrb[0].mxu0
      %v1026 = vpop.f32.mrb[0].mxu0
      %v1027 = vadd.f32 %v865, %v1026
      %v1028 = vpop.f32.mrb[0].mxu0
      %1029 = vdwg.mxu0
      %vm1030 = vcmp.ge.f32.partialorder %v968, 0.0
      %vm1031 = vcmp.ge.f32.partialorder %v971, 0.0
      %vm1032 = vcmp.ge.f32.partialorder %v976, 0.0
      %vm1033 = vcmp.ge.f32.partialorder %v979, 0.0
      %vm1034 = vcmp.ge.f32.partialorder %v984, 0.0
      %vm1035 = vcmp.ge.f32.partialorder %v987, 0.0
      %vm1036 = vcmp.ge.f32.partialorder %v992, 0.0
      %vm1037 = vcmp.ge.f32.partialorder %v995, 0.0
      %vm1038 = vcmp.ge.f32.partialorder %v1000, 0.0
      %vm1039 = vcmp.ge.f32.partialorder %v1003, 0.0
      %vm1040 = vcmp.ge.f32.partialorder %v1008, 0.0
      %vm1041 = vcmp.ge.f32.partialorder %v1011, 0.0
      %vm1042 = vcmp.ge.f32.partialorder %v1016, 0.0
      %vm1043 = vcmp.ge.f32.partialorder %v1019, 0.0
      %vm1044 = vcmp.ge.f32.partialorder %v1024, 0.0
      %vm1045 = vcmp.ge.f32.partialorder %v1027, 0.0
      %v1046 = vmul.f32 %v968, 0.1
      %v1047 = vmul.f32 %v971, 0.1
      %v1048 = vmul.f32 %v976, 0.1
      %v1049 = vmul.f32 %v979, 0.1
      %v1050 = vmul.f32 %v984, 0.1
      %v1051 = vmul.f32 %v987, 0.1
      %v1052 = vmul.f32 %v992, 0.1
      %v1053 = vmul.f32 %v995, 0.1
      %v1054 = vmul.f32 %v1000, 0.1
      %v1055 = vmul.f32 %v1003, 0.1
      %v1056 = vmul.f32 %v1008, 0.1
      %v1057 = vmul.f32 %v1011, 0.1
      %v1058 = vmul.f32 %v1016, 0.1
      %v1059 = vmul.f32 %v1019, 0.1
      %v1060 = vmul.f32 %v1024, 0.1
      %v1061 = vmul.f32 %v1027, 0.1
      %v1062 = vsel %vm1030, %v968, %v1046
      %v1063 = vsel %vm1031, %v971, %v1047
      %v1064 = vsel %vm1032, %v976, %v1048
      %v1065 = vsel %vm1033, %v979, %v1049
      %v1066 = vsel %vm1034, %v984, %v1050
      %v1067 = vsel %vm1035, %v987, %v1051
      %v1068 = vsel %vm1036, %v992, %v1052
      %v1069 = vsel %vm1037, %v995, %v1053
      %v1070 = vsel %vm1038, %v1000, %v1054
      %v1071 = vsel %vm1039, %v1003, %v1055
      %v1072 = vsel %vm1040, %v1008, %v1056
      %v1073 = vsel %vm1041, %v1011, %v1057
      %v1074 = vsel %vm1042, %v1016, %v1058
      %v1075 = vsel %vm1043, %v1019, %v1059
      %v1076 = vsel %vm1044, %v1024, %v1060
      %v1077 = vsel %vm1045, %v1027, %v1061
      %s1078 = smul.u32 %s25, 128
      %v1079 = vlaneseq
      %v1080 = vshrl.u32 %v1079, 7
      %v1081 = vadd.s32 %v1080, 8
      %v1082 = vadd.s32 %v1080, 16
      %v1083 = vadd.s32 %v1080, 24
      %v1084 = vadd.s32 %v1080, 32
      %v1085 = vadd.s32 %v1080, 40
      %v1086 = vadd.s32 %v1080, 48
      %v1087 = vadd.s32 %v1080, 56
      %v1088 = vadd.s32 %v1080, 64
      %v1089 = vadd.s32 %v1080, 72
      %v1090 = vadd.s32 %v1080, 80
      %v1091 = vadd.s32 %v1080, 88
      %v1092 = vadd.s32 %v1080, 96
      %v1093 = vadd.s32 %v1080, 104
      %v1094 = vadd.s32 %v1080, 112
      %v1095 = vadd.s32 %v1080, 120
      %v1096 = vstv %s1078
      %v1097 = vadd.s32 %v1096, %v1080
      %v1098 = vadd.s32 %v1096, %v1081
      %v1099 = vadd.s32 %v1096, %v1082
      %v1100 = vadd.s32 %v1096, %v1083
      %v1101 = vadd.s32 %v1096, %v1084
      %v1102 = vadd.s32 %v1096, %v1085
      %v1103 = vadd.s32 %v1096, %v1086
      %v1104 = vadd.s32 %v1096, %v1087
      %v1105 = vadd.s32 %v1096, %v1088
      %v1106 = vadd.s32 %v1096, %v1089
      %v1107 = vadd.s32 %v1096, %v1090
      %v1108 = vadd.s32 %v1096, %v1091
      %v1109 = vadd.s32 %v1096, %v1092
      %v1110 = vadd.s32 %v1096, %v1093
      %v1111 = vadd.s32 %v1096, %v1094
      %v1112 = vadd.s32 %v1096, %v1095
      %vm1113 = vcmp.lt.s32.totalorder %v1097, 16
      %vm1114 = vcmp.lt.s32.totalorder %v1098, 16
      %vm1115 = vcmp.lt.s32.totalorder %v1099, 16
      %vm1116 = vcmp.lt.s32.totalorder %v1100, 16
      %vm1117 = vcmp.lt.s32.totalorder %v1101, 16
      %vm1118 = vcmp.lt.s32.totalorder %v1102, 16
      %vm1119 = vcmp.lt.s32.totalorder %v1103, 16
      %vm1120 = vcmp.lt.s32.totalorder %v1104, 16
      %vm1121 = vcmp.lt.s32.totalorder %v1105, 16
      %vm1122 = vcmp.lt.s32.totalorder %v1106, 16
      %vm1123 = vcmp.lt.s32.totalorder %v1107, 16
      %vm1124 = vcmp.lt.s32.totalorder %v1108, 16
      %vm1125 = vcmp.lt.s32.totalorder %v1109, 16
      %vm1126 = vcmp.lt.s32.totalorder %v1110, 16
      %vm1127 = vcmp.lt.s32.totalorder %v1111, 16
      %vm1128 = vcmp.lt.s32.totalorder %v1112, 16
      %v1129 = vsel %vm1113, 1, 0
      %v1130 = vsel %vm1114, 1, 0
      %v1131 = vsel %vm1115, 1, 0
      %v1132 = vsel %vm1116, 1, 0
      %v1133 = vsel %vm1117, 1, 0
      %v1134 = vsel %vm1118, 1, 0
      %v1135 = vsel %vm1119, 1, 0
      %v1136 = vsel %vm1120, 1, 0
      %v1137 = vsel %vm1121, 1, 0
      %v1138 = vsel %vm1122, 1, 0
      %v1139 = vsel %vm1123, 1, 0
      %v1140 = vsel %vm1124, 1, 0
      %v1141 = vsel %vm1125, 1, 0
      %v1142 = vsel %vm1126, 1, 0
      %v1143 = vsel %vm1127, 1, 0
      %v1144 = vsel %vm1128, 1, 0
      %v1145 = vcvt.s32.f32 %v1129
      %v1146 = vcvt.s32.f32 %v1130
      %v1147 = vcvt.s32.f32 %v1131
      %v1148 = vcvt.s32.f32 %v1132
      %v1149 = vcvt.s32.f32 %v1133
      %v1150 = vcvt.s32.f32 %v1134
      %v1151 = vcvt.s32.f32 %v1135
      %v1152 = vcvt.s32.f32 %v1136
      %v1153 = vcvt.s32.f32 %v1137
      %v1154 = vcvt.s32.f32 %v1138
      %v1155 = vcvt.s32.f32 %v1139
      %v1156 = vcvt.s32.f32 %v1140
      %v1157 = vcvt.s32.f32 %v1141
      %v1158 = vcvt.s32.f32 %v1142
      %v1159 = vcvt.s32.f32 %v1143
      %v1160 = vcvt.s32.f32 %v1144
      %v1161 = vadd.f32 %v829, %v1062
      %v1162 = vadd.f32 %v830, %v1063
      %v1163 = vadd.f32 %v831, %v1064
      %v1164 = vadd.f32 %v832, %v1065
      %v1165 = vadd.f32 %v833, %v1066
      %v1166 = vadd.f32 %v834, %v1067
      %v1167 = vadd.f32 %v835, %v1068
      %v1168 = vadd.f32 %v836, %v1069
      %v1169 = vadd.f32 %v837, %v1070
      %v1170 = vadd.f32 %v838, %v1071
      %v1171 = vadd.f32 %v839, %v1072
      %v1172 = vadd.f32 %v840, %v1073
      %v1173 = vadd.f32 %v841, %v1074
      %v1174 = vadd.f32 %v842, %v1075
      %v1175 = vadd.f32 %v843, %v1076
      %v1176 = vadd.f32 %v844, %v1077
      %v1177 = vmul.f32 %v1145, %v1161
      %v1178 = vmul.f32 %v1146, %v1162
      %v1179 = vmul.f32 %v1147, %v1163
      %v1180 = vmul.f32 %v1148, %v1164
      %v1181 = vmul.f32 %v1149, %v1165
      %v1182 = vmul.f32 %v1150, %v1166
      %v1183 = vmul.f32 %v1151, %v1167
      %v1184 = vmul.f32 %v1152, %v1168
      %v1185 = vmul.f32 %v1153, %v1169
      %v1186 = vmul.f32 %v1154, %v1170
      %v1187 = vmul.f32 %v1155, %v1171
      %v1188 = vmul.f32 %v1156, %v1172
      %v1189 = vmul.f32 %v1157, %v1173
      %v1190 = vmul.f32 %v1158, %v1174
      %v1191 = vmul.f32 %v1159, %v1175
      %v1192 = vmul.f32 %v1160, %v1176
      %v1193 = vadd.f32 %v1177, %v1178
      %v1194 = vadd.f32 %v1193, %v1179
      %v1195 = vadd.f32 %v1194, %v1180
      %v1196 = vadd.f32 %v1195, %v1181
      %v1197 = vadd.f32 %v1196, %v1182
      %v1198 = vadd.f32 %v1197, %v1183
      %v1199 = vadd.f32 %v1198, %v1184
      %v1200 = vadd.f32 %v1199, %v1185
      %v1201 = vadd.f32 %v1200, %v1186
      %v1202 = vadd.f32 %v1201, %v1187
      %v1203 = vadd.f32 %v1202, %v1188
      %v1204 = vadd.f32 %v1203, %v1189
      %v1205 = vadd.f32 %v1204, %v1190
      %v1206 = vadd.f32 %v1205, %v1191
      %v1207 = vadd.f32 %v1206, %v1192
      %v1208 = vrot.slane %v1207, 4
      %v1209 = vadd.f32 %v1207, %v1208
      %v1210 = vrot.slane %v1209, 2
      %v1211 = vadd.f32 %v1209, %v1210
      %v1212 = vrot.slane %v1211, 1
      %v1213 = vadd.f32 %v1211, %v1212
      %v1214 = vpack.c.bf16 %v830, %v829
      %v1215 = vpack.c.bf16 %v832, %v831
      %v1216 = vpack.c.bf16 %v834, %v833
      %v1217 = vpack.c.bf16 %v836, %v835
      %v1218 = vpack.c.bf16 %v838, %v837
      %v1219 = vpack.c.bf16 %v840, %v839
      %v1220 = vpack.c.bf16 %v842, %v841
      %v1221 = vpack.c.bf16 %v844, %v843
      %v1230 = vunpack.c.l.b16 %v1214
      %v1231 = vunpack.c.h.b16 %v1214
      %v1232 = vunpack.c.l.b16 %v1215
      %v1233 = vunpack.c.h.b16 %v1215
      %v1234 = vunpack.c.l.b16 %v1216
      %v1235 = vunpack.c.h.b16 %v1216
      %v1236 = vunpack.c.l.b16 %v1217
      %v1237 = vunpack.c.h.b16 %v1217
      %v1238 = vunpack.c.l.b16 %v1218
      %v1239 = vunpack.c.h.b16 %v1218
      %v1240 = vunpack.c.l.b16 %v1219
      %v1241 = vunpack.c.h.b16 %v1219
      %v1242 = vunpack.c.l.b16 %v1220
      %v1243 = vunpack.c.h.b16 %v1220
      %v1244 = vunpack.c.l.b16 %v1221
      %v1245 = vunpack.c.h.b16 %v1221
      %v1246 = vpack.c.b16 %v1230, %v1230
      %v1247 = vpack.c.b16 %v1231, %v1231
      %v1248 = vpack.c.b16 %v1232, %v1232
      %v1249 = vpack.c.b16 %v1233, %v1233
      %v1250 = vpack.c.b16 %v1234, %v1234
      %v1251 = vpack.c.b16 %v1235, %v1235
      %v1252 = vpack.c.b16 %v1236, %v1236
      %v1253 = vpack.c.b16 %v1237, %v1237
      %v1254 = vpack.c.b16 %v1238, %v1238
      %v1255 = vpack.c.b16 %v1239, %v1239
      %v1256 = vpack.c.b16 %v1240, %v1240
      %v1257 = vpack.c.b16 %v1241, %v1241
      %v1258 = vpack.c.b16 %v1242, %v1242
      %v1259 = vpack.c.b16 %v1243, %v1243
      %v1260 = vpack.c.b16 %v1244, %v1244
      %v1261 = vpack.c.b16 %v1245, %v1245
      %1278 = vst [vmem:[%s404] sm:$0xf] %v1246
      %1279 = vst [vmem:[%s404 + $0x4] sm:$0xf] %v1247
      %1280 = vst [vmem:[%s404 + $0x8] sm:$0xf] %v1248
      %1281 = vst [vmem:[%s404 + $0xc] sm:$0xf] %v1249
      %1282 = vst [vmem:[%s404 + $0x10] sm:$0xf] %v1250
      %1283 = vst [vmem:[%s404 + $0x14] sm:$0xf] %v1251
      %1284 = vst [vmem:[%s404 + $0x18] sm:$0xf] %v1252
      %1285 = vst [vmem:[%s404 + $0x1c] sm:$0xf] %v1253
      %1286 = vst [vmem:[%s404 + $0x20] sm:$0xf] %v1254
      %1287 = vst [vmem:[%s404 + $0x24] sm:$0xf] %v1255
      %1288 = vst [vmem:[%s404 + $0x28] sm:$0xf] %v1256
      %1289 = vst [vmem:[%s404 + $0x2c] sm:$0xf] %v1257
      %1290 = vst [vmem:[%s404 + $0x30] sm:$0xf] %v1258
      %1291 = vst [vmem:[%s404 + $0x34] sm:$0xf] %v1259
      %1292 = vst [vmem:[%s404 + $0x38] sm:$0xf] %v1260
      %1293 = vst [vmem:[%s404 + $0x3c] sm:$0xf] %v1261
      %v1294 = vpack.c.bf16 %v1063, %v1062
      %v1295 = vpack.c.bf16 %v1065, %v1064
      %v1296 = vpack.c.bf16 %v1067, %v1066
      %v1297 = vpack.c.bf16 %v1069, %v1068
      %v1298 = vpack.c.bf16 %v1071, %v1070
      %v1299 = vpack.c.bf16 %v1073, %v1072
      %v1300 = vpack.c.bf16 %v1075, %v1074
      %v1301 = vpack.c.bf16 %v1077, %v1076
      %v1310 = vunpack.c.l.b16 %v1294
      %v1311 = vunpack.c.h.b16 %v1294
      %v1312 = vunpack.c.l.b16 %v1295
      %v1313 = vunpack.c.h.b16 %v1295
      %v1314 = vunpack.c.l.b16 %v1296
      %v1315 = vunpack.c.h.b16 %v1296
      %v1316 = vunpack.c.l.b16 %v1297
      %v1317 = vunpack.c.h.b16 %v1297
      %v1318 = vunpack.c.l.b16 %v1298
      %v1319 = vunpack.c.h.b16 %v1298
      %v1320 = vunpack.c.l.b16 %v1299
      %v1321 = vunpack.c.h.b16 %v1299
      %v1322 = vunpack.c.l.b16 %v1300
      %v1323 = vunpack.c.h.b16 %v1300
      %v1324 = vunpack.c.l.b16 %v1301
      %v1325 = vunpack.c.h.b16 %v1301
      %v1326 = vpack.c.b16 %v1310, %v1310
      %v1327 = vpack.c.b16 %v1311, %v1311
      %v1328 = vpack.c.b16 %v1312, %v1312
      %v1329 = vpack.c.b16 %v1313, %v1313
      %v1330 = vpack.c.b16 %v1314, %v1314
      %v1331 = vpack.c.b16 %v1315, %v1315
      %v1332 = vpack.c.b16 %v1316, %v1316
      %v1333 = vpack.c.b16 %v1317, %v1317
      %v1334 = vpack.c.b16 %v1318, %v1318
      %v1335 = vpack.c.b16 %v1319, %v1319
      %v1336 = vpack.c.b16 %v1320, %v1320
      %v1337 = vpack.c.b16 %v1321, %v1321
      %v1338 = vpack.c.b16 %v1322, %v1322
      %v1339 = vpack.c.b16 %v1323, %v1323
      %v1340 = vpack.c.b16 %v1324, %v1324
      %v1341 = vpack.c.b16 %v1325, %v1325
      %1358 = vst [vmem:[%s414] sm:$0xf] %v1326
      %1359 = vst [vmem:[%s414 + $0x4] sm:$0xf] %v1327
      %1360 = vst [vmem:[%s414 + $0x8] sm:$0xf] %v1328
      %1361 = vst [vmem:[%s414 + $0xc] sm:$0xf] %v1329
      %1362 = vst [vmem:[%s414 + $0x10] sm:$0xf] %v1330
      %1363 = vst [vmem:[%s414 + $0x14] sm:$0xf] %v1331
      %1364 = vst [vmem:[%s414 + $0x18] sm:$0xf] %v1332
      %1365 = vst [vmem:[%s414 + $0x1c] sm:$0xf] %v1333
      %1366 = vst [vmem:[%s414 + $0x20] sm:$0xf] %v1334
      %1367 = vst [vmem:[%s414 + $0x24] sm:$0xf] %v1335
      %1368 = vst [vmem:[%s414 + $0x28] sm:$0xf] %v1336
      %1369 = vst [vmem:[%s414 + $0x2c] sm:$0xf] %v1337
      %1370 = vst [vmem:[%s414 + $0x30] sm:$0xf] %v1338
      %1371 = vst [vmem:[%s414 + $0x34] sm:$0xf] %v1339
      %1372 = vst [vmem:[%s414 + $0x38] sm:$0xf] %v1340
      %1373 = vst [vmem:[%s414 + $0x3c] sm:$0xf] %v1341
      %1374 = vst [vmem:[%s422] sm:$0xff] %v1213
      %s1375 = smul.u32 16, %s25
      %p1376 = scmp.lt.s32.totalorder %s24, 1
      %s1377 = scalar_select %p1376, %s24, 1
      %p1378 = scmp.lt.s32.totalorder %s1375, 15
      %s1379 = scalar_select %p1378, %s1375, 15
      %s1380 = smul.addr %s1377, 16
      %s1381 = sadd.s32 %s1379, %s1380
      %s1382 = smul.addr %s1381, 4
      %s1383 = scalar_lea.vmem %s6, %s1382
      %s1384 = smul.u32 16, %s25
      %p1385 = scmp.lt.s32.totalorder %s24, 1
      %s1386 = scalar_select %p1385, %s24, 1
      %p1387 = scmp.lt.s32.totalorder %s1384, 15
      %s1388 = scalar_select %p1387, %s1384, 15
      %s1389 = smul.addr %s1386, 16
      %s1390 = sadd.s32 %s1388, %s1389
      %s1391 = smul.addr %s1390, 4
      %s1392 = scalar_lea.vmem %s7, %s1391
      %p1393 = scmp.lt.s32.totalorder %s24, 1
      %s1394 = scalar_select %p1393, %s24, 1
      %p1395 = scmp.lt.s32.totalorder %s25, 0
      %s1396 = scalar_select %p1395, %s25, 0
      %s1397 = sadd.s32 %s1396, %s1394
      %s1398 = smul.addr %s1397, 8
      %s1399 = scalar_lea.vmem %s8, %s1398
      // Predicated region
      $region45: #{clfm_forward.8} parent=43 // pred_check
        %p1400 = pneg %p192
      $region46: #{clfm_forward.8} parent=43 // pred_check_branch
        %1402 = sbr.rel (%p1400) target = $region48
      $region47: #{clfm_forward.8} parent=43 // pred_region
        %s1403 = smul.u32 16, %s25
      $region48: #{clfm_forward.8} parent=43 // pred_fallthru
        _
      // Predicated region
      $region49: #{clfm_forward.8} parent=43 // pred_check
        %p1404 = pneg %p220
      $region50: #{clfm_forward.8} parent=43 // pred_check_branch
        %1406 = sbr.rel (%p1404) target = $region52
      $region51: #{clfm_forward.8} parent=43 // pred_region
        %s1407 = smul.u32 16, %s25
      $region52: #{clfm_forward.8} parent=43 // pred_fallthru
        _
      // Predicated region
      $region53: #{clfm_forward.8} parent=43 // pred_check
        %p1408 = pneg %p248
      $region54: #{clfm_forward.8} parent=43 // pred_check_branch
        %1410 = sbr.rel (%p1408) target = $region56
      $region55: #{clfm_forward.8} parent=43 // pred_region
        _
      $region56: #{clfm_forward.8} parent=43 // pred_fallthru
        _
    $region44: #{clfm_forward.8} parent=5 // pred_fallthru
      _
    %p1411 = scmp.le.s32.totalorder 2, %s15
    // Predicated region
    $region57: #{clfm_forward.8} parent=5 // pred_check
      %p1412 = pneg %p1411
    $region58: #{clfm_forward.8} parent=5 // pred_check_branch
      %1414 = sbr.rel (%p1412) target = $region60
    $region59: #{clfm_forward.8} parent=5 // pred_region
      %s1415 = ssub.s32 %s15, 2
      // Predicated region
      $region61: #{clfm_forward.8} parent=59 // pred_check
        %p1416 = pneg %p198
      $region62: #{clfm_forward.8} parent=59 // pred_check_branch
        %1418 = sbr.rel (%p1416) target = $region64
      $region63: #{clfm_forward.8} parent=59 // pred_region
        %s1419 = smul.u32 16, %s27
        %p1420 = scmp.lt.s32.totalorder %s26, 1
        %s1421 = scalar_select %p1420, %s26, 1
        %p1422 = scmp.lt.s32.totalorder %s1419, 15
        %s1423 = scalar_select %p1422, %s1419, 15
        %s1424 = smul.addr %s1421, 16
        %s1425 = sadd.s32 %s1423, %s1424
        %s1426 = smul.addr %s1425, 4
        %s1427 = scalar_lea.vmem %s6, %s1426
      $region64: #{clfm_forward.8} parent=59 // pred_fallthru
        _
      // Predicated region
      $region65: #{clfm_forward.8} parent=59 // pred_check
        %p1428 = pneg %p226
      $region66: #{clfm_forward.8} parent=59 // pred_check_branch
        %1430 = sbr.rel (%p1428) target = $region68
      $region67: #{clfm_forward.8} parent=59 // pred_region
        %s1431 = smul.u32 16, %s27
        %p1432 = scmp.lt.s32.totalorder %s26, 1
        %s1433 = scalar_select %p1432, %s26, 1
        %p1434 = scmp.lt.s32.totalorder %s1431, 15
        %s1435 = scalar_select %p1434, %s1431, 15
        %s1436 = smul.addr %s1433, 16
        %s1437 = sadd.s32 %s1435, %s1436
        %s1438 = smul.addr %s1437, 4
        %s1439 = scalar_lea.vmem %s7, %s1438
      $region68: #{clfm_forward.8} parent=59 // pred_fallthru
        _
      // Predicated region
      $region69: #{clfm_forward.8} parent=59 // pred_check
        %p1440 = pneg %p254
      $region70: #{clfm_forward.8} parent=59 // pred_check_branch
        %1442 = sbr.rel (%p1440) target = $region72
      $region71: #{clfm_forward.8} parent=59 // pred_region
        %p1443 = scmp.lt.s32.totalorder %s26, 1
        %s1444 = scalar_select %p1443, %s26, 1
        %p1445 = scmp.lt.s32.totalorder %s27, 0
        %s1446 = scalar_select %p1445, %s27, 0
        %s1447 = sadd.s32 %s1446, %s1444
        %s1448 = smul.addr %s1447, 8
        %s1449 = scalar_lea.vmem %s8, %s1448
      $region72: #{clfm_forward.8} parent=59 // pred_fallthru
        _
    $region60: #{clfm_forward.8} parent=5 // pred_fallthru
      _
  $region6: #{clfm_forward.8} parent=0 // loop_footer
    %s19 = sadd.s32 1, %s15
  $region7: #{clfm_forward.8} parent=0 // loop_footer_branch
    %14 = sbr.rel target = $region3
  $region8: #{clfm_forward.8} parent=0 // loop_exit
    _

// kernel: clfm_forward.9
$region0: #{clfm_forward.9}
  #allocation0 [shape = 'u32[]', space=smem, size = 0x4, offset = 0x4, fixed_abs, tag = 'smem constant byte address 0x4 - core index']
  #allocation1 [shape = 'u32[144,128]{1,0:T(1,128)}', space=vmem, size = 0x12000, scoped, tag = 'internal scratch']
  %s0 = inlined_call_operand.vmem [shape: bf16[2,128,128], index: 0, kind: input, shape index: {}]
  %s1 = inlined_call_operand.vmem [shape: bf16[2,128,128], index: 1, kind: input, shape index: {}]
  %s2 = inlined_call_operand.vmem [shape: f32[2,1,128], index: 2, kind: input, shape index: {}]
  %s3 = inlined_call_operand.vmem [shape: f32[2,1,128], index: 3, kind: input, shape index: {}]
  %s4 = inlined_call_operand.vmem [shape: f32[2,128,128], index: 4, kind: output, shape index: {}]
  %s5 = sld [smem:[#allocation0]]
  $region49: #{clfm_forward.9} parent=0
    _
  %s7 = ssub.s32 1, %s5
  %s8 = scalar_select 0, %s7, %s5
  loop: start=0, step=1, limit=4
  $region2: #{clfm_forward.9} parent=0 // loop_pre_header
    _
  $region3: #{clfm_forward.9} parent=0 // loop_header
    %s10 = sphi 0, %s14
    %p11 = scmp.ge.s32.totalorder %s10, 4
    %s17 = sphi 0, %s29
    %s18 = sphi 0, %s25
    %s19 = sphi 0, %s17
    %s20 = sphi 0, %s18
    %s21 = sphi 0, %s19
    %s22 = sphi 0, %s20
    %s34 = sphi 0, %s36
    %s37 = sphi 0, %s34
    %s38 = sphi 0, %s37
    %s54 = sphi 0, %s38
    %s62 = sphi 0, %s64
    %s65 = sphi 0, %s62
    %s66 = sphi 0, %s65
    %s82 = sphi 0, %s66
    %s88 = sphi 0, %s90
    %s91 = sphi 0, %s88
    %s92 = sphi 0, %s91
    %s108 = sphi 0, %s92
    %s114 = sphi 0, %s116
    %s117 = sphi 0, %s114
    %s118 = sphi 0, %s117
    %s134 = sphi 0, %s118
    %s142 = sphi 0, %s144
    %s145 = sphi 0, %s142
    %s146 = sphi 0, %s145
    %s162 = sphi 0, %s146
  $region4: #{clfm_forward.9} parent=0 // loop_header_branch
    %13 = sbr.rel (%p11) target = $region8
  $region5: #{clfm_forward.9} parent=0 // loop_body
    %s15 = ssub.s32 %s10, 1
    %s16 = ssub.s32 %s10, 2
    %s23 = sadd.s32 1, %s18
    %p24 = scmp.ge.s32.totalorder %s23, 1
    %s25 = scalar_select %p24, 0, %s23
    %s26 = sadd.s32 1, %s17
    %s27 = scalar_select %p24, %s26, %s17
    %p28 = scmp.ge.s32.totalorder %s27, 2
    %s29 = scalar_select %p28, 0, %s27
    %s30 = ssub.s32 %s17, %s29
    %s31 = ssub.s32 %s18, %s25
    %s32 = sor.u32 %s30, %s31
    %p33 = scmp.eq.s32.totalorder %s32, 0
    %s35 = sadd.s32 %s34, 1
    %s36 = scalar_select %p33, %s34, %s35
    %p39 = pneg %p33
    %p40 = scmp.eq.s32.totalorder %s10, 1
    %p41 = por %p39, %p40
    %p42 = scmp.ne.s32.totalorder %s34, %s37
    %p43 = scmp.eq.s32.totalorder %s10, 0
    %p44 = por %p42, %p43
    %p45 = scmp.ne.s32.totalorder %s34, %s37
    %p46 = scmp.eq.s32.totalorder %s15, 1
    %p47 = por %p45, %p46
    %p48 = scmp.ne.s32.totalorder %s37, %s38
    %p49 = scmp.eq.s32.totalorder %s15, 0
    %p50 = por %p48, %p49
    %p51 = scmp.ne.s32.totalorder %s37, %s38
    %p52 = scmp.eq.s32.totalorder %s16, 1
    %p53 = por %p51, %p52
    %p55 = scmp.ne.s32.totalorder %s38, %s54
    %p56 = scmp.eq.s32.totalorder %s16, 0
    %p57 = por %p55, %p56
    %s58 = ssub.s32 %s17, %s29
    %s59 = ssub.s32 %s18, %s25
    %s60 = sor.u32 %s58, %s59
    %p61 = scmp.eq.s32.totalorder %s60, 0
    %s63 = sadd.s32 %s62, 1
    %s64 = scalar_select %p61, %s62, %s63
    %p67 = pneg %p61
    %p68 = scmp.eq.s32.totalorder %s10, 1
    %p69 = por %p67, %p68
    %p70 = scmp.ne.s32.totalorder %s62, %s65
    %p71 = scmp.eq.s32.totalorder %s10, 0
    %p72 = por %p70, %p71
    %p73 = scmp.ne.s32.totalorder %s62, %s65
    %p74 = scmp.eq.s32.totalorder %s15, 1
    %p75 = por %p73, %p74
    %p76 = scmp.ne.s32.totalorder %s65, %s66
    %p77 = scmp.eq.s32.totalorder %s15, 0
    %p78 = por %p76, %p77
    %p79 = scmp.ne.s32.totalorder %s65, %s66
    %p80 = scmp.eq.s32.totalorder %s16, 1
    %p81 = por %p79, %p80
    %p83 = scmp.ne.s32.totalorder %s66, %s82
    %p84 = scmp.eq.s32.totalorder %s16, 0
    %p85 = por %p83, %p84
    %s86 = ssub.s32 %s17, %s29
    %p87 = scmp.eq.s32.totalorder %s86, 0
    %s89 = sadd.s32 %s88, 1
    %s90 = scalar_select %p87, %s88, %s89
    %p93 = pneg %p87
    %p94 = scmp.eq.s32.totalorder %s10, 1
    %p95 = por %p93, %p94
    %p96 = scmp.ne.s32.totalorder %s88, %s91
    %p97 = scmp.eq.s32.totalorder %s10, 0
    %p98 = por %p96, %p97
    %p99 = scmp.ne.s32.totalorder %s88, %s91
    %p100 = scmp.eq.s32.totalorder %s15, 1
    %p101 = por %p99, %p100
    %p102 = scmp.ne.s32.totalorder %s91, %s92
    %p103 = scmp.eq.s32.totalorder %s15, 0
    %p104 = por %p102, %p103
    %p105 = scmp.ne.s32.totalorder %s91, %s92
    %p106 = scmp.eq.s32.totalorder %s16, 1
    %p107 = por %p105, %p106
    %p109 = scmp.ne.s32.totalorder %s92, %s108
    %p110 = scmp.eq.s32.totalorder %s16, 0
    %p111 = por %p109, %p110
    %s112 = ssub.s32 %s17, %s29
    %p113 = scmp.eq.s32.totalorder %s112, 0
    %s115 = sadd.s32 %s114, 1
    %s116 = scalar_select %p113, %s114, %s115
    %p119 = pneg %p113
    %p120 = scmp.eq.s32.totalorder %s10, 1
    %p121 = por %p119, %p120
    %p122 = scmp.ne.s32.totalorder %s114, %s117
    %p123 = scmp.eq.s32.totalorder %s10, 0
    %p124 = por %p122, %p123
    %p125 = scmp.ne.s32.totalorder %s114, %s117
    %p126 = scmp.eq.s32.totalorder %s15, 1
    %p127 = por %p125, %p126
    %p128 = scmp.ne.s32.totalorder %s117, %s118
    %p129 = scmp.eq.s32.totalorder %s15, 0
    %p130 = por %p128, %p129
    %p131 = scmp.ne.s32.totalorder %s117, %s118
    %p132 = scmp.eq.s32.totalorder %s16, 1
    %p133 = por %p131, %p132
    %p135 = scmp.ne.s32.totalorder %s118, %s134
    %p136 = scmp.eq.s32.totalorder %s16, 0
    %p137 = por %p135, %p136
    %s138 = ssub.s32 %s17, %s29
    %s139 = ssub.s32 %s18, %s25
    %s140 = sor.u32 %s138, %s139
    %p141 = scmp.eq.s32.totalorder %s140, 0
    %s143 = sadd.s32 %s142, 1
    %s144 = scalar_select %p141, %s142, %s143
    %p147 = pneg %p141
    %p148 = scmp.eq.s32.totalorder %s10, 1
    %p149 = por %p147, %p148
    %p150 = scmp.ne.s32.totalorder %s142, %s145
    %p151 = scmp.eq.s32.totalorder %s10, 0
    %p152 = por %p150, %p151
    %p153 = scmp.ne.s32.totalorder %s142, %s145
    %p154 = scmp.eq.s32.totalorder %s15, 1
    %p155 = por %p153, %p154
    %p156 = scmp.ne.s32.totalorder %s145, %s146
    %p157 = scmp.eq.s32.totalorder %s15, 0
    %p158 = por %p156, %p157
    %p159 = scmp.ne.s32.totalorder %s145, %s146
    %p160 = scmp.eq.s32.totalorder %s16, 1
    %p161 = por %p159, %p160
    %p163 = scmp.ne.s32.totalorder %s146, %s162
    %p164 = scmp.eq.s32.totalorder %s16, 0
    %p165 = por %p163, %p164
    %p166 = scmp.le.s32.totalorder 1, %s10
    %p167 = scmp.lt.s32.totalorder %s10, 3
    %p168 = pnand %p166, %p167
    %p169 = pneg %p168
    // Predicated region
    $region9: #{clfm_forward.9} parent=5 // pred_check
      _
    $region10: #{clfm_forward.9} parent=5 // pred_check_branch
      %171 = sbr.rel (%p168) target = $region12
    $region11: #{clfm_forward.9} parent=5 // pred_region
      %s172 = ssub.s32 %s10, 1
    $region12: #{clfm_forward.9} parent=5 // pred_fallthru
      _
    %p173 = scmp.lt.s32.totalorder %s10, 2
    // Predicated region
    $region13: #{clfm_forward.9} parent=5 // pred_check
      %p174 = pneg %p173
    $region14: #{clfm_forward.9} parent=5 // pred_check_branch
      %176 = sbr.rel (%p174) target = $region16
    $region15: #{clfm_forward.9} parent=5 // pred_region
      // Predicated region
      $region17: #{clfm_forward.9} parent=15 // pred_check
        %p177 = pneg %p44
      $region18: #{clfm_forward.9} parent=15 // pred_check_branch
        %179 = sbr.rel (%p177) target = $region20
      $region19: #{clfm_forward.9} parent=15 // pred_region
        %s180 = smul.u32 16, %s18
        %p181 = scmp.lt.s32.totalorder %s17, 1
        %s182 = scalar_select %p181, %s17, 1
        %p183 = scmp.lt.s32.totalorder %s180, 15
        %s184 = scalar_select %p183, %s180, 15
        %s185 = smul.addr %s182, 16
        %s186 = sadd.s32 %s184, %s185
        %s187 = smul.addr %s186, 4
        %s188 = scalar_lea.vmem %s0, %s187
        %s189 = smul.u32 16, %s18
      $region20: #{clfm_forward.9} parent=15 // pred_fallthru
        _
      // Predicated region
      $region21: #{clfm_forward.9} parent=15 // pred_check
        %p190 = pneg %p72
      $region22: #{clfm_forward.9} parent=15 // pred_check_branch
        %192 = sbr.rel (%p190) target = $region24
      $region23: #{clfm_forward.9} parent=15 // pred_region
        %s193 = smul.u32 16, %s18
        %p194 = scmp.lt.s32.totalorder %s17, 1
        %s195 = scalar_select %p194, %s17, 1
        %p196 = scmp.lt.s32.totalorder %s193, 15
        %s197 = scalar_select %p196, %s193, 15
        %s198 = smul.addr %s195, 16
        %s199 = sadd.s32 %s197, %s198
        %s200 = smul.addr %s199, 4
        %s201 = scalar_lea.vmem %s1, %s200
        %s202 = smul.u32 16, %s18
      $region24: #{clfm_forward.9} parent=15 // pred_fallthru
        _
      // Predicated region
      $region25: #{clfm_forward.9} parent=15 // pred_check
        %p203 = pneg %p98
      $region26: #{clfm_forward.9} parent=15 // pred_check_branch
        %205 = sbr.rel (%p203) target = $region28
      $region27: #{clfm_forward.9} parent=15 // pred_region
        %p206 = scmp.lt.s32.totalorder %s17, 1
        %s207 = scalar_select %p206, %s17, 1
        %s208 = scalar_lea.vmem %s2, %s207
      $region28: #{clfm_forward.9} parent=15 // pred_fallthru
        _
      // Predicated region
      $region29: #{clfm_forward.9} parent=15 // pred_check
        %p209 = pneg %p124
      $region30: #{clfm_forward.9} parent=15 // pred_check_branch
        %211 = sbr.rel (%p209) target = $region32
      $region31: #{clfm_forward.9} parent=15 // pred_region
        %p212 = scmp.lt.s32.totalorder %s17, 1
        %s213 = scalar_select %p212, %s17, 1
        %s214 = scalar_lea.vmem %s3, %s213
      $region32: #{clfm_forward.9} parent=15 // pred_fallthru
        _
    $region16: #{clfm_forward.9} parent=5 // pred_fallthru
      _
    %p215 = scmp.le.s32.totalorder 1, %s10
    %p216 = scmp.lt.s32.totalorder %s10, 3
    %p217 = pnand %p215, %p216
    %p218 = pneg %p217
    // Predicated region
    $region33: #{clfm_forward.9} parent=5 // pred_check
      _
    $region34: #{clfm_forward.9} parent=5 // pred_check_branch
      %220 = sbr.rel (%p217) target = $region36
    $region35: #{clfm_forward.9} parent=5 // pred_region
      %s221 = ssub.s32 %s10, 1
      %s222 = smul.u32 16, %s20
      %p223 = scmp.lt.s32.totalorder %s19, 1
      %s224 = scalar_select %p223, %s19, 1
      %p225 = scmp.lt.s32.totalorder %s222, 15
      %s226 = scalar_select %p225, %s222, 15
      %s227 = smul.addr %s224, 16
      %s228 = sadd.s32 %s226, %s227
      %s229 = smul.addr %s228, 4
      %s230 = scalar_lea.vmem %s0, %s229
      %p231 = pneg %p50
      %p232 = pneg %p47
      %s233 = smul.u32 16, %s20
      %p234 = scmp.lt.s32.totalorder %s19, 1
      %s235 = scalar_select %p234, %s19, 1
      %p236 = scmp.lt.s32.totalorder %s233, 15
      %s237 = scalar_select %p236, %s233, 15
      %s238 = smul.addr %s235, 16
      %s239 = sadd.s32 %s237, %s238
      %s240 = smul.addr %s239, 4
      %s241 = scalar_lea.vmem %s1, %s240
      %p242 = pneg %p78
      %p243 = pneg %p75
      %p244 = scmp.lt.s32.totalorder %s19, 1
      %s245 = scalar_select %p244, %s19, 1
      %s246 = scalar_lea.vmem %s2, %s245
      %p247 = pneg %p104
      %p248 = pneg %p101
      %p249 = scmp.lt.s32.totalorder %s19, 1
      %s250 = scalar_select %p249, %s19, 1
      %s251 = scalar_lea.vmem %s3, %s250
      %p252 = pneg %p130
      %p253 = pneg %p127
      %p254 = pneg %p158
      %p255 = pneg %p155
      %p256 = scmp.lt.s32.totalorder %s19, 1
      %s257 = scalar_select %p256, %s19, 1
      %p258 = scmp.lt.s32.totalorder %s20, 0
      %s259 = scalar_select %p258, %s20, 0
      %s260 = smul.addr %s257, 16
      %s261 = sadd.s32 %s259, %s260
      %s262 = smul.addr %s261, 8
      %s263 = scalar_lea.vmem %s4, %s262
      %s264 = smul.u32 16, %s20
      %p265 = scmp.lt.s32.totalorder %s19, 1
      %s266 = scalar_select %p265, %s19, 1
      %p267 = scmp.lt.s32.totalorder %s264, 15
      %s268 = scalar_select %p267, %s264, 15
      %s269 = smul.addr %s266, 16
      %s270 = sadd.s32 %s268, %s269
      %s271 = smul.addr %s270, 4
      %s272 = scalar_lea.vmem %s0, %s271
      %s273 = smul.u32 16, %s20
      %s274 = smul.u32 16, %s20
      %p275 = scmp.lt.s32.totalorder %s19, 1
      %s276 = scalar_select %p275, %s19, 1
      %p277 = scmp.lt.s32.totalorder %s274, 15
      %s278 = scalar_select %p277, %s274, 15
      %s279 = smul.addr %s276, 16
      %s280 = sadd.s32 %s278, %s279
      %s281 = smul.addr %s280, 4
      %s282 = scalar_lea.vmem %s1, %s281
      %s283 = smul.u32 16, %s20
      %p284 = scmp.lt.s32.totalorder %s19, 1
      %s285 = scalar_select %p284, %s19, 1
      %s286 = scalar_lea.vmem %s2, %s285
      %p287 = scmp.lt.s32.totalorder %s19, 1
      %s288 = scalar_select %p287, %s19, 1
      %s289 = scalar_lea.vmem %s3, %s288
      %p290 = scmp.lt.s32.totalorder %s19, 1
      %s291 = scalar_select %p290, %s19, 1
      %p292 = scmp.lt.s32.totalorder %s20, 0
      %s293 = scalar_select %p292, %s20, 0
      %s294 = smul.addr %s291, 16
      %s295 = sadd.s32 %s293, %s294
      %s296 = smul.addr %s295, 8
      %s297 = scalar_lea.vmem %s4, %s296
      %v298 = vld [vmem:[%s286] sm:$0x1]
      %v299 = vld [vmem:[%s289] sm:$0x1]
      %v300 = vld [vmem:[%s272] sm:$0xf]
      %v301 = vld [vmem:[%s272 + $0x4] sm:$0xf]
      %v302 = vld [vmem:[%s272 + $0x8] sm:$0xf]
      %v303 = vld [vmem:[%s272 + $0xc] sm:$0xf]
      %v304 = vld [vmem:[%s272 + $0x10] sm:$0xf]
      %v305 = vld [vmem:[%s272 + $0x14] sm:$0xf]
      %v306 = vld [vmem:[%s272 + $0x18] sm:$0xf]
      %v307 = vld [vmem:[%s272 + $0x1c] sm:$0xf]
      %v308 = vld [vmem:[%s272 + $0x20] sm:$0xf]
      %v309 = vld [vmem:[%s272 + $0x24] sm:$0xf]
      %v310 = vld [vmem:[%s272 + $0x28] sm:$0xf]
      %v311 = vld [vmem:[%s272 + $0x2c] sm:$0xf]
      %v312 = vld [vmem:[%s272 + $0x30] sm:$0xf]
      %v313 = vld [vmem:[%s272 + $0x34] sm:$0xf]
      %v314 = vld [vmem:[%s272 + $0x38] sm:$0xf]
      %v315 = vld [vmem:[%s272 + $0x3c] sm:$0xf]
      %v316 = vunpack.c.l.bf16 %v300
      %v317 = vunpack.c.l.bf16 %v301
      %v318 = vunpack.c.l.bf16 %v302
      %v319 = vunpack.c.l.bf16 %v303
      %v320 = vunpack.c.l.bf16 %v304
      %v321 = vunpack.c.l.bf16 %v305
      %v322 = vunpack.c.l.bf16 %v306
      %v323 = vunpack.c.l.bf16 %v307
      %v324 = vunpack.c.l.bf16 %v308
      %v325 = vunpack.c.l.bf16 %v309
      %v326 = vunpack.c.l.bf16 %v310
      %v327 = vunpack.c.l.bf16 %v311
      %v328 = vunpack.c.l.bf16 %v312
      %v329 = vunpack.c.l.bf16 %v313
      %v330 = vunpack.c.l.bf16 %v314
      %v331 = vunpack.c.l.bf16 %v315
      %v333 = vlaneseq
      %v334 = vshrl.u32 %v333, 7
      %v335 = vsub.s32 0, %v334
      %v336 = vrot.slane %v298, %v335
      %v338 = vmul.f32 %v316, %v336
      %v339 = vmul.f32 %v317, %v336
      %v340 = vmul.f32 %v318, %v336
      %v341 = vmul.f32 %v319, %v336
      %v342 = vmul.f32 %v320, %v336
      %v343 = vmul.f32 %v321, %v336
      %v344 = vmul.f32 %v322, %v336
      %v345 = vmul.f32 %v323, %v336
      %v346 = vmul.f32 %v324, %v336
      %v347 = vmul.f32 %v325, %v336
      %v348 = vmul.f32 %v326, %v336
      %v349 = vmul.f32 %v327, %v336
      %v350 = vmul.f32 %v328, %v336
      %v351 = vmul.f32 %v329, %v336
      %v352 = vmul.f32 %v330, %v336
      %v353 = vmul.f32 %v331, %v336
      %v354 = vld [vmem:[%s282] sm:$0xf]
      %v355 = vld [vmem:[%s282 + $0x4] sm:$0xf]
      %v356 = vld [vmem:[%s282 + $0x8] sm:$0xf]
      %v357 = vld [vmem:[%s282 + $0xc] sm:$0xf]
      %v358 = vld [vmem:[%s282 + $0x10] sm:$0xf]
      %v359 = vld [vmem:[%s282 + $0x14] sm:$0xf]
      %v360 = vld [vmem:[%s282 + $0x18] sm:$0xf]
      %v361 = vld [vmem:[%s282 + $0x1c] sm:$0xf]
      %v362 = vld [vmem:[%s282 + $0x20] sm:$0xf]
      %v363 = vld [vmem:[%s282 + $0x24] sm:$0xf]
      %v364 = vld [vmem:[%s282 + $0x28] sm:$0xf]
      %v365 = vld [vmem:[%s282 + $0x2c] sm:$0xf]
      %v366 = vld [vmem:[%s282 + $0x30] sm:$0xf]
      %v367 = vld [vmem:[%s282 + $0x34] sm:$0xf]
      %v368 = vld [vmem:[%s282 + $0x38] sm:$0xf]
      %v369 = vld [vmem:[%s282 + $0x3c] sm:$0xf]
      %v370 = vunpack.c.l.bf16 %v354
      %v371 = vunpack.c.l.bf16 %v355
      %v372 = vunpack.c.l.bf16 %v356
      %v373 = vunpack.c.l.bf16 %v357
      %v374 = vunpack.c.l.bf16 %v358
      %v375 = vunpack.c.l.bf16 %v359
      %v376 = vunpack.c.l.bf16 %v360
      %v377 = vunpack.c.l.bf16 %v361
      %v378 = vunpack.c.l.bf16 %v362
      %v379 = vunpack.c.l.bf16 %v363
      %v380 = vunpack.c.l.bf16 %v364
      %v381 = vunpack.c.l.bf16 %v365
      %v382 = vunpack.c.l.bf16 %v366
      %v383 = vunpack.c.l.bf16 %v367
      %v384 = vunpack.c.l.bf16 %v368
      %v385 = vunpack.c.l.bf16 %v369
      %v387 = vlaneseq
      %v388 = vshrl.u32 %v387, 7
      %v389 = vsub.s32 0, %v388
      %v390 = vrot.slane %v299, %v389
      %v392 = vmul.f32 %v370, %v390
      %v393 = vmul.f32 %v371, %v390
      %v394 = vmul.f32 %v372, %v390
      %v395 = vmul.f32 %v373, %v390
      %v396 = vmul.f32 %v374, %v390
      %v397 = vmul.f32 %v375, %v390
      %v398 = vmul.f32 %v376, %v390
      %v399 = vmul.f32 %v377, %v390
      %v400 = vmul.f32 %v378, %v390
      %v401 = vmul.f32 %v379, %v390
      %v402 = vmul.f32 %v380, %v390
      %v403 = vmul.f32 %v381, %v390
      %v404 = vmul.f32 %v382, %v390
      %v405 = vmul.f32 %v383, %v390
      %v406 = vmul.f32 %v384, %v390
      %v407 = vmul.f32 %v385, %v390
      %v408 = vadd.f32 %v338, %v392
      %v409 = vadd.f32 %v339, %v393
      %v410 = vadd.f32 %v340, %v394
      %v411 = vadd.f32 %v341, %v395
      %v412 = vadd.f32 %v342, %v396
      %v413 = vadd.f32 %v343, %v397
      %v414 = vadd.f32 %v344, %v398
      %v415 = vadd.f32 %v345, %v399
      %v416 = vadd.f32 %v346, %v400
      %v417 = vadd.f32 %v347, %v401
      %v418 = vadd.f32 %v348, %v402
      %v419 = vadd.f32 %v349, %v403
      %v420 = vadd.f32 %v350, %v404
      %v421 = vadd.f32 %v351, %v405
      %v422 = vadd.f32 %v352, %v406
      %v423 = vadd.f32 %v353, %v407
      %424 = vxpose.xlu0.b32.start [1/16] %v408, 128
      %425 = vxpose.xlu0.b32.cont [2/16] %v409, 128
      %426 = vxpose.xlu0.b32.cont [3/16] %v410, 128
      %427 = vxpose.xlu0.b32.cont [4/16] %v411, 128
      %428 = vxpose.xlu0.b32.cont [5/16] %v412, 128
      %429 = vxpose.xlu0.b32.cont [6/16] %v413, 128
      %430 = vxpose.xlu0.b32.cont [7/16] %v414, 128
      %431 = vxpose.xlu0.b32.cont [8/16] %v415, 128
      %432 = vxpose.xlu0.b32.cont [9/16] %v416, 128
      %433 = vxpose.xlu0.b32.cont [10/16] %v417, 128
      %434 = vxpose.xlu0.b32.cont [11/16] %v418, 128
      %435 = vxpose.xlu0.b32.cont [12/16] %v419, 128
      %436 = vxpose.xlu0.b32.cont [13/16] %v420, 128
      %437 = vxpose.xlu0.b32.cont [14/16] %v421, 128
      %438 = vxpose.xlu0.b32.cont [15/16] %v422, 128
      %439 = vxpose.xlu0.b32.end [16/16] %v423, 128
      %v440 = vpop.trf.xlu0
      %v441 = vpop.trf.xlu0
      %v442 = vpop.trf.xlu0
      %v443 = vpop.trf.xlu0
      %v444 = vpop.trf.xlu0
      %v445 = vpop.trf.xlu0
      %v446 = vpop.trf.xlu0
      %v447 = vpop.trf.xlu0
      %v448 = vpop.trf.xlu0
      %v449 = vpop.trf.xlu0
      %v450 = vpop.trf.xlu0
      %v451 = vpop.trf.xlu0
      %v452 = vpop.trf.xlu0
      %v453 = vpop.trf.xlu0
      %v454 = vpop.trf.xlu0
      %v455 = vpop.trf.xlu0
      %456 = vst [vmem:[%s297] sm:$0xff] %v440
      %457 = vst [vmem:[%s297 + $0x8] sm:$0xff] %v441
      %458 = vst [vmem:[%s297 + $0x10] sm:$0xff] %v442
      %459 = vst [vmem:[%s297 + $0x18] sm:$0xff] %v443
      %460 = vst [vmem:[%s297 + $0x20] sm:$0xff] %v444
      %461 = vst [vmem:[%s297 + $0x28] sm:$0xff] %v445
      %462 = vst [vmem:[%s297 + $0x30] sm:$0xff] %v446
      %463 = vst [vmem:[%s297 + $0x38] sm:$0xff] %v447
      %464 = vst [vmem:[%s297 + $0x40] sm:$0xff] %v448
      %465 = vst [vmem:[%s297 + $0x48] sm:$0xff] %v449
      %466 = vst [vmem:[%s297 + $0x50] sm:$0xff] %v450
      %467 = vst [vmem:[%s297 + $0x58] sm:$0xff] %v451
      %468 = vst [vmem:[%s297 + $0x60] sm:$0xff] %v452
      %469 = vst [vmem:[%s297 + $0x68] sm:$0xff] %v453
      %470 = vst [vmem:[%s297 + $0x70] sm:$0xff] %v454
      %471 = vst [vmem:[%s297 + $0x78] sm:$0xff] %v455
      %p472 = scmp.lt.s32.totalorder %s19, 1
      %s473 = scalar_select %p472, %s19, 1
      %p474 = scmp.lt.s32.totalorder %s20, 0
      %s475 = scalar_select %p474, %s20, 0
      %s476 = smul.addr %s473, 16
      %s477 = sadd.s32 %s475, %s476
      %s478 = smul.addr %s477, 8
      %s479 = scalar_lea.vmem %s4, %s478
      // Predicated region
      $region37: #{clfm_forward.9} parent=35 // pred_check
        %p480 = pneg %p155
      $region38: #{clfm_forward.9} parent=35 // pred_check_branch
        %482 = sbr.rel (%p480) target = $region40
      $region39: #{clfm_forward.9} parent=35 // pred_region
        _
      $region40: #{clfm_forward.9} parent=35 // pred_fallthru
        _
    $region36: #{clfm_forward.9} parent=5 // pred_fallthru
      _
    %p483 = scmp.le.s32.totalorder 2, %s10
    // Predicated region
    $region41: #{clfm_forward.9} parent=5 // pred_check
      %p484 = pneg %p483
    $region42: #{clfm_forward.9} parent=5 // pred_check_branch
      %486 = sbr.rel (%p484) target = $region44
    $region43: #{clfm_forward.9} parent=5 // pred_region
      %s487 = ssub.s32 %s10, 2
      // Predicated region
      $region45: #{clfm_forward.9} parent=43 // pred_check
        %p488 = pneg %p161
      $region46: #{clfm_forward.9} parent=43 // pred_check_branch
        %490 = sbr.rel (%p488) target = $region48
      $region47: #{clfm_forward.9} parent=43 // pred_region
        %p491 = scmp.lt.s32.totalorder %s21, 1
        %s492 = scalar_select %p491, %s21, 1
        %p493 = scmp.lt.s32.totalorder %s22, 0
        %s494 = scalar_select %p493, %s22, 0
        %s495 = smul.addr %s492, 16
        %s496 = sadd.s32 %s494, %s495
        %s497 = smul.addr %s496, 8
        %s498 = scalar_lea.vmem %s4, %s497
      $region48: #{clfm_forward.9} parent=43 // pred_fallthru
        _
    $region44: #{clfm_forward.9} parent=5 // pred_fallthru
      _
  $region6: #{clfm_forward.9} parent=0 // loop_footer
    %s14 = sadd.s32 1, %s10
  $region7: #{clfm_forward.9} parent=0 // loop_footer_branch
    %9 = sbr.rel target = $region3
  $region8: #{clfm_forward.9} parent=0 // loop_exit
    _

// kernel: clfm_forward.5
$region0: #{clfm_forward.5}
  #allocation0 [shape = 'u32[]', space=smem, size = 0x4, offset = 0x4, fixed_abs, tag = 'smem constant byte address 0x4 - core index']
  #allocation1 [shape = 'u32[144,128]{1,0:T(1,128)}', space=vmem, size = 0x12000, scoped, tag = 'internal scratch']
  %s0 = inlined_call_operand.vmem [shape: f32[2,128], index: 0, kind: input, shape index: {}]
  %s1 = inlined_call_operand.vmem [shape: f32[2,16,2], index: 1, kind: input, shape index: {}]
  %s2 = inlined_call_operand.vmem [shape: s32[2,8,128], index: 2, kind: output, shape index: {}]
  %s3 = sld [smem:[#allocation0]]
  $region41: #{clfm_forward.5} parent=0
    _
  %s5 = ssub.s32 1, %s3
  %s6 = scalar_select 0, %s5, %s3
  loop: start=0, step=1, limit=4
  $region2: #{clfm_forward.5} parent=0 // loop_pre_header
    _
  $region3: #{clfm_forward.5} parent=0 // loop_header
    %s8 = sphi 0, %s12
    %p9 = scmp.ge.s32.totalorder %s8, 4
    %s15 = sphi 0, %s27
    %s16 = sphi 0, %s23
    %s17 = sphi 0, %s15
    %s18 = sphi 0, %s16
    %s19 = sphi 0, %s17
    %s20 = sphi 0, %s18
    %s30 = sphi 0, %s32
    %s33 = sphi 0, %s30
    %s34 = sphi 0, %s33
    %s50 = sphi 0, %s34
    %s56 = sphi 0, %s58
    %s59 = sphi 0, %s56
    %s60 = sphi 0, %s59
    %s76 = sphi 0, %s60
    %s84 = sphi 0, %s86
    %s87 = sphi 0, %s84
    %s88 = sphi 0, %s87
    %s104 = sphi 0, %s88
  $region4: #{clfm_forward.5} parent=0 // loop_header_branch
    %11 = sbr.rel (%p9) target = $region8
  $region5: #{clfm_forward.5} parent=0 // loop_body
    %s13 = ssub.s32 %s8, 1
    %s14 = ssub.s32 %s8, 2
    %s21 = sadd.s32 1, %s16
    %p22 = scmp.ge.s32.totalorder %s21, 1
    %s23 = scalar_select %p22, 0, %s21
    %s24 = sadd.s32 1, %s15
    %s25 = scalar_select %p22, %s24, %s15
    %p26 = scmp.ge.s32.totalorder %s25, 2
    %s27 = scalar_select %p26, 0, %s25
    %s28 = ssub.s32 %s16, %s23
    %p29 = scmp.eq.s32.totalorder %s28, 0
    %s31 = sadd.s32 %s30, 1
    %s32 = scalar_select %p29, %s30, %s31
    %p35 = pneg %p29
    %p36 = scmp.eq.s32.totalorder %s8, 1
    %p37 = por %p35, %p36
    %p38 = scmp.ne.s32.totalorder %s30, %s33
    %p39 = scmp.eq.s32.totalorder %s8, 0
    %p40 = por %p38, %p39
    %p41 = scmp.ne.s32.totalorder %s30, %s33
    %p42 = scmp.eq.s32.totalorder %s13, 1
    %p43 = por %p41, %p42
    %p44 = scmp.ne.s32.totalorder %s33, %s34
    %p45 = scmp.eq.s32.totalorder %s13, 0
    %p46 = por %p44, %p45
    %p47 = scmp.ne.s32.totalorder %s33, %s34
    %p48 = scmp.eq.s32.totalorder %s14, 1
    %p49 = por %p47, %p48
    %p51 = scmp.ne.s32.totalorder %s34, %s50
    %p52 = scmp.eq.s32.totalorder %s14, 0
    %p53 = por %p51, %p52
    %s54 = ssub.s32 %s15, %s27
    %p55 = scmp.eq.s32.totalorder %s54, 0
    %s57 = sadd.s32 %s56, 1
    %s58 = scalar_select %p55, %s56, %s57
    %p61 = pneg %p55
    %p62 = scmp.eq.s32.totalorder %s8, 1
    %p63 = por %p61, %p62
    %p64 = scmp.ne.s32.totalorder %s56, %s59
    %p65 = scmp.eq.s32.totalorder %s8, 0
    %p66 = por %p64, %p65
    %p67 = scmp.ne.s32.totalorder %s56, %s59
    %p68 = scmp.eq.s32.totalorder %s13, 1
    %p69 = por %p67, %p68
    %p70 = scmp.ne.s32.totalorder %s59, %s60
    %p71 = scmp.eq.s32.totalorder %s13, 0
    %p72 = por %p70, %p71
    %p73 = scmp.ne.s32.totalorder %s59, %s60
    %p74 = scmp.eq.s32.totalorder %s14, 1
    %p75 = por %p73, %p74
    %p77 = scmp.ne.s32.totalorder %s60, %s76
    %p78 = scmp.eq.s32.totalorder %s14, 0
    %p79 = por %p77, %p78
    %s80 = ssub.s32 %s15, %s27
    %s81 = ssub.s32 %s16, %s23
    %s82 = sor.u32 %s80, %s81
    %p83 = scmp.eq.s32.totalorder %s82, 0
    %s85 = sadd.s32 %s84, 1
    %s86 = scalar_select %p83, %s84, %s85
    %p89 = pneg %p83
    %p90 = scmp.eq.s32.totalorder %s8, 1
    %p91 = por %p89, %p90
    %p92 = scmp.ne.s32.totalorder %s84, %s87
    %p93 = scmp.eq.s32.totalorder %s8, 0
    %p94 = por %p92, %p93
    %p95 = scmp.ne.s32.totalorder %s84, %s87
    %p96 = scmp.eq.s32.totalorder %s13, 1
    %p97 = por %p95, %p96
    %p98 = scmp.ne.s32.totalorder %s87, %s88
    %p99 = scmp.eq.s32.totalorder %s13, 0
    %p100 = por %p98, %p99
    %p101 = scmp.ne.s32.totalorder %s87, %s88
    %p102 = scmp.eq.s32.totalorder %s14, 1
    %p103 = por %p101, %p102
    %p105 = scmp.ne.s32.totalorder %s88, %s104
    %p106 = scmp.eq.s32.totalorder %s14, 0
    %p107 = por %p105, %p106
    %p108 = scmp.le.s32.totalorder 1, %s8
    %p109 = scmp.lt.s32.totalorder %s8, 3
    %p110 = pnand %p108, %p109
    %p111 = pneg %p110
    // Predicated region
    $region9: #{clfm_forward.5} parent=5 // pred_check
      _
    $region10: #{clfm_forward.5} parent=5 // pred_check_branch
      %113 = sbr.rel (%p110) target = $region12
    $region11: #{clfm_forward.5} parent=5 // pred_region
      %s114 = ssub.s32 %s8, 1
      // Predicated region
      $region13: #{clfm_forward.5} parent=11 // pred_check
        %p115 = pneg %p46
      $region14: #{clfm_forward.5} parent=11 // pred_check_branch
        %117 = sbr.rel (%p115) target = $region16
      $region15: #{clfm_forward.5} parent=11 // pred_region
        %p118 = scmp.lt.s32.totalorder %s18, 0
        %s119 = scalar_select %p118, %s18, 0
        %s120 = smul.addr %s119, 2
        %s121 = scalar_lea.vmem %s0, %s120
      $region16: #{clfm_forward.5} parent=11 // pred_fallthru
        _
    $region12: #{clfm_forward.5} parent=5 // pred_fallthru
      _
    %p122 = scmp.lt.s32.totalorder %s8, 2
    // Predicated region
    $region17: #{clfm_forward.5} parent=5 // pred_check
      %p123 = pneg %p122
    $region18: #{clfm_forward.5} parent=5 // pred_check_branch
      %125 = sbr.rel (%p123) target = $region20
    $region19: #{clfm_forward.5} parent=5 // pred_region
      // Predicated region
      $region21: #{clfm_forward.5} parent=19 // pred_check
        %p126 = pneg %p66
      $region22: #{clfm_forward.5} parent=19 // pred_check_branch
        %128 = sbr.rel (%p126) target = $region24
      $region23: #{clfm_forward.5} parent=19 // pred_region
        %p129 = scmp.lt.s32.totalorder %s15, 1
        %s130 = scalar_select %p129, %s15, 1
        %s131 = smul.addr %s130, 2
        %s132 = smul.addr %s131, 8
        %s133 = scalar_lea.vmem %s1, %s132
      $region24: #{clfm_forward.5} parent=19 // pred_fallthru
        _
    $region20: #{clfm_forward.5} parent=5 // pred_fallthru
      _
    %p134 = scmp.le.s32.totalorder 1, %s8
    %p135 = scmp.lt.s32.totalorder %s8, 3
    %p136 = pnand %p134, %p135
    %p137 = pneg %p136
    // Predicated region
    $region25: #{clfm_forward.5} parent=5 // pred_check
      _
    $region26: #{clfm_forward.5} parent=5 // pred_check_branch
      %139 = sbr.rel (%p136) target = $region28
    $region27: #{clfm_forward.5} parent=5 // pred_region
      %s140 = ssub.s32 %s8, 1
      %p141 = scmp.lt.s32.totalorder %s18, 0
      %s142 = scalar_select %p141, %s18, 0
      %s143 = smul.addr %s142, 2
      %s144 = scalar_lea.vmem %s0, %s143
      %p145 = pneg %p46
      %p146 = pneg %p43
      %p147 = scmp.lt.s32.totalorder %s17, 1
      %s148 = scalar_select %p147, %s17, 1
      %s149 = smul.addr %s148, 2
      %s150 = smul.addr %s149, 8
      %s151 = scalar_lea.vmem %s1, %s150
      %p152 = pneg %p72
      %p153 = pneg %p69
      %p154 = pneg %p100
      %p155 = pneg %p97
      %p156 = scmp.lt.s32.totalorder %s17, 1
      %s157 = scalar_select %p156, %s17, 1
      %p158 = scmp.lt.s32.totalorder %s18, 0
      %s159 = scalar_select %p158, %s18, 0
      %s160 = sadd.s32 %s159, %s157
      %s161 = smul.addr %s160, 8
      %s162 = scalar_lea.vmem %s2, %s161
      %p163 = scmp.lt.s32.totalorder %s18, 0
      %s164 = scalar_select %p163, %s18, 0
      %s165 = smul.addr %s164, 2
      %s166 = scalar_lea.vmem %s0, %s165
      %p167 = scmp.lt.s32.totalorder %s17, 1
      %s168 = scalar_select %p167, %s17, 1
      %s169 = smul.addr %s168, 2
      %s170 = smul.addr %s169, 8
      %s171 = scalar_lea.vmem %s1, %s170
      %p172 = scmp.lt.s32.totalorder %s17, 1
      %s173 = scalar_select %p172, %s17, 1
      %p174 = scmp.lt.s32.totalorder %s18, 0
      %s175 = scalar_select %p174, %s18, 0
      %s176 = sadd.s32 %s175, %s173
      %s177 = smul.addr %s176, 8
      %s178 = scalar_lea.vmem %s2, %s177
      %v179 = vld [vmem:[%s166] sm:$0x1]
      %v180 = vld [vmem:[%s166 + $0x1] sm:$0x1]
      %v181 = vld [vmem:[%s171] sm:$0xff]
      %v182 = vlaneseq
      %v183 = vshrl.u32 %v182, 7
      %v184 = vsub.s32 0, %v183
      %v185 = vrot.slane %v179, %v184
      %187 = vset.pattern.permute.xlu0 0
      %188 = vperm.xlu0 %187, %v181
      %v189 = vpop.permute.xlu0 %188
      %v191 = vsub.f32 %v185, %v189
      %v192 = vlaneseq
      %v193 = vshrl.u32 %v192, 7
      %v194 = vsub.s32 0, %v193
      %v195 = vrot.slane %v180, %v194
      %196 = vset.pattern.permute.xlu0 1
      %197 = vperm.xlu0 %196, %v181
      %v198 = vpop.permute.xlu0 %197
      %v200 = vsub.f32 %v195, %v198
      %v201 = vmul.f32 %v191, %v191
      %v202 = vmul.f32 %v200, %v200
      %v203 = vadd.f32 %v201, %v202
      %v204 = vrot.slane %v203, 4
      %v205 = vmin.f32 %v203, %v204
      %v206 = vrot.slane %v205, 2
      %v207 = vmin.f32 %v205, %v206
      %v208 = vrot.slane %v207, 1
      %v209 = vmin.f32 %v207, %v208
      %v210 = vlaneseq
      %v211 = vshrl.u32 %v210, 7
      %vm212 = vcmp.le.f32.partialorder %v203, %v209
      %v213 = vsel %vm212, %v211, 1073741824
      %v214 = vrot.slane %v213, 4
      %vm215 = vcmp.lt.s32.totalorder %v213, %v214
      %v216 = vsel %vm215, %v213, %v214
      %v217 = vrot.slane %v216, 2
      %vm218 = vcmp.lt.s32.totalorder %v216, %v217
      %v219 = vsel %vm218, %v216, %v217
      %v220 = vrot.slane %v219, 1
      %vm221 = vcmp.lt.s32.totalorder %v219, %v220
      %v222 = vsel %vm221, %v219, %v220
      %vm223 = vcmp.lt.f32.partialorder %v209, inf
      %v224 = vsel %vm223, %v209, inf
      %v225 = vsel %vm223, %v222, 0
      %s226 = scalar_lea.vmem %s171, 8
      %v227 = vld [vmem:[%s226] sm:$0xff]
      %229 = vset.pattern.permute.xlu0 0
      %230 = vperm.xlu0 %229, %v227
      %v231 = vpop.permute.xlu0 %230
      %v233 = vsub.f32 %v185, %v231
      %234 = vset.pattern.permute.xlu0 1
      %235 = vperm.xlu0 %234, %v227
      %v236 = vpop.permute.xlu0 %235
      %v238 = vsub.f32 %v195, %v236
      %v239 = vmul.f32 %v233, %v233
      %v240 = vmul.f32 %v238, %v238
      %v241 = vadd.f32 %v239, %v240
      %v242 = vrot.slane %v241, 4
      %v243 = vmin.f32 %v241, %v242
      %v244 = vrot.slane %v243, 2
      %v245 = vmin.f32 %v243, %v244
      %v246 = vrot.slane %v245, 1
      %v247 = vmin.f32 %v245, %v246
      %v248 = vadd.s32 %v211, 8
      %vm249 = vcmp.le.f32.partialorder %v241, %v247
      %v250 = vsel %vm249, %v248, 1073741824
      %v251 = vrot.slane %v250, 4
      %vm252 = vcmp.lt.s32.totalorder %v250, %v251
      %v253 = vsel %vm252, %v250, %v251
      %v254 = vrot.slane %v253, 2
      %vm255 = vcmp.lt.s32.totalorder %v253, %v254
      %v256 = vsel %vm255, %v253, %v254
      %v257 = vrot.slane %v256, 1
      %vm258 = vcmp.lt.s32.totalorder %v256, %v257
      %v259 = vsel %vm258, %v256, %v257
      %vm260 = vcmp.lt.f32.partialorder %v247, %v224
      %v261 = vsel %vm260, %v259, %v225
      %262 = vst [vmem:[%s178] sm:$0xff] %v261
      %p263 = scmp.lt.s32.totalorder %s17, 1
      %s264 = scalar_select %p263, %s17, 1
      %p265 = scmp.lt.s32.totalorder %s18, 0
      %s266 = scalar_select %p265, %s18, 0
      %s267 = sadd.s32 %s266, %s264
      %s268 = smul.addr %s267, 8
      %s269 = scalar_lea.vmem %s2, %s268
      // Predicated region
      $region29: #{clfm_forward.5} parent=27 // pred_check
        %p270 = pneg %p97
      $region30: #{clfm_forward.5} parent=27 // pred_check_branch
        %272 = sbr.rel (%p270) target = $region32
      $region31: #{clfm_forward.5} parent=27 // pred_region
        _
      $region32: #{clfm_forward.5} parent=27 // pred_fallthru
        _
    $region28: #{clfm_forward.5} parent=5 // pred_fallthru
      _
    %p273 = scmp.le.s32.totalorder 2, %s8
    // Predicated region
    $region33: #{clfm_forward.5} parent=5 // pred_check
      %p274 = pneg %p273
    $region34: #{clfm_forward.5} parent=5 // pred_check_branch
      %276 = sbr.rel (%p274) target = $region36
    $region35: #{clfm_forward.5} parent=5 // pred_region
      %s277 = ssub.s32 %s8, 2
      // Predicated region
      $region37: #{clfm_forward.5} parent=35 // pred_check
        %p278 = pneg %p103
      $region38: #{clfm_forward.5} parent=35 // pred_check_branch
        %280 = sbr.rel (%p278) target = $region40
      $region39: #{clfm_forward.5} parent=35 // pred_region
        %p281 = scmp.lt.s32.totalorder %s19, 1
        %s282 = scalar_select %p281, %s19, 1
        %p283 = scmp.lt.s32.totalorder %s20, 0
        %s284 = scalar_select %p283, %s20, 0
        %s285 = sadd.s32 %s284, %s282
        %s286 = smul.addr %s285, 8
        %s287 = scalar_lea.vmem %s2, %s286
      $region40: #{clfm_forward.5} parent=35 // pred_fallthru
        _
    $region36: #{clfm_forward.5} parent=5 // pred_fallthru
      _
  $region6: #{clfm_forward.5} parent=0 // loop_footer
    %s12 = sadd.s32 1, %s8
  $region7: #{clfm_forward.5} parent=0 // loop_footer_branch
    %7 = sbr.rel target = $region3
  $region8: #{clfm_forward.5} parent=0 // loop_exit
    _

// kernel: clfm_forward.6
$region0: #{clfm_forward.6}
  #allocation0 [shape = 'u32[]', space=smem, size = 0x4, offset = 0x4, fixed_abs, tag = 'smem constant byte address 0x4 - core index']
  #allocation1 [shape = 'u32[144,128]{1,0:T(1,128)}', space=vmem, size = 0x12000, scoped, tag = 'internal scratch']
  %s0 = inlined_call_operand.vmem [shape: f32[128,2], index: 0, kind: input, shape index: {}]
  %s1 = inlined_call_operand.vmem [shape: bf16[2,128,8], index: 1, kind: input, shape index: {}]
  %s2 = inlined_call_operand.vmem [shape: f32[2,128,2], index: 2, kind: input, shape index: {}]
  %s3 = inlined_call_operand.vmem [shape: bf16[2,128,8], index: 3, kind: input, shape index: {}]
  %s4 = inlined_call_operand.vmem [shape: f32[8,128], index: 4, kind: input, shape index: {}]
  %s5 = inlined_call_operand.vmem [shape: bf16[8,8], index: 5, kind: input, shape index: {}]
  %s6 = inlined_call_operand.vmem [shape: bf16[8,128], index: 6, kind: input, shape index: {}]
  %s7 = inlined_call_operand.vmem [shape: bf16[8,128], index: 7, kind: input, shape index: {}]
  %s8 = inlined_call_operand.vmem [shape: bf16[2,128,128], index: 8, kind: output, shape index: {0}]
  %s9 = inlined_call_operand.vmem [shape: bf16[2,128,128], index: 9, kind: output, shape index: {1}]
  %s10 = inlined_call_operand.vmem [shape: f32[2,8,128], index: 10, kind: output, shape index: {2}]
  %11 = xla_tuple %s8, %s9, %s10
  %s12 = sld [smem:[#allocation0]]
  $region81: #{clfm_forward.6} parent=0
    _
  %s14 = ssub.s32 1, %s12
  %s15 = scalar_select 0, %s14, %s12
  loop: start=0, step=1, limit=4
  $region2: #{clfm_forward.6} parent=0 // loop_pre_header
    _
  $region3: #{clfm_forward.6} parent=0 // loop_header
    %s17 = sphi 0, %s21
    %p18 = scmp.ge.s32.totalorder %s17, 4
    %s24 = sphi 0, %s36
    %s25 = sphi 0, %s32
    %s26 = sphi 0, %s24
    %s27 = sphi 0, %s25
    %s28 = sphi 0, %s26
    %s29 = sphi 0, %s27
    %s39 = sphi 0, %s41
    %s42 = sphi 0, %s39
    %s43 = sphi 0, %s42
    %s59 = sphi 0, %s43
    %s67 = sphi 0, %s69
    %s70 = sphi 0, %s67
    %s71 = sphi 0, %s70
    %s87 = sphi 0, %s71
    %s95 = sphi 0, %s97
    %s98 = sphi 0, %s95
    %s99 = sphi 0, %s98
    %s115 = sphi 0, %s99
    %s123 = sphi 0, %s125
    %s126 = sphi 0, %s123
    %s127 = sphi 0, %s126
    %s143 = sphi 0, %s127
    %s147 = sphi 0, %s147
    %s149 = sphi 0, %s147
    %s150 = sphi 0, %s149
    %s164 = sphi 0, %s150
    %s168 = sphi 0, %s168
    %s170 = sphi 0, %s168
    %s171 = sphi 0, %s170
    %s185 = sphi 0, %s171
    %s189 = sphi 0, %s189
    %s191 = sphi 0, %s189
    %s192 = sphi 0, %s191
    %s206 = sphi 0, %s192
    %s210 = sphi 0, %s210
    %s212 = sphi 0, %s210
    %s213 = sphi 0, %s212
    %s227 = sphi 0, %s213
    %s235 = sphi 0, %s237
    %s238 = sphi 0, %s235
    %s239 = sphi 0, %s238
    %s255 = sphi 0, %s239
    %s263 = sphi 0, %s265
    %s266 = sphi 0, %s263
    %s267 = sphi 0, %s266
    %s283 = sphi 0, %s267
    %s291 = sphi 0, %s293
    %s294 = sphi 0, %s291
    %s295 = sphi 0, %s294
    %s311 = sphi 0, %s295
  $region4: #{clfm_forward.6} parent=0 // loop_header_branch
    %20 = sbr.rel (%p18) target = $region8
  $region5: #{clfm_forward.6} parent=0 // loop_body
    %s22 = ssub.s32 %s17, 1
    %s23 = ssub.s32 %s17, 2
    %s30 = sadd.s32 1, %s25
    %p31 = scmp.ge.s32.totalorder %s30, 1
    %s32 = scalar_select %p31, 0, %s30
    %s33 = sadd.s32 1, %s24
    %s34 = scalar_select %p31, %s33, %s24
    %p35 = scmp.ge.s32.totalorder %s34, 2
    %s36 = scalar_select %p35, 0, %s34
    %s37 = ssub.s32 %s25, %s32
    %p38 = scmp.eq.s32.totalorder %s37, 0
    %s40 = sadd.s32 %s39, 1
    %s41 = scalar_select %p38, %s39, %s40
    %p44 = pneg %p38
    %p45 = scmp.eq.s32.totalorder %s17, 1
    %p46 = por %p44, %p45
    %p47 = scmp.ne.s32.totalorder %s39, %s42
    %p48 = scmp.eq.s32.totalorder %s17, 0
    %p49 = por %p47, %p48
    %p50 = scmp.ne.s32.totalorder %s39, %s42
    %p51 = scmp.eq.s32.totalorder %s22, 1
    %p52 = por %p50, %p51
    %p53 = scmp.ne.s32.totalorder %s42, %s43
    %p54 = scmp.eq.s32.totalorder %s22, 0
    %p55 = por %p53, %p54
    %p56 = scmp.ne.s32.totalorder %s42, %s43
    %p57 = scmp.eq.s32.totalorder %s23, 1
    %p58 = por %p56, %p57
    %p60 = scmp.ne.s32.totalorder %s43, %s59
    %p61 = scmp.eq.s32.totalorder %s23, 0
    %p62 = por %p60, %p61
    %s63 = ssub.s32 %s24, %s36
    %s64 = ssub.s32 %s25, %s32
    %s65 = sor.u32 %s63, %s64
    %p66 = scmp.eq.s32.totalorder %s65, 0
    %s68 = sadd.s32 %s67, 1
    %s69 = scalar_select %p66, %s67, %s68
    %p72 = pneg %p66
    %p73 = scmp.eq.s32.totalorder %s17, 1
    %p74 = por %p72, %p73
    %p75 = scmp.ne.s32.totalorder %s67, %s70
    %p76 = scmp.eq.s32.totalorder %s17, 0
    %p77 = por %p75, %p76
    %p78 = scmp.ne.s32.totalorder %s67, %s70
    %p79 = scmp.eq.s32.totalorder %s22, 1
    %p80 = por %p78, %p79
    %p81 = scmp.ne.s32.totalorder %s70, %s71
    %p82 = scmp.eq.s32.totalorder %s22, 0
    %p83 = por %p81, %p82
    %p84 = scmp.ne.s32.totalorder %s70, %s71
    %p85 = scmp.eq.s32.totalorder %s23, 1
    %p86 = por %p84, %p85
    %p88 = scmp.ne.s32.totalorder %s71, %s87
    %p89 = scmp.eq.s32.totalorder %s23, 0
    %p90 = por %p88, %p89
    %s91 = ssub.s32 %s24, %s36
    %s92 = ssub.s32 %s25, %s32
    %s93 = sor.u32 %s91, %s92
    %p94 = scmp.eq.s32.totalorder %s93, 0
    %s96 = sadd.s32 %s95, 1
    %s97 = scalar_select %p94, %s95, %s96
    %p100 = pneg %p94
    %p101 = scmp.eq.s32.totalorder %s17, 1
    %p102 = por %p100, %p101
    %p103 = scmp.ne.s32.totalorder %s95, %s98
    %p104 = scmp.eq.s32.totalorder %s17, 0
    %p105 = por %p103, %p104
    %p106 = scmp.ne.s32.totalorder %s95, %s98
    %p107 = scmp.eq.s32.totalorder %s22, 1
    %p108 = por %p106, %p107
    %p109 = scmp.ne.s32.totalorder %s98, %s99
    %p110 = scmp.eq.s32.totalorder %s22, 0
    %p111 = por %p109, %p110
    %p112 = scmp.ne.s32.totalorder %s98, %s99
    %p113 = scmp.eq.s32.totalorder %s23, 1
    %p114 = por %p112, %p113
    %p116 = scmp.ne.s32.totalorder %s99, %s115
    %p117 = scmp.eq.s32.totalorder %s23, 0
    %p118 = por %p116, %p117
    %s119 = ssub.s32 %s24, %s36
    %s120 = ssub.s32 %s25, %s32
    %s121 = sor.u32 %s119, %s120
    %p122 = scmp.eq.s32.totalorder %s121, 0
    %s124 = sadd.s32 %s123, 1
    %s125 = scalar_select %p122, %s123, %s124
    %p128 = pneg %p122
    %p129 = scmp.eq.s32.totalorder %s17, 1
    %p130 = por %p128, %p129
    %p131 = scmp.ne.s32.totalorder %s123, %s126
    %p132 = scmp.eq.s32.totalorder %s17, 0
    %p133 = por %p131, %p132
    %p134 = scmp.ne.s32.totalorder %s123, %s126
    %p135 = scmp.eq.s32.totalorder %s22, 1
    %p136 = por %p134, %p135
    %p137 = scmp.ne.s32.totalorder %s126, %s127
    %p138 = scmp.eq.s32.totalorder %s22, 0
    %p139 = por %p137, %p138
    %p140 = scmp.ne.s32.totalorder %s126, %s127
    %p141 = scmp.eq.s32.totalorder %s23, 1
    %p142 = por %p140, %p141
    %p144 = scmp.ne.s32.totalorder %s127, %s143
    %p145 = scmp.eq.s32.totalorder %s23, 0
    %p146 = por %p144, %p145
    %s148 = sadd.s32 %s147, 1
    %p151 = scmp.eq.s32.totalorder %s17, 1
    %p152 = scmp.ne.s32.totalorder %s147, %s149
    %p153 = scmp.eq.s32.totalorder %s17, 0
    %p154 = por %p152, %p153
    %p155 = scmp.ne.s32.totalorder %s147, %s149
    %p156 = scmp.eq.s32.totalorder %s22, 1
    %p157 = por %p155, %p156
    %p158 = scmp.ne.s32.totalorder %s149, %s150
    %p159 = scmp.eq.s32.totalorder %s22, 0
    %p160 = por %p158, %p159
    %p161 = scmp.ne.s32.totalorder %s149, %s150
    %p162 = scmp.eq.s32.totalorder %s23, 1
    %p163 = por %p161, %p162
    %p165 = scmp.ne.s32.totalorder %s150, %s164
    %p166 = scmp.eq.s32.totalorder %s23, 0
    %p167 = por %p165, %p166
    %s169 = sadd.s32 %s168, 1
    %p172 = scmp.eq.s32.totalorder %s17, 1
    %p173 = scmp.ne.s32.totalorder %s168, %s170
    %p174 = scmp.eq.s32.totalorder %s17, 0
    %p175 = por %p173, %p174
    %p176 = scmp.ne.s32.totalorder %s168, %s170
    %p177 = scmp.eq.s32.totalorder %s22, 1
    %p178 = por %p176, %p177
    %p179 = scmp.ne.s32.totalorder %s170, %s171
    %p180 = scmp.eq.s32.totalorder %s22, 0
    %p181 = por %p179, %p180
    %p182 = scmp.ne.s32.totalorder %s170, %s171
    %p183 = scmp.eq.s32.totalorder %s23, 1
    %p184 = por %p182, %p183
    %p186 = scmp.ne.s32.totalorder %s171, %s185
    %p187 = scmp.eq.s32.totalorder %s23, 0
    %p188 = por %p186, %p187
    %s190 = sadd.s32 %s189, 1
    %p193 = scmp.eq.s32.totalorder %s17, 1
    %p194 = scmp.ne.s32.totalorder %s189, %s191
    %p195 = scmp.eq.s32.totalorder %s17, 0
    %p196 = por %p194, %p195
    %p197 = scmp.ne.s32.totalorder %s189, %s191
    %p198 = scmp.eq.s32.totalorder %s22, 1
    %p199 = por %p197, %p198
    %p200 = scmp.ne.s32.totalorder %s191, %s192
    %p201 = scmp.eq.s32.totalorder %s22, 0
    %p202 = por %p200, %p201
    %p203 = scmp.ne.s32.totalorder %s191, %s192
    %p204 = scmp.eq.s32.totalorder %s23, 1
    %p205 = por %p203, %p204
    %p207 = scmp.ne.s32.totalorder %s192, %s206
    %p208 = scmp.eq.s32.totalorder %s23, 0
    %p209 = por %p207, %p208
    %s211 = sadd.s32 %s210, 1
    %p214 = scmp.eq.s32.totalorder %s17, 1
    %p215 = scmp.ne.s32.totalorder %s210, %s212
    %p216 = scmp.eq.s32.totalorder %s17, 0
    %p217 = por %p215, %p216
    %p218 = scmp.ne.s32.totalorder %s210, %s212
    %p219 = scmp.eq.s32.totalorder %s22, 1
    %p220 = por %p218, %p219
    %p221 = scmp.ne.s32.totalorder %s212, %s213
    %p222 = scmp.eq.s32.totalorder %s22, 0
    %p223 = por %p221, %p222
    %p224 = scmp.ne.s32.totalorder %s212, %s213
    %p225 = scmp.eq.s32.totalorder %s23, 1
    %p226 = por %p224, %p225
    %p228 = scmp.ne.s32.totalorder %s213, %s227
    %p229 = scmp.eq.s32.totalorder %s23, 0
    %p230 = por %p228, %p229
    %s231 = ssub.s32 %s24, %s36
    %s232 = ssub.s32 %s25, %s32
    %s233 = sor.u32 %s231, %s232
    %p234 = scmp.eq.s32.totalorder %s233, 0
    %s236 = sadd.s32 %s235, 1
    %s237 = scalar_select %p234, %s235, %s236
    %p240 = pneg %p234
    %p241 = scmp.eq.s32.totalorder %s17, 1
    %p242 = por %p240, %p241
    %p243 = scmp.ne.s32.totalorder %s235, %s238
    %p244 = scmp.eq.s32.totalorder %s17, 0
    %p245 = por %p243, %p244
    %p246 = scmp.ne.s32.totalorder %s235, %s238
    %p247 = scmp.eq.s32.totalorder %s22, 1
    %p248 = por %p246, %p247
    %p249 = scmp.ne.s32.totalorder %s238, %s239
    %p250 = scmp.eq.s32.totalorder %s22, 0
    %p251 = por %p249, %p250
    %p252 = scmp.ne.s32.totalorder %s238, %s239
    %p253 = scmp.eq.s32.totalorder %s23, 1
    %p254 = por %p252, %p253
    %p256 = scmp.ne.s32.totalorder %s239, %s255
    %p257 = scmp.eq.s32.totalorder %s23, 0
    %p258 = por %p256, %p257
    %s259 = ssub.s32 %s24, %s36
    %s260 = ssub.s32 %s25, %s32
    %s261 = sor.u32 %s259, %s260
    %p262 = scmp.eq.s32.totalorder %s261, 0
    %s264 = sadd.s32 %s263, 1
    %s265 = scalar_select %p262, %s263, %s264
    %p268 = pneg %p262
    %p269 = scmp.eq.s32.totalorder %s17, 1
    %p270 = por %p268, %p269
    %p271 = scmp.ne.s32.totalorder %s263, %s266
    %p272 = scmp.eq.s32.totalorder %s17, 0
    %p273 = por %p271, %p272
    %p274 = scmp.ne.s32.totalorder %s263, %s266
    %p275 = scmp.eq.s32.totalorder %s22, 1
    %p276 = por %p274, %p275
    %p277 = scmp.ne.s32.totalorder %s266, %s267
    %p278 = scmp.eq.s32.totalorder %s22, 0
    %p279 = por %p277, %p278
    %p280 = scmp.ne.s32.totalorder %s266, %s267
    %p281 = scmp.eq.s32.totalorder %s23, 1
    %p282 = por %p280, %p281
    %p284 = scmp.ne.s32.totalorder %s267, %s283
    %p285 = scmp.eq.s32.totalorder %s23, 0
    %p286 = por %p284, %p285
    %s287 = ssub.s32 %s24, %s36
    %s288 = ssub.s32 %s25, %s32
    %s289 = sor.u32 %s287, %s288
    %p290 = scmp.eq.s32.totalorder %s289, 0
    %s292 = sadd.s32 %s291, 1
    %s293 = scalar_select %p290, %s291, %s292
    %p296 = pneg %p290
    %p297 = scmp.eq.s32.totalorder %s17, 1
    %p298 = por %p296, %p297
    %p299 = scmp.ne.s32.totalorder %s291, %s294
    %p300 = scmp.eq.s32.totalorder %s17, 0
    %p301 = por %p299, %p300
    %p302 = scmp.ne.s32.totalorder %s291, %s294
    %p303 = scmp.eq.s32.totalorder %s22, 1
    %p304 = por %p302, %p303
    %p305 = scmp.ne.s32.totalorder %s294, %s295
    %p306 = scmp.eq.s32.totalorder %s22, 0
    %p307 = por %p305, %p306
    %p308 = scmp.ne.s32.totalorder %s294, %s295
    %p309 = scmp.eq.s32.totalorder %s23, 1
    %p310 = por %p308, %p309
    %p312 = scmp.ne.s32.totalorder %s295, %s311
    %p313 = scmp.eq.s32.totalorder %s23, 0
    %p314 = por %p312, %p313
    %p315 = scmp.le.s32.totalorder 1, %s17
    %p316 = scmp.lt.s32.totalorder %s17, 3
    %p317 = pnand %p315, %p316
    %p318 = pneg %p317
    // Predicated region
    $region9: #{clfm_forward.6} parent=5 // pred_check
      _
    $region10: #{clfm_forward.6} parent=5 // pred_check_branch
      %320 = sbr.rel (%p317) target = $region12
    $region11: #{clfm_forward.6} parent=5 // pred_region
      %s321 = ssub.s32 %s17, 1
      // Predicated region
      $region13: #{clfm_forward.6} parent=11 // pred_check
        %p322 = pneg %p55
      $region14: #{clfm_forward.6} parent=11 // pred_check_branch
        %324 = sbr.rel (%p322) target = $region16
      $region15: #{clfm_forward.6} parent=11 // pred_region
        %s325 = smul.u32 16, %s27
        %p326 = scmp.lt.s32.totalorder %s325, 15
        %s327 = scalar_select %p326, %s325, 15
        %s328 = smul.addr %s327, 8
        %s329 = scalar_lea.vmem %s0, %s328
        %s330 = smul.u32 16, %s27
      $region16: #{clfm_forward.6} parent=11 // pred_fallthru
        _
      // Predicated region
      $region17: #{clfm_forward.6} parent=11 // pred_check
        %p331 = pneg %p160
      $region18: #{clfm_forward.6} parent=11 // pred_check_branch
        %333 = sbr.rel (%p331) target = $region20
      $region19: #{clfm_forward.6} parent=11 // pred_region
        _
      $region20: #{clfm_forward.6} parent=11 // pred_fallthru
        _
      // Predicated region
      $region21: #{clfm_forward.6} parent=11 // pred_check
        %p334 = pneg %p181
      $region22: #{clfm_forward.6} parent=11 // pred_check_branch
        %336 = sbr.rel (%p334) target = $region24
      $region23: #{clfm_forward.6} parent=11 // pred_region
        _
      $region24: #{clfm_forward.6} parent=11 // pred_fallthru
        _
      // Predicated region
      $region25: #{clfm_forward.6} parent=11 // pred_check
        %p337 = pneg %p202
      $region26: #{clfm_forward.6} parent=11 // pred_check_branch
        %339 = sbr.rel (%p337) target = $region28
      $region27: #{clfm_forward.6} parent=11 // pred_region
        _
      $region28: #{clfm_forward.6} parent=11 // pred_fallthru
        _
      // Predicated region
      $region29: #{clfm_forward.6} parent=11 // pred_check
        %p340 = pneg %p223
      $region30: #{clfm_forward.6} parent=11 // pred_check_branch
        %342 = sbr.rel (%p340) target = $region32
      $region31: #{clfm_forward.6} parent=11 // pred_region
        _
      $region32: #{clfm_forward.6} parent=11 // pred_fallthru
        _
    $region12: #{clfm_forward.6} parent=5 // pred_fallthru
      _
    %p343 = scmp.lt.s32.totalorder %s17, 2
    // Predicated region
    $region33: #{clfm_forward.6} parent=5 // pred_check
      %p344 = pneg %p343
    $region34: #{clfm_forward.6} parent=5 // pred_check_branch
      %346 = sbr.rel (%p344) target = $region36
    $region35: #{clfm_forward.6} parent=5 // pred_region
      // Predicated region
      $region37: #{clfm_forward.6} parent=35 // pred_check
        %p347 = pneg %p77
      $region38: #{clfm_forward.6} parent=35 // pred_check_branch
        %349 = sbr.rel (%p347) target = $region40
      $region39: #{clfm_forward.6} parent=35 // pred_region
        %s350 = smul.u32 16, %s25
        %p351 = scmp.lt.s32.totalorder %s24, 1
        %s352 = scalar_select %p351, %s24, 1
        %p353 = scmp.lt.s32.totalorder %s350, 15
        %s354 = scalar_select %p353, %s350, 15
        %s355 = smul.addr %s352, 16
        %s356 = sadd.s32 %s354, %s355
        %s357 = smul.addr %s356, 4
        %s358 = scalar_lea.vmem %s1, %s357
        %s359 = smul.u32 16, %s25
      $region40: #{clfm_forward.6} parent=35 // pred_fallthru
        _
      // Predicated region
      $region41: #{clfm_forward.6} parent=35 // pred_check
        %p360 = pneg %p105
      $region42: #{clfm_forward.6} parent=35 // pred_check_branch
        %362 = sbr.rel (%p360) target = $region44
      $region43: #{clfm_forward.6} parent=35 // pred_region
        %s363 = smul.u32 16, %s25
        %p364 = scmp.lt.s32.totalorder %s24, 1
        %s365 = scalar_select %p364, %s24, 1
        %p366 = scmp.lt.s32.totalorder %s363, 15
        %s367 = scalar_select %p366, %s363, 15
        %s368 = smul.addr %s365, 16
        %s369 = sadd.s32 %s367, %s368
        %s370 = smul.addr %s369, 8
        %s371 = scalar_lea.vmem %s2, %s370
        %s372 = smul.u32 16, %s25
      $region44: #{clfm_forward.6} parent=35 // pred_fallthru
        _
      // Predicated region
      $region45: #{clfm_forward.6} parent=35 // pred_check
        %p373 = pneg %p133
      $region46: #{clfm_forward.6} parent=35 // pred_check_branch
        %375 = sbr.rel (%p373) target = $region48
      $region47: #{clfm_forward.6} parent=35 // pred_region
        %s376 = smul.u32 16, %s25
        %p377 = scmp.lt.s32.totalorder %s24, 1
        %s378 = scalar_select %p377, %s24, 1
        %p379 = scmp.lt.s32.totalorder %s376, 15
        %s380 = scalar_select %p379, %s376, 15
        %s381 = smul.addr %s378, 16
        %s382 = sadd.s32 %s380, %s381
        %s383 = smul.addr %s382, 4
        %s384 = scalar_lea.vmem %s3, %s383
        %s385 = smul.u32 16, %s25
      $region48: #{clfm_forward.6} parent=35 // pred_fallthru
        _
    $region36: #{clfm_forward.6} parent=5 // pred_fallthru
      _
    %p386 = scmp.le.s32.totalorder 1, %s17
    %p387 = scmp.lt.s32.totalorder %s17, 3
    %p388 = pnand %p386, %p387
    %p389 = pneg %p388
    // Predicated region
    $region49: #{clfm_forward.6} parent=5 // pred_check
      _
    $region50: #{clfm_forward.6} parent=5 // pred_check_branch
      %391 = sbr.rel (%p388) target = $region52
    $region51: #{clfm_forward.6} parent=5 // pred_region
      %s392 = ssub.s32 %s17, 1
      %s393 = smul.u32 16, %s27
      %p394 = scmp.lt.s32.totalorder %s393, 15
      %s395 = scalar_select %p394, %s393, 15
      %s396 = smul.addr %s395, 8
      %s397 = scalar_lea.vmem %s0, %s396
      %p398 = pneg %p55
      %p399 = pneg %p52
      %s400 = smul.u32 16, %s27
      %p401 = scmp.lt.s32.totalorder %s26, 1
      %s402 = scalar_select %p401, %s26, 1
      %p403 = scmp.lt.s32.totalorder %s400, 15
      %s404 = scalar_select %p403, %s400, 15
      %s405 = smul.addr %s402, 16
      %s406 = sadd.s32 %s404, %s405
      %s407 = smul.addr %s406, 4
      %s408 = scalar_lea.vmem %s1, %s407
      %p409 = pneg %p83
      %p410 = pneg %p80
      %s411 = smul.u32 16, %s27
      %p412 = scmp.lt.s32.totalorder %s26, 1
      %s413 = scalar_select %p412, %s26, 1
      %p414 = scmp.lt.s32.totalorder %s411, 15
      %s415 = scalar_select %p414, %s411, 15
      %s416 = smul.addr %s413, 16
      %s417 = sadd.s32 %s415, %s416
      %s418 = smul.addr %s417, 8
      %s419 = scalar_lea.vmem %s2, %s418
      %p420 = pneg %p111
      %p421 = pneg %p108
      %s422 = smul.u32 16, %s27
      %p423 = scmp.lt.s32.totalorder %s26, 1
      %s424 = scalar_select %p423, %s26, 1
      %p425 = scmp.lt.s32.totalorder %s422, 15
      %s426 = scalar_select %p425, %s422, 15
      %s427 = smul.addr %s424, 16
      %s428 = sadd.s32 %s426, %s427
      %s429 = smul.addr %s428, 4
      %s430 = scalar_lea.vmem %s3, %s429
      %p431 = pneg %p139
      %p432 = pneg %p136
      %p433 = pneg %p160
      %p434 = pneg %p157
      %p435 = pneg %p181
      %p436 = pneg %p178
      %p437 = pneg %p202
      %p438 = pneg %p199
      %p439 = pneg %p223
      %p440 = pneg %p220
      %p441 = pneg %p251
      %p442 = pneg %p248
      %s443 = smul.u32 16, %s27
      %p444 = scmp.lt.s32.totalorder %s26, 1
      %s445 = scalar_select %p444, %s26, 1
      %p446 = scmp.lt.s32.totalorder %s443, 15
      %s447 = scalar_select %p446, %s443, 15
      %s448 = smul.addr %s445, 16
      %s449 = sadd.s32 %s447, %s448
      %s450 = smul.addr %s449, 4
      %s451 = scalar_lea.vmem %s8, %s450
      %p452 = pneg %p279
      %p453 = pneg %p276
      %s454 = smul.u32 16, %s27
      %p455 = scmp.lt.s32.totalorder %s26, 1
      %s456 = scalar_select %p455, %s26, 1
      %p457 = scmp.lt.s32.totalorder %s454, 15
      %s458 = scalar_select %p457, %s454, 15
      %s459 = smul.addr %s456, 16
      %s460 = sadd.s32 %s458, %s459
      %s461 = smul.addr %s460, 4
      %s462 = scalar_lea.vmem %s9, %s461
      %p463 = pneg %p307
      %p464 = pneg %p304
      %p465 = scmp.lt.s32.totalorder %s26, 1
      %s466 = scalar_select %p465, %s26, 1
      %p467 = scmp.lt.s32.totalorder %s27, 0
      %s468 = scalar_select %p467, %s27, 0
      %s469 = sadd.s32 %s468, %s466
      %s470 = smul.addr %s469, 8
      %s471 = scalar_lea.vmem %s10, %s470
      %s472 = smul.u32 16, %s27
      %p473 = scmp.lt.s32.totalorder %s472, 15
      %s474 = scalar_select %p473, %s472, 15
      %s475 = smul.addr %s474, 8
      %s476 = scalar_lea.vmem %s0, %s475
      %s477 = smul.u32 16, %s27
      %s478 = smul.u32 16, %s27
      %p479 = scmp.lt.s32.totalorder %s26, 1
      %s480 = scalar_select %p479, %s26, 1
      %p481 = scmp.lt.s32.totalorder %s478, 15
      %s482 = scalar_select %p481, %s478, 15
      %s483 = smul.addr %s480, 16
      %s484 = sadd.s32 %s482, %s483
      %s485 = smul.addr %s484, 4
      %s486 = scalar_lea.vmem %s1, %s485
      %s487 = smul.u32 16, %s27
      %s488 = smul.u32 16, %s27
      %p489 = scmp.lt.s32.totalorder %s26, 1
      %s490 = scalar_select %p489, %s26, 1
      %p491 = scmp.lt.s32.totalorder %s488, 15
      %s492 = scalar_select %p491, %s488, 15
      %s493 = smul.addr %s490, 16
      %s494 = sadd.s32 %s492, %s493
      %s495 = smul.addr %s494, 8
      %s496 = scalar_lea.vmem %s2, %s495
      %s497 = smul.u32 16, %s27
      %s498 = smul.u32 16, %s27
      %p499 = scmp.lt.s32.totalorder %s26, 1
      %s500 = scalar_select %p499, %s26, 1
      %p501 = scmp.lt.s32.totalorder %s498, 15
      %s502 = scalar_select %p501, %s498, 15
      %s503 = smul.addr %s500, 16
      %s504 = sadd.s32 %s502, %s503
      %s505 = smul.addr %s504, 4
      %s506 = scalar_lea.vmem %s3, %s505
      %s507 = smul.u32 16, %s27
      %s508 = smul.u32 16, %s27
      %p509 = scmp.lt.s32.totalorder %s26, 1
      %s510 = scalar_select %p509, %s26, 1
      %p511 = scmp.lt.s32.totalorder %s508, 15
      %s512 = scalar_select %p511, %s508, 15
      %s513 = smul.addr %s510, 16
      %s514 = sadd.s32 %s512, %s513
      %s515 = smul.addr %s514, 4
      %s516 = scalar_lea.vmem %s8, %s515
      %s517 = smul.u32 16, %s27
      %s518 = smul.u32 16, %s27
      %p519 = scmp.lt.s32.totalorder %s26, 1
      %s520 = scalar_select %p519, %s26, 1
      %p521 = scmp.lt.s32.totalorder %s518, 15
      %s522 = scalar_select %p521, %s518, 15
      %s523 = smul.addr %s520, 16
      %s524 = sadd.s32 %s522, %s523
      %s525 = smul.addr %s524, 4
      %s526 = scalar_lea.vmem %s9, %s525
      %s527 = smul.u32 16, %s27
      %p528 = scmp.lt.s32.totalorder %s26, 1
      %s529 = scalar_select %p528, %s26, 1
      %p530 = scmp.lt.s32.totalorder %s27, 0
      %s531 = scalar_select %p530, %s27, 0
      %s532 = sadd.s32 %s531, %s529
      %s533 = smul.addr %s532, 8
      %s534 = scalar_lea.vmem %s10, %s533
      %v536 = vld [vmem:[%s476] sm:$0xff]
      %v537 = vld [vmem:[%s476 + $0x8] sm:$0xff]
      %v538 = vld [vmem:[%s476 + $0x10] sm:$0xff]
      %v539 = vld [vmem:[%s476 + $0x18] sm:$0xff]
      %v540 = vld [vmem:[%s476 + $0x20] sm:$0xff]
      %v541 = vld [vmem:[%s476 + $0x28] sm:$0xff]
      %v542 = vld [vmem:[%s476 + $0x30] sm:$0xff]
      %v543 = vld [vmem:[%s476 + $0x38] sm:$0xff]
      %v544 = vld [vmem:[%s476 + $0x40] sm:$0xff]
      %v545 = vld [vmem:[%s476 + $0x48] sm:$0xff]
      %v546 = vld [vmem:[%s476 + $0x50] sm:$0xff]
      %v547 = vld [vmem:[%s476 + $0x58] sm:$0xff]
      %v548 = vld [vmem:[%s476 + $0x60] sm:$0xff]
      %v549 = vld [vmem:[%s476 + $0x68] sm:$0xff]
      %v550 = vld [vmem:[%s476 + $0x70] sm:$0xff]
      %v551 = vld [vmem:[%s476 + $0x78] sm:$0xff]
      %v552 = vld [vmem:[%s496] sm:$0xff]
      %v553 = vld [vmem:[%s496 + $0x8] sm:$0xff]
      %v554 = vld [vmem:[%s496 + $0x10] sm:$0xff]
      %v555 = vld [vmem:[%s496 + $0x18] sm:$0xff]
      %v556 = vld [vmem:[%s496 + $0x20] sm:$0xff]
      %v557 = vld [vmem:[%s496 + $0x28] sm:$0xff]
      %v558 = vld [vmem:[%s496 + $0x30] sm:$0xff]
      %v559 = vld [vmem:[%s496 + $0x38] sm:$0xff]
      %v560 = vld [vmem:[%s496 + $0x40] sm:$0xff]
      %v561 = vld [vmem:[%s496 + $0x48] sm:$0xff]
      %v562 = vld [vmem:[%s496 + $0x50] sm:$0xff]
      %v563 = vld [vmem:[%s496 + $0x58] sm:$0xff]
      %v564 = vld [vmem:[%s496 + $0x60] sm:$0xff]
      %v565 = vld [vmem:[%s496 + $0x68] sm:$0xff]
      %v566 = vld [vmem:[%s496 + $0x70] sm:$0xff]
      %v567 = vld [vmem:[%s496 + $0x78] sm:$0xff]
      %v568 = vld [vmem:[%s486] sm:$0xf]
      %v569 = vld [vmem:[%s486 + $0x4] sm:$0xf]
      %v570 = vld [vmem:[%s486 + $0x8] sm:$0xf]
      %v571 = vld [vmem:[%s486 + $0xc] sm:$0xf]
      %v572 = vld [vmem:[%s486 + $0x10] sm:$0xf]
      %v573 = vld [vmem:[%s486 + $0x14] sm:$0xf]
      %v574 = vld [vmem:[%s486 + $0x18] sm:$0xf]
      %v575 = vld [vmem:[%s486 + $0x1c] sm:$0xf]
      %v576 = vld [vmem:[%s486 + $0x20] sm:$0xf]
      %v577 = vld [vmem:[%s486 + $0x24] sm:$0xf]
      %v578 = vld [vmem:[%s486 + $0x28] sm:$0xf]
      %v579 = vld [vmem:[%s486 + $0x2c] sm:$0xf]
      %v580 = vld [vmem:[%s486 + $0x30] sm:$0xf]
      %v581 = vld [vmem:[%s486 + $0x34] sm:$0xf]
      %v582 = vld [vmem:[%s486 + $0x38] sm:$0xf]
      %v583 = vld [vmem:[%s486 + $0x3c] sm:$0xf]
      %v584 = vunpack.c.l.bf16 %v568
      %v585 = vunpack.c.l.bf16 %v569
      %v586 = vunpack.c.l.bf16 %v570
      %v587 = vunpack.c.l.bf16 %v571
      %v588 = vunpack.c.l.bf16 %v572
      %v589 = vunpack.c.l.bf16 %v573
      %v590 = vunpack.c.l.bf16 %v574
      %v591 = vunpack.c.l.bf16 %v575
      %v592 = vunpack.c.l.bf16 %v576
      %v593 = vunpack.c.l.bf16 %v577
      %v594 = vunpack.c.l.bf16 %v578
      %v595 = vunpack.c.l.bf16 %v579
      %v596 = vunpack.c.l.bf16 %v580
      %v597 = vunpack.c.l.bf16 %v581
      %v598 = vunpack.c.l.bf16 %v582
      %v599 = vunpack.c.l.bf16 %v583
      %v600 = vld [vmem:[%s4] sm:$0xff]
      %v601 = vsub.f32 %v552, %v536
      %v602 = vsub.f32 %v553, %v537
      %v603 = vsub.f32 %v554, %v538
      %v604 = vsub.f32 %v555, %v539
      %v605 = vsub.f32 %v556, %v540
      %v606 = vsub.f32 %v557, %v541
      %v607 = vsub.f32 %v558, %v542
      %v608 = vsub.f32 %v559, %v543
      %v609 = vsub.f32 %v560, %v544
      %v610 = vsub.f32 %v561, %v545
      %v611 = vsub.f32 %v562, %v546
      %v612 = vsub.f32 %v563, %v547
      %v613 = vsub.f32 %v564, %v548
      %v614 = vsub.f32 %v565, %v549
      %v615 = vsub.f32 %v566, %v550
      %v616 = vsub.f32 %v567, %v551
      %v617 = vmul.f32 %v601, %v601
      %v618 = vmul.f32 %v602, %v602
      %v619 = vmul.f32 %v603, %v603
      %v620 = vmul.f32 %v604, %v604
      %v621 = vmul.f32 %v605, %v605
      %v622 = vmul.f32 %v606, %v606
      %v623 = vmul.f32 %v607, %v607
      %v624 = vmul.f32 %v608, %v608
      %v625 = vmul.f32 %v609, %v609
      %v626 = vmul.f32 %v610, %v610
      %v627 = vmul.f32 %v611, %v611
      %v628 = vmul.f32 %v612, %v612
      %v629 = vmul.f32 %v613, %v613
      %v630 = vmul.f32 %v614, %v614
      %v631 = vmul.f32 %v615, %v615
      %v632 = vmul.f32 %v616, %v616
      %649 = vrot.lane.b32.xlu0 %v617, 127
      %v650 = vpop.permute.xlu0 %649
      %651 = vrot.lane.b32.xlu0 %v618, 127
      %v652 = vpop.permute.xlu0 %651
      %653 = vrot.lane.b32.xlu0 %v619, 127
      %v654 = vpop.permute.xlu0 %653
      %655 = vrot.lane.b32.xlu0 %v620, 127
      %v656 = vpop.permute.xlu0 %655
      %657 = vrot.lane.b32.xlu0 %v621, 127
      %v658 = vpop.permute.xlu0 %657
      %659 = vrot.lane.b32.xlu0 %v622, 127
      %v660 = vpop.permute.xlu0 %659
      %661 = vrot.lane.b32.xlu0 %v623, 127
      %v662 = vpop.permute.xlu0 %661
      %663 = vrot.lane.b32.xlu0 %v624, 127
      %v664 = vpop.permute.xlu0 %663
      %665 = vrot.lane.b32.xlu0 %v625, 127
      %v666 = vpop.permute.xlu0 %665
      %667 = vrot.lane.b32.xlu0 %v626, 127
      %v668 = vpop.permute.xlu0 %667
      %669 = vrot.lane.b32.xlu0 %v627, 127
      %v670 = vpop.permute.xlu0 %669
      %671 = vrot.lane.b32.xlu0 %v628, 127
      %v672 = vpop.permute.xlu0 %671
      %673 = vrot.lane.b32.xlu0 %v629, 127
      %v674 = vpop.permute.xlu0 %673
      %675 = vrot.lane.b32.xlu0 %v630, 127
      %v676 = vpop.permute.xlu0 %675
      %677 = vrot.lane.b32.xlu0 %v631, 127
      %v678 = vpop.permute.xlu0 %677
      %679 = vrot.lane.b32.xlu0 %v632, 127
      %v680 = vpop.permute.xlu0 %679
      %v697 = vadd.f32 %v617, %v650
      %v698 = vadd.f32 %v618, %v652
      %v699 = vadd.f32 %v619, %v654
      %v700 = vadd.f32 %v620, %v656
      %v701 = vadd.f32 %v621, %v658
      %v702 = vadd.f32 %v622, %v660
      %v703 = vadd.f32 %v623, %v662
      %v704 = vadd.f32 %v624, %v664
      %v705 = vadd.f32 %v625, %v666
      %v706 = vadd.f32 %v626, %v668
      %v707 = vadd.f32 %v627, %v670
      %v708 = vadd.f32 %v628, %v672
      %v709 = vadd.f32 %v629, %v674
      %v710 = vadd.f32 %v630, %v676
      %v711 = vadd.f32 %v631, %v678
      %v712 = vadd.f32 %v632, %v680
      %v713 = vrsqrt.pop %v697
      %v714 = vmul.f32 %v697, %v713
      %vm715 = vcmp.eq.f32.partialorder %v697, inf
      %v716 = vsel %vm715, %v697, %v714
      %vm717 = vcmp.eq.f32.partialorder %v697, 0.0
      %v718 = vand.u32 %v697, 2147483648
      %v719 = vsel %vm717, %v718, %v716
      %v720 = vrsqrt.pop %v698
      %v721 = vmul.f32 %v698, %v720
      %vm722 = vcmp.eq.f32.partialorder %v698, inf
      %v723 = vsel %vm722, %v698, %v721
      %vm724 = vcmp.eq.f32.partialorder %v698, 0.0
      %v725 = vand.u32 %v698, 2147483648
      %v726 = vsel %vm724, %v725, %v723
      %v727 = vrsqrt.pop %v699
      %v728 = vmul.f32 %v699, %v727
      %vm729 = vcmp.eq.f32.partialorder %v699, inf
      %v730 = vsel %vm729, %v699, %v728
      %vm731 = vcmp.eq.f32.partialorder %v699, 0.0
      %v732 = vand.u32 %v699, 2147483648
      %v733 = vsel %vm731, %v732, %v730
      %v734 = vrsqrt.pop %v700
      %v735 = vmul.f32 %v700, %v734
      %vm736 = vcmp.eq.f32.partialorder %v700, inf
      %v737 = vsel %vm736, %v700, %v735
      %vm738 = vcmp.eq.f32.partialorder %v700, 0.0
      %v739 = vand.u32 %v700, 2147483648
      %v740 = vsel %vm738, %v739, %v737
      %v741 = vrsqrt.pop %v701
      %v742 = vmul.f32 %v701, %v741
      %vm743 = vcmp.eq.f32.partialorder %v701, inf
      %v744 = vsel %vm743, %v701, %v742
      %vm745 = vcmp.eq.f32.partialorder %v701, 0.0
      %v746 = vand.u32 %v701, 2147483648
      %v747 = vsel %vm745, %v746, %v744
      %v748 = vrsqrt.pop %v702
      %v749 = vmul.f32 %v702, %v748
      %vm750 = vcmp.eq.f32.partialorder %v702, inf
      %v751 = vsel %vm750, %v702, %v749
      %vm752 = vcmp.eq.f32.partialorder %v702, 0.0
      %v753 = vand.u32 %v702, 2147483648
      %v754 = vsel %vm752, %v753, %v751
      %v755 = vrsqrt.pop %v703
      %v756 = vmul.f32 %v703, %v755
      %vm757 = vcmp.eq.f32.partialorder %v703, inf
      %v758 = vsel %vm757, %v703, %v756
      %vm759 = vcmp.eq.f32.partialorder %v703, 0.0
      %v760 = vand.u32 %v703, 2147483648
      %v761 = vsel %vm759, %v760, %v758
      %v762 = vrsqrt.pop %v704
      %v763 = vmul.f32 %v704, %v762
      %vm764 = vcmp.eq.f32.partialorder %v704, inf
      %v765 = vsel %vm764, %v704, %v763
      %vm766 = vcmp.eq.f32.partialorder %v704, 0.0
      %v767 = vand.u32 %v704, 2147483648
      %v768 = vsel %vm766, %v767, %v765
      %v769 = vrsqrt.pop %v705
      %v770 = vmul.f32 %v705, %v769
      %vm771 = vcmp.eq.f32.partialorder %v705, inf
      %v772 = vsel %vm771, %v705, %v770
      %vm773 = vcmp.eq.f32.partialorder %v705, 0.0
      %v774 = vand.u32 %v705, 2147483648
      %v775 = vsel %vm773, %v774, %v772
      %v776 = vrsqrt.pop %v706
      %v777 = vmul.f32 %v706, %v776
      %vm778 = vcmp.eq.f32.partialorder %v706, inf
      %v779 = vsel %vm778, %v706, %v777
      %vm780 = vcmp.eq.f32.partialorder %v706, 0.0
      %v781 = vand.u32 %v706, 2147483648
      %v782 = vsel %vm780, %v781, %v779
      %v783 = vrsqrt.pop %v707
      %v784 = vmul.f32 %v707, %v783
      %vm785 = vcmp.eq.f32.partialorder %v707, inf
      %v786 = vsel %vm785, %v707, %v784
      %vm787 = vcmp.eq.f32.partialorder %v707, 0.0
      %v788 = vand.u32 %v707, 2147483648
      %v789 = vsel %vm787, %v788, %v786
      %v790 = vrsqrt.pop %v708
      %v791 = vmul.f32 %v708, %v790
      %vm792 = vcmp.eq.f32.partialorder %v708, inf
      %v793 = vsel %vm792, %v708, %v791
      %vm794 = vcmp.eq.f32.partialorder %v708, 0.0
      %v795 = vand.u32 %v708, 2147483648
      %v796 = vsel %vm794, %v795, %v793
      %v797 = vrsqrt.pop %v709
      %v798 = vmul.f32 %v709, %v797
      %vm799 = vcmp.eq.f32.partialorder %v709, inf
      %v800 = vsel %vm799, %v709, %v798
      %vm801 = vcmp.eq.f32.partialorder %v709, 0.0
      %v802 = vand.u32 %v709, 2147483648
      %v803 = vsel %vm801, %v802, %v800
      %v804 = vrsqrt.pop %v710
      %v805 = vmul.f32 %v710, %v804
      %vm806 = vcmp.eq.f32.partialorder %v710, inf
      %v807 = vsel %vm806, %v710, %v805
      %vm808 = vcmp.eq.f32.partialorder %v710, 0.0
      %v809 = vand.u32 %v710, 2147483648
      %v810 = vsel %vm808, %v809, %v807
      %v811 = vrsqrt.pop %v711
      %v812 = vmul.f32 %v711, %v811
      %vm813 = vcmp.eq.f32.partialorder %v711, inf
      %v814 = vsel %vm813, %v711, %v812
      %vm815 = vcmp.eq.f32.partialorder %v711, 0.0
      %v816 = vand.u32 %v711, 2147483648
      %v817 = vsel %vm815, %v816, %v814
      %v818 = vrsqrt.pop %v712
      %v819 = vmul.f32 %v712, %v818
      %vm820 = vcmp.eq.f32.partialorder %v712, inf
      %v821 = vsel %vm820, %v712, %v819
      %vm822 = vcmp.eq.f32.partialorder %v712, 0.0
      %v823 = vand.u32 %v712, 2147483648
      %v824 = vsel %vm822, %v823, %v821
      %v825 = vlaneseq
      %v826 = vshrl.u32 %v825, 7
      %v827 = vsub.s32 0, %v826
      %v828 = vrot.slane %v600, %v827
      %v829 = vmul.f32 %v601, %v828
      %v830 = vmul.f32 %v602, %v828
      %v831 = vmul.f32 %v603, %v828
      %v832 = vmul.f32 %v604, %v828
      %v833 = vmul.f32 %v605, %v828
      %v834 = vmul.f32 %v606, %v828
      %v835 = vmul.f32 %v607, %v828
      %v836 = vmul.f32 %v608, %v828
      %v837 = vmul.f32 %v609, %v828
      %v838 = vmul.f32 %v610, %v828
      %v839 = vmul.f32 %v611, %v828
      %v840 = vmul.f32 %v612, %v828
      %v841 = vmul.f32 %v613, %v828
      %v842 = vmul.f32 %v614, %v828
      %v843 = vmul.f32 %v615, %v828
      %v844 = vmul.f32 %v616, %v828
      %861 = vrot.lane.b32.xlu0 %v829, 127
      %v862 = vpop.permute.xlu0 %861
      %863 = vrot.lane.b32.xlu0 %v830, 127
      %v864 = vpop.permute.xlu0 %863
      %865 = vrot.lane.b32.xlu0 %v831, 127
      %v866 = vpop.permute.xlu0 %865
      %867 = vrot.lane.b32.xlu0 %v832, 127
      %v868 = vpop.permute.xlu0 %867
      %869 = vrot.lane.b32.xlu0 %v833, 127
      %v870 = vpop.permute.xlu0 %869
      %871 = vrot.lane.b32.xlu0 %v834, 127
      %v872 = vpop.permute.xlu0 %871
      %873 = vrot.lane.b32.xlu0 %v835, 127
      %v874 = vpop.permute.xlu0 %873
      %875 = vrot.lane.b32.xlu0 %v836, 127
      %v876 = vpop.permute.xlu0 %875
      %877 = vrot.lane.b32.xlu0 %v837, 127
      %v878 = vpop.permute.xlu0 %877
      %879 = vrot.lane.b32.xlu0 %v838, 127
      %v880 = vpop.permute.xlu0 %879
      %881 = vrot.lane.b32.xlu0 %v839, 127
      %v882 = vpop.permute.xlu0 %881
      %883 = vrot.lane.b32.xlu0 %v840, 127
      %v884 = vpop.permute.xlu0 %883
      %885 = vrot.lane.b32.xlu0 %v841, 127
      %v886 = vpop.permute.xlu0 %885
      %887 = vrot.lane.b32.xlu0 %v842, 127
      %v888 = vpop.permute.xlu0 %887
      %889 = vrot.lane.b32.xlu0 %v843, 127
      %v890 = vpop.permute.xlu0 %889
      %891 = vrot.lane.b32.xlu0 %v844, 127
      %v892 = vpop.permute.xlu0 %891
      %v909 = vadd.f32 %v829, %v862
      %v910 = vadd.f32 %v830, %v864
      %v911 = vadd.f32 %v831, %v866
      %v912 = vadd.f32 %v832, %v868
      %v913 = vadd.f32 %v833, %v870
      %v914 = vadd.f32 %v834, %v872
      %v915 = vadd.f32 %v835, %v874
      %v916 = vadd.f32 %v836, %v876
      %v917 = vadd.f32 %v837, %v878
      %v918 = vadd.f32 %v838, %v880
      %v919 = vadd.f32 %v839, %v882
      %v920 = vadd.f32 %v840, %v884
      %v921 = vadd.f32 %v841, %v886
      %v922 = vadd.f32 %v842, %v888
      %v923 = vadd.f32 %v843, %v890
      %v924 = vadd.f32 %v844, %v892
      %926 = vrot.lane.b32.xlu0 %v828, 126
      %v927 = vpop.permute.xlu0 %926
      %v929 = vmul.f32 %v719, %v927
      %v930 = vmul.f32 %v726, %v927
      %v931 = vmul.f32 %v733, %v927
      %v932 = vmul.f32 %v740, %v927
      %v933 = vmul.f32 %v747, %v927
      %v934 = vmul.f32 %v754, %v927
      %v935 = vmul.f32 %v761, %v927
      %v936 = vmul.f32 %v768, %v927
      %v937 = vmul.f32 %v775, %v927
      %v938 = vmul.f32 %v782, %v927
      %v939 = vmul.f32 %v789, %v927
      %v940 = vmul.f32 %v796, %v927
      %v941 = vmul.f32 %v803, %v927
      %v942 = vmul.f32 %v810, %v927
      %v943 = vmul.f32 %v817, %v927
      %v944 = vmul.f32 %v824, %v927
      %v945 = vadd.f32 %v909, %v929
      %v946 = vadd.f32 %v910, %v930
      %v947 = vadd.f32 %v911, %v931
      %v948 = vadd.f32 %v912, %v932
      %v949 = vadd.f32 %v913, %v933
      %v950 = vadd.f32 %v914, %v934
      %v951 = vadd.f32 %v915, %v935
      %v952 = vadd.f32 %v916, %v936
      %v953 = vadd.f32 %v917, %v937
      %v954 = vadd.f32 %v918, %v938
      %v955 = vadd.f32 %v919, %v939
      %v956 = vadd.f32 %v920, %v940
      %v957 = vadd.f32 %v921, %v941
      %v958 = vadd.f32 %v922, %v942
      %v959 = vadd.f32 %v923, %v943
      %v960 = vadd.f32 %v924, %v944
      %961 = vrot.lane.b32.xlu0 %v828, 125
      %v962 = vpop.permute.xlu0 %961
      %v964 = vadd.f32 %v945, %v962
      %v965 = vadd.f32 %v946, %v962
      %v966 = vadd.f32 %v947, %v962
      %v967 = vadd.f32 %v948, %v962
      %v968 = vadd.f32 %v949, %v962
      %v969 = vadd.f32 %v950, %v962
      %v970 = vadd.f32 %v951, %v962
      %v971 = vadd.f32 %v952, %v962
      %v972 = vadd.f32 %v953, %v962
      %v973 = vadd.f32 %v954, %v962
      %v974 = vadd.f32 %v955, %v962
      %v975 = vadd.f32 %v956, %v962
      %v976 = vadd.f32 %v957, %v962
      %v977 = vadd.f32 %v958, %v962
      %v978 = vadd.f32 %v959, %v962
      %v979 = vadd.f32 %v960, %v962
      %vm980 = vcmp.ge.f32.partialorder %v964, 0.0
      %vm981 = vcmp.ge.f32.partialorder %v965, 0.0
      %vm982 = vcmp.ge.f32.partialorder %v966, 0.0
      %vm983 = vcmp.ge.f32.partialorder %v967, 0.0
      %vm984 = vcmp.ge.f32.partialorder %v968, 0.0
      %vm985 = vcmp.ge.f32.partialorder %v969, 0.0
      %vm986 = vcmp.ge.f32.partialorder %v970, 0.0
      %vm987 = vcmp.ge.f32.partialorder %v971, 0.0
      %vm988 = vcmp.ge.f32.partialorder %v972, 0.0
      %vm989 = vcmp.ge.f32.partialorder %v973, 0.0
      %vm990 = vcmp.ge.f32.partialorder %v974, 0.0
      %vm991 = vcmp.ge.f32.partialorder %v975, 0.0
      %vm992 = vcmp.ge.f32.partialorder %v976, 0.0
      %vm993 = vcmp.ge.f32.partialorder %v977, 0.0
      %vm994 = vcmp.ge.f32.partialorder %v978, 0.0
      %vm995 = vcmp.ge.f32.partialorder %v979, 0.0
      %v996 = vmul.f32 %v964, 0.1
      %v997 = vmul.f32 %v965, 0.1
      %v998 = vmul.f32 %v966, 0.1
      %v999 = vmul.f32 %v967, 0.1
      %v1000 = vmul.f32 %v968, 0.1
      %v1001 = vmul.f32 %v969, 0.1
      %v1002 = vmul.f32 %v970, 0.1
      %v1003 = vmul.f32 %v971, 0.1
      %v1004 = vmul.f32 %v972, 0.1
      %v1005 = vmul.f32 %v973, 0.1
      %v1006 = vmul.f32 %v974, 0.1
      %v1007 = vmul.f32 %v975, 0.1
      %v1008 = vmul.f32 %v976, 0.1
      %v1009 = vmul.f32 %v977, 0.1
      %v1010 = vmul.f32 %v978, 0.1
      %v1011 = vmul.f32 %v979, 0.1
      %v1012 = vsel %vm980, %v964, %v996
      %v1013 = vsel %vm981, %v965, %v997
      %v1014 = vsel %vm982, %v966, %v998
      %v1015 = vsel %vm983, %v967, %v999
      %v1016 = vsel %vm984, %v968, %v1000
      %v1017 = vsel %vm985, %v969, %v1001
      %v1018 = vsel %vm986, %v970, %v1002
      %v1019 = vsel %vm987, %v971, %v1003
      %v1020 = vsel %vm988, %v972, %v1004
      %v1021 = vsel %vm989, %v973, %v1005
      %v1022 = vsel %vm990, %v974, %v1006
      %v1023 = vsel %vm991, %v975, %v1007
      %v1024 = vsel %vm992, %v976, %v1008
      %v1025 = vsel %vm993, %v977, %v1009
      %v1026 = vsel %vm994, %v978, %v1010
      %v1027 = vsel %vm995, %v979, %v1011
      %1029 = vset.pattern.permute.xlu0 0
      %1030 = vperm.xlu0 %1029, %v1012
      %v1031 = vpop.permute.xlu0 %1030
      %1034 = vset.pattern.permute.xlu0 0
      %1035 = vperm.xlu0 %1034, %v1013
      %v1036 = vpop.permute.xlu0 %1035
      %1039 = vset.pattern.permute.xlu0 0
      %1040 = vperm.xlu0 %1039, %v1014
      %v1041 = vpop.permute.xlu0 %1040
      %1044 = vset.pattern.permute.xlu0 0
      %1045 = vperm.xlu0 %1044, %v1015
      %v1046 = vpop.permute.xlu0 %1045
      %1049 = vset.pattern.permute.xlu0 0
      %1050 = vperm.xlu0 %1049, %v1016
      %v1051 = vpop.permute.xlu0 %1050
      %1054 = vset.pattern.permute.xlu0 0
      %1055 = vperm.xlu0 %1054, %v1017
      %v1056 = vpop.permute.xlu0 %1055
      %1059 = vset.pattern.permute.xlu0 0
      %1060 = vperm.xlu0 %1059, %v1018
      %v1061 = vpop.permute.xlu0 %1060
      %1064 = vset.pattern.permute.xlu0 0
      %1065 = vperm.xlu0 %1064, %v1019
      %v1066 = vpop.permute.xlu0 %1065
      %1069 = vset.pattern.permute.xlu0 0
      %1070 = vperm.xlu0 %1069, %v1020
      %v1071 = vpop.permute.xlu0 %1070
      %1074 = vset.pattern.permute.xlu0 0
      %1075 = vperm.xlu0 %1074, %v1021
      %v1076 = vpop.permute.xlu0 %1075
      %1079 = vset.pattern.permute.xlu0 0
      %1080 = vperm.xlu0 %1079, %v1022
      %v1081 = vpop.permute.xlu0 %1080
      %1084 = vset.pattern.permute.xlu0 0
      %1085 = vperm.xlu0 %1084, %v1023
      %v1086 = vpop.permute.xlu0 %1085
      %1089 = vset.pattern.permute.xlu0 0
      %1090 = vperm.xlu0 %1089, %v1024
      %v1091 = vpop.permute.xlu0 %1090
      %1094 = vset.pattern.permute.xlu0 0
      %1095 = vperm.xlu0 %1094, %v1025
      %v1096 = vpop.permute.xlu0 %1095
      %1099 = vset.pattern.permute.xlu0 0
      %1100 = vperm.xlu0 %1099, %v1026
      %v1101 = vpop.permute.xlu0 %1100
      %1104 = vset.pattern.permute.xlu0 0
      %1105 = vperm.xlu0 %1104, %v1027
      %v1106 = vpop.permute.xlu0 %1105
      %v1108 = vlaneseq
      %v1109 = vshrl.u32 %v1108, 7
      %v1110 = vsub.s32 1, %v1109
      %v1111 = vrot.slane %v600, %v1110
      %v1112 = vmul.f32 %v1031, %v1111
      %v1113 = vmul.f32 %v1036, %v1111
      %v1114 = vmul.f32 %v1041, %v1111
      %v1115 = vmul.f32 %v1046, %v1111
      %v1116 = vmul.f32 %v1051, %v1111
      %v1117 = vmul.f32 %v1056, %v1111
      %v1118 = vmul.f32 %v1061, %v1111
      %v1119 = vmul.f32 %v1066, %v1111
      %v1120 = vmul.f32 %v1071, %v1111
      %v1121 = vmul.f32 %v1076, %v1111
      %v1122 = vmul.f32 %v1081, %v1111
      %v1123 = vmul.f32 %v1086, %v1111
      %v1124 = vmul.f32 %v1091, %v1111
      %v1125 = vmul.f32 %v1096, %v1111
      %v1126 = vmul.f32 %v1101, %v1111
      %v1127 = vmul.f32 %v1106, %v1111
      %v1128 = vlaneseq
      %v1129 = vshrl.u32 %v1128, 7
      %v1130 = vsub.s32 2, %v1129
      %v1131 = vrot.slane %v600, %v1130
      %v1132 = vadd.f32 %v1112, %v1131
      %v1133 = vadd.f32 %v1113, %v1131
      %v1134 = vadd.f32 %v1114, %v1131
      %v1135 = vadd.f32 %v1115, %v1131
      %v1136 = vadd.f32 %v1116, %v1131
      %v1137 = vadd.f32 %v1117, %v1131
      %v1138 = vadd.f32 %v1118, %v1131
      %v1139 = vadd.f32 %v1119, %v1131
      %v1140 = vadd.f32 %v1120, %v1131
      %v1141 = vadd.f32 %v1121, %v1131
      %v1142 = vadd.f32 %v1122, %v1131
      %v1143 = vadd.f32 %v1123, %v1131
      %v1144 = vadd.f32 %v1124, %v1131
      %v1145 = vadd.f32 %v1125, %v1131
      %v1146 = vadd.f32 %v1126, %v1131
      %v1147 = vadd.f32 %v1127, %v1131
      %v1148 = vxor.u32 %v1132, 2147483648
      %v1149 = vxor.u32 %v1133, 2147483648
      %v1150 = vxor.u32 %v1134, 2147483648
      %v1151 = vxor.u32 %v1135, 2147483648
      %v1152 = vxor.u32 %v1136, 2147483648
      %v1153 = vxor.u32 %v1137, 2147483648
      %v1154 = vxor.u32 %v1138, 2147483648
      %v1155 = vxor.u32 %v1139, 2147483648
      %v1156 = vxor.u32 %v1140, 2147483648
      %v1157 = vxor.u32 %v1141, 2147483648
      %v1158 = vxor.u32 %v1142, 2147483648
      %v1159 = vxor.u32 %v1143, 2147483648
      %v1160 = vxor.u32 %v1144, 2147483648
      %v1161 = vxor.u32 %v1145, 2147483648
      %v1162 = vxor.u32 %v1146, 2147483648
      %v1163 = vxor.u32 %v1147, 2147483648
      %v1164 = vmul.f32 %v1148, 1.442695
      %v1165 = vpow.pop %v1164
      %v1166 = vmul.f32 %v1149, 1.442695
      %v1167 = vpow.pop %v1166
      %v1168 = vmul.f32 %v1150, 1.442695
      %v1169 = vpow.pop %v1168
      %v1170 = vmul.f32 %v1151, 1.442695
      %v1171 = vpow.pop %v1170
      %v1172 = vmul.f32 %v1152, 1.442695
      %v1173 = vpow.pop %v1172
      %v1174 = vmul.f32 %v1153, 1.442695
      %v1175 = vpow.pop %v1174
      %v1176 = vmul.f32 %v1154, 1.442695
      %v1177 = vpow.pop %v1176
      %v1178 = vmul.f32 %v1155, 1.442695
      %v1179 = vpow.pop %v1178
      %v1180 = vmul.f32 %v1156, 1.442695
      %v1181 = vpow.pop %v1180
      %v1182 = vmul.f32 %v1157, 1.442695
      %v1183 = vpow.pop %v1182
      %v1184 = vmul.f32 %v1158, 1.442695
      %v1185 = vpow.pop %v1184
      %v1186 = vmul.f32 %v1159, 1.442695
      %v1187 = vpow.pop %v1186
      %v1188 = vmul.f32 %v1160, 1.442695
      %v1189 = vpow.pop %v1188
      %v1190 = vmul.f32 %v1161, 1.442695
      %v1191 = vpow.pop %v1190
      %v1192 = vmul.f32 %v1162, 1.442695
      %v1193 = vpow.pop %v1192
      %v1194 = vmul.f32 %v1163, 1.442695
      %v1195 = vpow.pop %v1194
      %v1196 = vadd.f32 %v1165, 1.0
      %v1197 = vadd.f32 %v1167, 1.0
      %v1198 = vadd.f32 %v1169, 1.0
      %v1199 = vadd.f32 %v1171, 1.0
      %v1200 = vadd.f32 %v1173, 1.0
      %v1201 = vadd.f32 %v1175, 1.0
      %v1202 = vadd.f32 %v1177, 1.0
      %v1203 = vadd.f32 %v1179, 1.0
      %v1204 = vadd.f32 %v1181, 1.0
      %v1205 = vadd.f32 %v1183, 1.0
      %v1206 = vadd.f32 %v1185, 1.0
      %v1207 = vadd.f32 %v1187, 1.0
      %v1208 = vadd.f32 %v1189, 1.0
      %v1209 = vadd.f32 %v1191, 1.0
      %v1210 = vadd.f32 %v1193, 1.0
      %v1211 = vadd.f32 %v1195, 1.0
      %v1212 = vrcp.pop %v1196
      %v1213 = vmul.f32 1.0, %v1212
      %v1214 = vrcp.pop %v1197
      %v1215 = vmul.f32 1.0, %v1214
      %v1216 = vrcp.pop %v1198
      %v1217 = vmul.f32 1.0, %v1216
      %v1218 = vrcp.pop %v1199
      %v1219 = vmul.f32 1.0, %v1218
      %v1220 = vrcp.pop %v1200
      %v1221 = vmul.f32 1.0, %v1220
      %v1222 = vrcp.pop %v1201
      %v1223 = vmul.f32 1.0, %v1222
      %v1224 = vrcp.pop %v1202
      %v1225 = vmul.f32 1.0, %v1224
      %v1226 = vrcp.pop %v1203
      %v1227 = vmul.f32 1.0, %v1226
      %v1228 = vrcp.pop %v1204
      %v1229 = vmul.f32 1.0, %v1228
      %v1230 = vrcp.pop %v1205
      %v1231 = vmul.f32 1.0, %v1230
      %v1232 = vrcp.pop %v1206
      %v1233 = vmul.f32 1.0, %v1232
      %v1234 = vrcp.pop %v1207
      %v1235 = vmul.f32 1.0, %v1234
      %v1236 = vrcp.pop %v1208
      %v1237 = vmul.f32 1.0, %v1236
      %v1238 = vrcp.pop %v1209
      %v1239 = vmul.f32 1.0, %v1238
      %v1240 = vrcp.pop %v1210
      %v1241 = vmul.f32 1.0, %v1240
      %v1242 = vrcp.pop %v1211
      %v1243 = vmul.f32 1.0, %v1242
      %v1244 = vmul.f32 %v1213, %v584
      %v1245 = vmul.f32 %v1215, %v585
      %v1246 = vmul.f32 %v1217, %v586
      %v1247 = vmul.f32 %v1219, %v587
      %v1248 = vmul.f32 %v1221, %v588
      %v1249 = vmul.f32 %v1223, %v589
      %v1250 = vmul.f32 %v1225, %v590
      %v1251 = vmul.f32 %v1227, %v591
      %v1252 = vmul.f32 %v1229, %v592
      %v1253 = vmul.f32 %v1231, %v593
      %v1254 = vmul.f32 %v1233, %v594
      %v1255 = vmul.f32 %v1235, %v595
      %v1256 = vmul.f32 %v1237, %v596
      %v1257 = vmul.f32 %v1239, %v597
      %v1258 = vmul.f32 %v1241, %v598
      %v1259 = vmul.f32 %v1243, %v599
      %v1260 = vpack.c.bf16 %v1245, %v1244
      %v1261 = vpack.c.bf16 %v1247, %v1246
      %v1262 = vpack.c.bf16 %v1249, %v1248
      %v1263 = vpack.c.bf16 %v1251, %v1250
      %v1264 = vpack.c.bf16 %v1253, %v1252
      %v1265 = vpack.c.bf16 %v1255, %v1254
      %v1266 = vpack.c.bf16 %v1257, %v1256
      %v1267 = vpack.c.bf16 %v1259, %v1258
      %v1268 = vld [vmem:[%s5] sm:$0xf]
      %v1269 = vlaneseq
      %v1270 = vshrl.u32 %v1269, 7
      %v1271 = vsub.s32 3, %v1270
      %v1272 = vrot.slane %v600, %v1271
      %vm1273 = vcmask 64512
      %v1275 = vsel %vm1273, %v1260, 0
      %v1278 = vsel %vm1273, %v1261, 0
      %v1281 = vsel %vm1273, %v1262, 0
      %v1284 = vsel %vm1273, %v1263, 0
      %v1287 = vsel %vm1273, %v1264, 0
      %v1290 = vsel %vm1273, %v1265, 0
      %v1293 = vsel %vm1273, %v1266, 0
      %v1296 = vsel %vm1273, %v1267, 0
      %vm1298 = vcmask 1043456
      %v1300 = vsel %vm1298, %v1268, 0
      %1302 = vmatprep.subr.bf16.mxu0 0
      %1303 = vmatpush1.bf16.msra.mxu0 %v1300
      %1304 = vmatprep.subr.bf16.mxu0 0
      %1305 = vmatpush1.bf16.msra.mxu0 0
      %1306 = vmatprep.subr.bf16.mxu0 0
      %1307 = vmatpush1.bf16.msra.mxu0 0
      %1308 = vmatprep.subr.bf16.mxu0 0
      %1309 = vmatpush1.bf16.msra.mxu0 0
      %1310 = vmatprep.subr.bf16.mxu0 0
      %1311 = vmatpush1.bf16.msra.mxu0 0
      %1312 = vmatprep.subr.bf16.mxu0 0
      %1313 = vmatpush1.bf16.msra.mxu0 0
      %1314 = vmatprep.subr.bf16.mxu0 0
      %1315 = vmatpush1.bf16.msra.mxu0 0
      %1316 = vmatprep.subr.bf16.mxu0 0
      %1317 = vmatpush1.bf16.msra.mxu0 0
      %1318 = vmatprep.subr.bf16.mxu0 0
      %1319 = vmatpush1.bf16.msra.mxu0 0
      %1320 = vmatprep.subr.bf16.mxu0 0
      %1321 = vmatpush1.bf16.msra.mxu0 0
      %1322 = vmatprep.subr.bf16.mxu0 0
      %1323 = vmatpush1.bf16.msra.mxu0 0
      %1324 = vmatprep.subr.bf16.mxu0 0
      %1325 = vmatpush1.bf16.msra.mxu0 0
      %1326 = vmatprep.subr.bf16.mxu0 0
      %1327 = vmatpush1.bf16.msra.mxu0 0
      %1328 = vmatprep.subr.bf16.mxu0 0
      %1329 = vmatpush1.bf16.msra.mxu0 0
      %1330 = vmatprep.subr.bf16.mxu0 0
      %1331 = vmatpush1.bf16.msra.mxu0 0
      %1332 = vmatprep.subr.bf16.mxu0 0
      %1333 = vmatpush1.bf16.msra.mxu0 0
      %1334 = vmatprep.mubr.bf16.mxu0 0
      %1335 = vmatmul.mubr.bf16.gmra.mrb[0].mxu0 %v1275
      %v1336 = vpop.f32.mrb[0].mxu0
      %v1337 = vadd.f32 %v1272, %v1336
      %v1338 = vpop.f32.mrb[0].mxu0
      %v1339 = vpop.f32.mrb[0].mxu0
      %v1340 = vadd.f32 %v1272, %v1339
      %v1341 = vpop.f32.mrb[0].mxu0
      %1342 = vmatprep.mubr.bf16.mxu0 0
      %1343 = vmatmul.mubr.bf16.gmra.mrb[0].mxu0 %v1278
      %v1344 = vpop.f32.mrb[0].mxu0
      %v1345 = vadd.f32 %v1272, %v1344
      %v1346 = vpop.f32.mrb[0].mxu0
      %v1347 = vpop.f32.mrb[0].mxu0
      %v1348 = vadd.f32 %v1272, %v1347
      %v1349 = vpop.f32.mrb[0].mxu0
      %1350 = vmatprep.mubr.bf16.mxu0 0
      %1351 = vmatmul.mubr.bf16.gmra.mrb[0].mxu0 %v1281
      %v1352 = vpop.f32.mrb[0].mxu0
      %v1353 = vadd.f32 %v1272, %v1352
      %v1354 = vpop.f32.mrb[0].mxu0
      %v1355 = vpop.f32.mrb[0].mxu0
      %v1356 = vadd.f32 %v1272, %v1355
      %v1357 = vpop.f32.mrb[0].mxu0
      %1358 = vmatprep.mubr.bf16.mxu0 0
      %1359 = vmatmul.mubr.bf16.gmra.mrb[0].mxu0 %v1284
      %v1360 = vpop.f32.mrb[0].mxu0
      %v1361 = vadd.f32 %v1272, %v1360
      %v1362 = vpop.f32.mrb[0].mxu0
      %v1363 = vpop.f32.mrb[0].mxu0
      %v1364 = vadd.f32 %v1272, %v1363
      %v1365 = vpop.f32.mrb[0].mxu0
      %1366 = vmatprep.mubr.bf16.mxu0 0
      %1367 = vmatmul.mubr.bf16.gmra.mrb[0].mxu0 %v1287
      %v1368 = vpop.f32.mrb[0].mxu0
      %v1369 = vadd.f32 %v1272, %v1368
      %v1370 = vpop.f32.mrb[0].mxu0
      %v1371 = vpop.f32.mrb[0].mxu0
      %v1372 = vadd.f32 %v1272, %v1371
      %v1373 = vpop.f32.mrb[0].mxu0
      %1374 = vmatprep.mubr.bf16.mxu0 0
      %1375 = vmatmul.mubr.bf16.gmra.mrb[0].mxu0 %v1290
      %v1376 = vpop.f32.mrb[0].mxu0
      %v1377 = vadd.f32 %v1272, %v1376
      %v1378 = vpop.f32.mrb[0].mxu0
      %v1379 = vpop.f32.mrb[0].mxu0
      %v1380 = vadd.f32 %v1272, %v1379
      %v1381 = vpop.f32.mrb[0].mxu0
      %1382 = vmatprep.mubr.bf16.mxu0 0
      %1383 = vmatmul.mubr.bf16.gmra.mrb[0].mxu0 %v1293
      %v1384 = vpop.f32.mrb[0].mxu0
      %v1385 = vadd.f32 %v1272, %v1384
      %v1386 = vpop.f32.mrb[0].mxu0
      %v1387 = vpop.f32.mrb[0].mxu0
      %v1388 = vadd.f32 %v1272, %v1387
      %v1389 = vpop.f32.mrb[0].mxu0
      %1390 = vmatprep.mubr.bf16.mxu0 0
      %1391 = vmatmul.mubr.bf16.gmra.mrb[0].mxu0 %v1296
      %v1392 = vpop.f32.mrb[0].mxu0
      %v1393 = vadd.f32 %v1272, %v1392
      %v1394 = vpop.f32.mrb[0].mxu0
      %v1395 = vpop.f32.mrb[0].mxu0
      %v1396 = vadd.f32 %v1272, %v1395
      %v1397 = vpop.f32.mrb[0].mxu0
      %1398 = vdwg.mxu0
      %vm1399 = vcmp.ge.f32.partialorder %v1337, 0.0
      %vm1400 = vcmp.ge.f32.partialorder %v1340, 0.0
      %vm1401 = vcmp.ge.f32.partialorder %v1345, 0.0
      %vm1402 = vcmp.ge.f32.partialorder %v1348, 0.0
      %vm1403 = vcmp.ge.f32.partialorder %v1353, 0.0
      %vm1404 = vcmp.ge.f32.partialorder %v1356, 0.0
      %vm1405 = vcmp.ge.f32.partialorder %v1361, 0.0
      %vm1406 = vcmp.ge.f32.partialorder %v1364, 0.0
      %vm1407 = vcmp.ge.f32.partialorder %v1369, 0.0
      %vm1408 = vcmp.ge.f32.partialorder %v1372, 0.0
      %vm1409 = vcmp.ge.f32.partialorder %v1377, 0.0
      %vm1410 = vcmp.ge.f32.partialorder %v1380, 0.0
      %vm1411 = vcmp.ge.f32.partialorder %v1385, 0.0
      %vm1412 = vcmp.ge.f32.partialorder %v1388, 0.0
      %vm1413 = vcmp.ge.f32.partialorder %v1393, 0.0
      %vm1414 = vcmp.ge.f32.partialorder %v1396, 0.0
      %v1415 = vmul.f32 %v1337, 0.1
      %v1416 = vmul.f32 %v1340, 0.1
      %v1417 = vmul.f32 %v1345, 0.1
      %v1418 = vmul.f32 %v1348, 0.1
      %v1419 = vmul.f32 %v1353, 0.1
      %v1420 = vmul.f32 %v1356, 0.1
      %v1421 = vmul.f32 %v1361, 0.1
      %v1422 = vmul.f32 %v1364, 0.1
      %v1423 = vmul.f32 %v1369, 0.1
      %v1424 = vmul.f32 %v1372, 0.1
      %v1425 = vmul.f32 %v1377, 0.1
      %v1426 = vmul.f32 %v1380, 0.1
      %v1427 = vmul.f32 %v1385, 0.1
      %v1428 = vmul.f32 %v1388, 0.1
      %v1429 = vmul.f32 %v1393, 0.1
      %v1430 = vmul.f32 %v1396, 0.1
      %v1431 = vsel %vm1399, %v1337, %v1415
      %v1432 = vsel %vm1400, %v1340, %v1416
      %v1433 = vsel %vm1401, %v1345, %v1417
      %v1434 = vsel %vm1402, %v1348, %v1418
      %v1435 = vsel %vm1403, %v1353, %v1419
      %v1436 = vsel %vm1404, %v1356, %v1420
      %v1437 = vsel %vm1405, %v1361, %v1421
      %v1438 = vsel %vm1406, %v1364, %v1422
      %v1439 = vsel %vm1407, %v1369, %v1423
      %v1440 = vsel %vm1408, %v1372, %v1424
      %v1441 = vsel %vm1409, %v1377, %v1425
      %v1442 = vsel %vm1410, %v1380, %v1426
      %v1443 = vsel %vm1411, %v1385, %v1427
      %v1444 = vsel %vm1412, %v1388, %v1428
      %v1445 = vsel %vm1413, %v1393, %v1429
      %v1446 = vsel %vm1414, %v1396, %v1430
      %v1447 = vpack.c.bf16 %v1432, %v1431
      %v1448 = vpack.c.bf16 %v1434, %v1433
      %v1449 = vpack.c.bf16 %v1436, %v1435
      %v1450 = vpack.c.bf16 %v1438, %v1437
      %v1451 = vpack.c.bf16 %v1440, %v1439
      %v1452 = vpack.c.bf16 %v1442, %v1441
      %v1453 = vpack.c.bf16 %v1444, %v1443
      %v1454 = vpack.c.bf16 %v1446, %v1445
      %v1455 = vld [vmem:[%s6] sm:$0xf]
      %v1456 = vlaneseq
      %v1457 = vshrl.u32 %v1456, 7
      %v1458 = vsub.s32 4, %v1457
      %v1459 = vrot.slane %v600, %v1458
      %v1461 = vsel %vm1273, %v1447, 0
      %v1464 = vsel %vm1273, %v1448, 0
      %v1467 = vsel %vm1273, %v1449, 0
      %v1470 = vsel %vm1273, %v1450, 0
      %v1473 = vsel %vm1273, %v1451, 0
      %v1476 = vsel %vm1273, %v1452, 0
      %v1479 = vsel %vm1273, %v1453, 0
      %v1482 = vsel %vm1273, %v1454, 0
      %v1485 = vsel %vm1298, %v1455, 0
      %1487 = vmatprep.subr.bf16.mxu0 0
      %1488 = vmatpush1.bf16.msra.mxu0 %v1485
      %1489 = vmatprep.subr.bf16.mxu0 0
      %1490 = vmatpush1.bf16.msra.mxu0 0
      %1491 = vmatprep.subr.bf16.mxu0 0
      %1492 = vmatpush1.bf16.msra.mxu0 0
      %1493 = vmatprep.subr.bf16.mxu0 0
      %1494 = vmatpush1.bf16.msra.mxu0 0
      %1495 = vmatprep.subr.bf16.mxu0 0
      %1496 = vmatpush1.bf16.msra.mxu0 0
      %1497 = vmatprep.subr.bf16.mxu0 0
      %1498 = vmatpush1.bf16.msra.mxu0 0
      %1499 = vmatprep.subr.bf16.mxu0 0
      %1500 = vmatpush1.bf16.msra.mxu0 0
      %1501 = vmatprep.subr.bf16.mxu0 0
      %1502 = vmatpush1.bf16.msra.mxu0 0
      %1503 = vmatprep.subr.bf16.mxu0 0
      %1504 = vmatpush1.bf16.msra.mxu0 0
      %1505 = vmatprep.subr.bf16.mxu0 0
      %1506 = vmatpush1.bf16.msra.mxu0 0
      %1507 = vmatprep.subr.bf16.mxu0 0
      %1508 = vmatpush1.bf16.msra.mxu0 0
      %1509 = vmatprep.subr.bf16.mxu0 0
      %1510 = vmatpush1.bf16.msra.mxu0 0
      %1511 = vmatprep.subr.bf16.mxu0 0
      %1512 = vmatpush1.bf16.msra.mxu0 0
      %1513 = vmatprep.subr.bf16.mxu0 0
      %1514 = vmatpush1.bf16.msra.mxu0 0
      %1515 = vmatprep.subr.bf16.mxu0 0
      %1516 = vmatpush1.bf16.msra.mxu0 0
      %1517 = vmatprep.subr.bf16.mxu0 0
      %1518 = vmatpush1.bf16.msra.mxu0 0
      %1519 = vmatprep.mubr.bf16.mxu0 0
      %1520 = vmatmul.mubr.bf16.gmra.mrb[0].mxu0 %v1461
      %v1521 = vpop.f32.mrb[0].mxu0
      %v1522 = vadd.f32 %v1459, %v1521
      %v1523 = vpop.f32.mrb[0].mxu0
      %v1524 = vpop.f32.mrb[0].mxu0
      %v1525 = vadd.f32 %v1459, %v1524
      %v1526 = vpop.f32.mrb[0].mxu0
      %1527 = vmatprep.mubr.bf16.mxu0 0
      %1528 = vmatmul.mubr.bf16.gmra.mrb[0].mxu0 %v1464
      %v1529 = vpop.f32.mrb[0].mxu0
      %v1530 = vadd.f32 %v1459, %v1529
      %v1531 = vpop.f32.mrb[0].mxu0
      %v1532 = vpop.f32.mrb[0].mxu0
      %v1533 = vadd.f32 %v1459, %v1532
      %v1534 = vpop.f32.mrb[0].mxu0
      %1535 = vmatprep.mubr.bf16.mxu0 0
      %1536 = vmatmul.mubr.bf16.gmra.mrb[0].mxu0 %v1467
      %v1537 = vpop.f32.mrb[0].mxu0
      %v1538 = vadd.f32 %v1459, %v1537
      %v1539 = vpop.f32.mrb[0].mxu0
      %v1540 = vpop.f32.mrb[0].mxu0
      %v1541 = vadd.f32 %v1459, %v1540
      %v1542 = vpop.f32.mrb[0].mxu0
      %1543 = vmatprep.mubr.bf16.mxu0 0
      %1544 = vmatmul.mubr.bf16.gmra.mrb[0].mxu0 %v1470
      %v1545 = vpop.f32.mrb[0].mxu0
      %v1546 = vadd.f32 %v1459, %v1545
      %v1547 = vpop.f32.mrb[0].mxu0
      %v1548 = vpop.f32.mrb[0].mxu0
      %v1549 = vadd.f32 %v1459, %v1548
      %v1550 = vpop.f32.mrb[0].mxu0
      %1551 = vmatprep.mubr.bf16.mxu0 0
      %1552 = vmatmul.mubr.bf16.gmra.mrb[0].mxu0 %v1473
      %v1553 = vpop.f32.mrb[0].mxu0
      %v1554 = vadd.f32 %v1459, %v1553
      %v1555 = vpop.f32.mrb[0].mxu0
      %v1556 = vpop.f32.mrb[0].mxu0
      %v1557 = vadd.f32 %v1459, %v1556
      %v1558 = vpop.f32.mrb[0].mxu0
      %1559 = vmatprep.mubr.bf16.mxu0 0
      %1560 = vmatmul.mubr.bf16.gmra.mrb[0].mxu0 %v1476
      %v1561 = vpop.f32.mrb[0].mxu0
      %v1562 = vadd.f32 %v1459, %v1561
      %v1563 = vpop.f32.mrb[0].mxu0
      %v1564 = vpop.f32.mrb[0].mxu0
      %v1565 = vadd.f32 %v1459, %v1564
      %v1566 = vpop.f32.mrb[0].mxu0
      %1567 = vmatprep.mubr.bf16.mxu0 0
      %1568 = vmatmul.mubr.bf16.gmra.mrb[0].mxu0 %v1479
      %v1569 = vpop.f32.mrb[0].mxu0
      %v1570 = vadd.f32 %v1459, %v1569
      %v1571 = vpop.f32.mrb[0].mxu0
      %v1572 = vpop.f32.mrb[0].mxu0
      %v1573 = vadd.f32 %v1459, %v1572
      %v1574 = vpop.f32.mrb[0].mxu0
      %1575 = vmatprep.mubr.bf16.mxu0 0
      %1576 = vmatmul.mubr.bf16.gmra.mrb[0].mxu0 %v1482
      %v1577 = vpop.f32.mrb[0].mxu0
      %v1578 = vadd.f32 %v1459, %v1577
      %v1579 = vpop.f32.mrb[0].mxu0
      %v1580 = vpop.f32.mrb[0].mxu0
      %v1581 = vadd.f32 %v1459, %v1580
      %v1582 = vpop.f32.mrb[0].mxu0
      %1583 = vdwg.mxu0
      %vm1584 = vcmp.ge.f32.partialorder %v1522, 0.0
      %vm1585 = vcmp.ge.f32.partialorder %v1525, 0.0
      %vm1586 = vcmp.ge.f32.partialorder %v1530, 0.0
      %vm1587 = vcmp.ge.f32.partialorder %v1533, 0.0
      %vm1588 = vcmp.ge.f32.partialorder %v1538, 0.0
      %vm1589 = vcmp.ge.f32.partialorder %v1541, 0.0
      %vm1590 = vcmp.ge.f32.partialorder %v1546, 0.0
      %vm1591 = vcmp.ge.f32.partialorder %v1549, 0.0
      %vm1592 = vcmp.ge.f32.partialorder %v1554, 0.0
      %vm1593 = vcmp.ge.f32.partialorder %v1557, 0.0
      %vm1594 = vcmp.ge.f32.partialorder %v1562, 0.0
      %vm1595 = vcmp.ge.f32.partialorder %v1565, 0.0
      %vm1596 = vcmp.ge.f32.partialorder %v1570, 0.0
      %vm1597 = vcmp.ge.f32.partialorder %v1573, 0.0
      %vm1598 = vcmp.ge.f32.partialorder %v1578, 0.0
      %vm1599 = vcmp.ge.f32.partialorder %v1581, 0.0
      %v1600 = vmul.f32 %v1522, 0.1
      %v1601 = vmul.f32 %v1525, 0.1
      %v1602 = vmul.f32 %v1530, 0.1
      %v1603 = vmul.f32 %v1533, 0.1
      %v1604 = vmul.f32 %v1538, 0.1
      %v1605 = vmul.f32 %v1541, 0.1
      %v1606 = vmul.f32 %v1546, 0.1
      %v1607 = vmul.f32 %v1549, 0.1
      %v1608 = vmul.f32 %v1554, 0.1
      %v1609 = vmul.f32 %v1557, 0.1
      %v1610 = vmul.f32 %v1562, 0.1
      %v1611 = vmul.f32 %v1565, 0.1
      %v1612 = vmul.f32 %v1570, 0.1
      %v1613 = vmul.f32 %v1573, 0.1
      %v1614 = vmul.f32 %v1578, 0.1
      %v1615 = vmul.f32 %v1581, 0.1
      %v1616 = vsel %vm1584, %v1522, %v1600
      %v1617 = vsel %vm1585, %v1525, %v1601
      %v1618 = vsel %vm1586, %v1530, %v1602
      %v1619 = vsel %vm1587, %v1533, %v1603
      %v1620 = vsel %vm1588, %v1538, %v1604
      %v1621 = vsel %vm1589, %v1541, %v1605
      %v1622 = vsel %vm1590, %v1546, %v1606
      %v1623 = vsel %vm1591, %v1549, %v1607
      %v1624 = vsel %vm1592, %v1554, %v1608
      %v1625 = vsel %vm1593, %v1557, %v1609
      %v1626 = vsel %vm1594, %v1562, %v1610
      %v1627 = vsel %vm1595, %v1565, %v1611
      %v1628 = vsel %vm1596, %v1570, %v1612
      %v1629 = vsel %vm1597, %v1573, %v1613
      %v1630 = vsel %vm1598, %v1578, %v1614
      %v1631 = vsel %vm1599, %v1581, %v1615
      %v1632 = vld [vmem:[%s506] sm:$0xf]
      %v1633 = vld [vmem:[%s506 + $0x4] sm:$0xf]
      %v1634 = vld [vmem:[%s506 + $0x8] sm:$0xf]
      %v1635 = vld [vmem:[%s506 + $0xc] sm:$0xf]
      %v1636 = vld [vmem:[%s506 + $0x10] sm:$0xf]
      %v1637 = vld [vmem:[%s506 + $0x14] sm:$0xf]
      %v1638 = vld [vmem:[%s506 + $0x18] sm:$0xf]
      %v1639 = vld [vmem:[%s506 + $0x1c] sm:$0xf]
      %v1640 = vld [vmem:[%s506 + $0x20] sm:$0xf]
      %v1641 = vld [vmem:[%s506 + $0x24] sm:$0xf]
      %v1642 = vld [vmem:[%s506 + $0x28] sm:$0xf]
      %v1643 = vld [vmem:[%s506 + $0x2c] sm:$0xf]
      %v1644 = vld [vmem:[%s506 + $0x30] sm:$0xf]
      %v1645 = vld [vmem:[%s506 + $0x34] sm:$0xf]
      %v1646 = vld [vmem:[%s506 + $0x38] sm:$0xf]
      %v1647 = vld [vmem:[%s506 + $0x3c] sm:$0xf]
      %v1648 = vld [vmem:[%s7] sm:$0xf]
      %v1649 = vlaneseq
      %v1650 = vshrl.u32 %v1649, 7
      %v1651 = vsub.s32 5, %v1650
      %v1652 = vrot.slane %v600, %v1651
      %v1669 = vunpack.c.l.b16 %v1632
      %v1670 = vunpack.c.l.b16 %v1633
      %v1671 = vunpack.c.l.b16 %v1634
      %v1672 = vunpack.c.l.b16 %v1635
      %v1673 = vunpack.c.l.b16 %v1636
      %v1674 = vunpack.c.l.b16 %v1637
      %v1675 = vunpack.c.l.b16 %v1638
      %v1676 = vunpack.c.l.b16 %v1639
      %v1677 = vunpack.c.l.b16 %v1640
      %v1678 = vunpack.c.l.b16 %v1641
      %v1679 = vunpack.c.l.b16 %v1642
      %v1680 = vunpack.c.l.b16 %v1643
      %v1681 = vunpack.c.l.b16 %v1644
      %v1682 = vunpack.c.l.b16 %v1645
      %v1683 = vunpack.c.l.b16 %v1646
      %v1684 = vunpack.c.l.b16 %v1647
      %v1685 = vpack.c.b16 %v1670, %v1669
      %v1686 = vpack.c.b16 %v1672, %v1671
      %v1687 = vpack.c.b16 %v1674, %v1673
      %v1688 = vpack.c.b16 %v1676, %v1675
      %v1689 = vpack.c.b16 %v1678, %v1677
      %v1690 = vpack.c.b16 %v1680, %v1679
      %v1691 = vpack.c.b16 %v1682, %v1681
      %v1692 = vpack.c.b16 %v1684, %v1683
      %v1694 = vsel %vm1273, %v1685, 0
      %v1697 = vsel %vm1273, %v1686, 0
      %v1700 = vsel %vm1273, %v1687, 0
      %v1703 = vsel %vm1273, %v1688, 0
      %v1706 = vsel %vm1273, %v1689, 0
      %v1709 = vsel %vm1273, %v1690, 0
      %v1712 = vsel %vm1273, %v1691, 0
      %v1715 = vsel %vm1273, %v1692, 0
      %v1718 = vsel %vm1298, %v1648, 0
      %1720 = vmatprep.subr.bf16.mxu0 0
      %1721 = vmatpush1.bf16.msra.mxu0 %v1718
      %1722 = vmatprep.subr.bf16.mxu0 0
      %1723 = vmatpush1.bf16.msra.mxu0 0
      %1724 = vmatprep.subr.bf16.mxu0 0
      %1725 = vmatpush1.bf16.msra.mxu0 0
      %1726 = vmatprep.subr.bf16.mxu0 0
      %1727 = vmatpush1.bf16.msra.mxu0 0
      %1728 = vmatprep.subr.bf16.mxu0 0
      %1729 = vmatpush1.bf16.msra.mxu0 0
      %1730 = vmatprep.subr.bf16.mxu0 0
      %1731 = vmatpush1.bf16.msra.mxu0 0
      %1732 = vmatprep.subr.bf16.mxu0 0
      %1733 = vmatpush1.bf16.msra.mxu0 0
      %1734 = vmatprep.subr.bf16.mxu0 0
      %1735 = vmatpush1.bf16.msra.mxu0 0
      %1736 = vmatprep.subr.bf16.mxu0 0
      %1737 = vmatpush1.bf16.msra.mxu0 0
      %1738 = vmatprep.subr.bf16.mxu0 0
      %1739 = vmatpush1.bf16.msra.mxu0 0
      %1740 = vmatprep.subr.bf16.mxu0 0
      %1741 = vmatpush1.bf16.msra.mxu0 0
      %1742 = vmatprep.subr.bf16.mxu0 0
      %1743 = vmatpush1.bf16.msra.mxu0 0
      %1744 = vmatprep.subr.bf16.mxu0 0
      %1745 = vmatpush1.bf16.msra.mxu0 0
      %1746 = vmatprep.subr.bf16.mxu0 0
      %1747 = vmatpush1.bf16.msra.mxu0 0
      %1748 = vmatprep.subr.bf16.mxu0 0
      %1749 = vmatpush1.bf16.msra.mxu0 0
      %1750 = vmatprep.subr.bf16.mxu0 0
      %1751 = vmatpush1.bf16.msra.mxu0 0
      %1752 = vmatprep.mubr.bf16.mxu0 0
      %1753 = vmatmul.mubr.bf16.gmra.mrb[0].mxu0 %v1694
      %v1754 = vpop.f32.mrb[0].mxu0
      %v1755 = vadd.f32 %v1652, %v1754
      %v1756 = vpop.f32.mrb[0].mxu0
      %v1757 = vpop.f32.mrb[0].mxu0
      %v1758 = vadd.f32 %v1652, %v1757
      %v1759 = vpop.f32.mrb[0].mxu0
      %1760 = vmatprep.mubr.bf16.mxu0 0
      %1761 = vmatmul.mubr.bf16.gmra.mrb[0].mxu0 %v1697
      %v1762 = vpop.f32.mrb[0].mxu0
      %v1763 = vadd.f32 %v1652, %v1762
      %v1764 = vpop.f32.mrb[0].mxu0
      %v1765 = vpop.f32.mrb[0].mxu0
      %v1766 = vadd.f32 %v1652, %v1765
      %v1767 = vpop.f32.mrb[0].mxu0
      %1768 = vmatprep.mubr.bf16.mxu0 0
      %1769 = vmatmul.mubr.bf16.gmra.mrb[0].mxu0 %v1700
      %v1770 = vpop.f32.mrb[0].mxu0
      %v1771 = vadd.f32 %v1652, %v1770
      %v1772 = vpop.f32.mrb[0].mxu0
      %v1773 = vpop.f32.mrb[0].mxu0
      %v1774 = vadd.f32 %v1652, %v1773
      %v1775 = vpop.f32.mrb[0].mxu0
      %1776 = vmatprep.mubr.bf16.mxu0 0
      %1777 = vmatmul.mubr.bf16.gmra.mrb[0].mxu0 %v1703
      %v1778 = vpop.f32.mrb[0].mxu0
      %v1779 = vadd.f32 %v1652, %v1778
      %v1780 = vpop.f32.mrb[0].mxu0
      %v1781 = vpop.f32.mrb[0].mxu0
      %v1782 = vadd.f32 %v1652, %v1781
      %v1783 = vpop.f32.mrb[0].mxu0
      %1784 = vmatprep.mubr.bf16.mxu0 0
      %1785 = vmatmul.mubr.bf16.gmra.mrb[0].mxu0 %v1706
      %v1786 = vpop.f32.mrb[0].mxu0
      %v1787 = vadd.f32 %v1652, %v1786
      %v1788 = vpop.f32.mrb[0].mxu0
      %v1789 = vpop.f32.mrb[0].mxu0
      %v1790 = vadd.f32 %v1652, %v1789
      %v1791 = vpop.f32.mrb[0].mxu0
      %1792 = vmatprep.mubr.bf16.mxu0 0
      %1793 = vmatmul.mubr.bf16.gmra.mrb[0].mxu0 %v1709
      %v1794 = vpop.f32.mrb[0].mxu0
      %v1795 = vadd.f32 %v1652, %v1794
      %v1796 = vpop.f32.mrb[0].mxu0
      %v1797 = vpop.f32.mrb[0].mxu0
      %v1798 = vadd.f32 %v1652, %v1797
      %v1799 = vpop.f32.mrb[0].mxu0
      %1800 = vmatprep.mubr.bf16.mxu0 0
      %1801 = vmatmul.mubr.bf16.gmra.mrb[0].mxu0 %v1712
      %v1802 = vpop.f32.mrb[0].mxu0
      %v1803 = vadd.f32 %v1652, %v1802
      %v1804 = vpop.f32.mrb[0].mxu0
      %v1805 = vpop.f32.mrb[0].mxu0
      %v1806 = vadd.f32 %v1652, %v1805
      %v1807 = vpop.f32.mrb[0].mxu0
      %1808 = vmatprep.mubr.bf16.mxu0 0
      %1809 = vmatmul.mubr.bf16.gmra.mrb[0].mxu0 %v1715
      %v1810 = vpop.f32.mrb[0].mxu0
      %v1811 = vadd.f32 %v1652, %v1810
      %v1812 = vpop.f32.mrb[0].mxu0
      %v1813 = vpop.f32.mrb[0].mxu0
      %v1814 = vadd.f32 %v1652, %v1813
      %v1815 = vpop.f32.mrb[0].mxu0
      %1816 = vdwg.mxu0
      %vm1817 = vcmp.ge.f32.partialorder %v1755, 0.0
      %vm1818 = vcmp.ge.f32.partialorder %v1758, 0.0
      %vm1819 = vcmp.ge.f32.partialorder %v1763, 0.0
      %vm1820 = vcmp.ge.f32.partialorder %v1766, 0.0
      %vm1821 = vcmp.ge.f32.partialorder %v1771, 0.0
      %vm1822 = vcmp.ge.f32.partialorder %v1774, 0.0
      %vm1823 = vcmp.ge.f32.partialorder %v1779, 0.0
      %vm1824 = vcmp.ge.f32.partialorder %v1782, 0.0
      %vm1825 = vcmp.ge.f32.partialorder %v1787, 0.0
      %vm1826 = vcmp.ge.f32.partialorder %v1790, 0.0
      %vm1827 = vcmp.ge.f32.partialorder %v1795, 0.0
      %vm1828 = vcmp.ge.f32.partialorder %v1798, 0.0
      %vm1829 = vcmp.ge.f32.partialorder %v1803, 0.0
      %vm1830 = vcmp.ge.f32.partialorder %v1806, 0.0
      %vm1831 = vcmp.ge.f32.partialorder %v1811, 0.0
      %vm1832 = vcmp.ge.f32.partialorder %v1814, 0.0
      %v1833 = vmul.f32 %v1755, 0.1
      %v1834 = vmul.f32 %v1758, 0.1
      %v1835 = vmul.f32 %v1763, 0.1
      %v1836 = vmul.f32 %v1766, 0.1
      %v1837 = vmul.f32 %v1771, 0.1
      %v1838 = vmul.f32 %v1774, 0.1
      %v1839 = vmul.f32 %v1779, 0.1
      %v1840 = vmul.f32 %v1782, 0.1
      %v1841 = vmul.f32 %v1787, 0.1
      %v1842 = vmul.f32 %v1790, 0.1
      %v1843 = vmul.f32 %v1795, 0.1
      %v1844 = vmul.f32 %v1798, 0.1
      %v1845 = vmul.f32 %v1803, 0.1
      %v1846 = vmul.f32 %v1806, 0.1
      %v1847 = vmul.f32 %v1811, 0.1
      %v1848 = vmul.f32 %v1814, 0.1
      %v1849 = vsel %vm1817, %v1755, %v1833
      %v1850 = vsel %vm1818, %v1758, %v1834
      %v1851 = vsel %vm1819, %v1763, %v1835
      %v1852 = vsel %vm1820, %v1766, %v1836
      %v1853 = vsel %vm1821, %v1771, %v1837
      %v1854 = vsel %vm1822, %v1774, %v1838
      %v1855 = vsel %vm1823, %v1779, %v1839
      %v1856 = vsel %vm1824, %v1782, %v1840
      %v1857 = vsel %vm1825, %v1787, %v1841
      %v1858 = vsel %vm1826, %v1790, %v1842
      %v1859 = vsel %vm1827, %v1795, %v1843
      %v1860 = vsel %vm1828, %v1798, %v1844
      %v1861 = vsel %vm1829, %v1803, %v1845
      %v1862 = vsel %vm1830, %v1806, %v1846
      %v1863 = vsel %vm1831, %v1811, %v1847
      %v1864 = vsel %vm1832, %v1814, %v1848
      %s1865 = smul.u32 %s27, 128
      %v1866 = vlaneseq
      %v1867 = vshrl.u32 %v1866, 7
      %v1868 = vadd.s32 %v1867, 8
      %v1869 = vadd.s32 %v1867, 16
      %v1870 = vadd.s32 %v1867, 24
      %v1871 = vadd.s32 %v1867, 32
      %v1872 = vadd.s32 %v1867, 40
      %v1873 = vadd.s32 %v1867, 48
      %v1874 = vadd.s32 %v1867, 56
      %v1875 = vadd.s32 %v1867, 64
      %v1876 = vadd.s32 %v1867, 72
      %v1877 = vadd.s32 %v1867, 80
      %v1878 = vadd.s32 %v1867, 88
      %v1879 = vadd.s32 %v1867, 96
      %v1880 = vadd.s32 %v1867, 104
      %v1881 = vadd.s32 %v1867, 112
      %v1882 = vadd.s32 %v1867, 120
      %v1883 = vstv %s1865
      %v1884 = vadd.s32 %v1883, %v1867
      %v1885 = vadd.s32 %v1883, %v1868
      %v1886 = vadd.s32 %v1883, %v1869
      %v1887 = vadd.s32 %v1883, %v1870
      %v1888 = vadd.s32 %v1883, %v1871
      %v1889 = vadd.s32 %v1883, %v1872
      %v1890 = vadd.s32 %v1883, %v1873
      %v1891 = vadd.s32 %v1883, %v1874
      %v1892 = vadd.s32 %v1883, %v1875
      %v1893 = vadd.s32 %v1883, %v1876
      %v1894 = vadd.s32 %v1883, %v1877
      %v1895 = vadd.s32 %v1883, %v1878
      %v1896 = vadd.s32 %v1883, %v1879
      %v1897 = vadd.s32 %v1883, %v1880
      %v1898 = vadd.s32 %v1883, %v1881
      %v1899 = vadd.s32 %v1883, %v1882
      %vm1900 = vcmp.lt.s32.totalorder %v1884, 128
      %vm1901 = vcmp.lt.s32.totalorder %v1885, 128
      %vm1902 = vcmp.lt.s32.totalorder %v1886, 128
      %vm1903 = vcmp.lt.s32.totalorder %v1887, 128
      %vm1904 = vcmp.lt.s32.totalorder %v1888, 128
      %vm1905 = vcmp.lt.s32.totalorder %v1889, 128
      %vm1906 = vcmp.lt.s32.totalorder %v1890, 128
      %vm1907 = vcmp.lt.s32.totalorder %v1891, 128
      %vm1908 = vcmp.lt.s32.totalorder %v1892, 128
      %vm1909 = vcmp.lt.s32.totalorder %v1893, 128
      %vm1910 = vcmp.lt.s32.totalorder %v1894, 128
      %vm1911 = vcmp.lt.s32.totalorder %v1895, 128
      %vm1912 = vcmp.lt.s32.totalorder %v1896, 128
      %vm1913 = vcmp.lt.s32.totalorder %v1897, 128
      %vm1914 = vcmp.lt.s32.totalorder %v1898, 128
      %vm1915 = vcmp.lt.s32.totalorder %v1899, 128
      %v1916 = vsel %vm1900, 1, 0
      %v1917 = vsel %vm1901, 1, 0
      %v1918 = vsel %vm1902, 1, 0
      %v1919 = vsel %vm1903, 1, 0
      %v1920 = vsel %vm1904, 1, 0
      %v1921 = vsel %vm1905, 1, 0
      %v1922 = vsel %vm1906, 1, 0
      %v1923 = vsel %vm1907, 1, 0
      %v1924 = vsel %vm1908, 1, 0
      %v1925 = vsel %vm1909, 1, 0
      %v1926 = vsel %vm1910, 1, 0
      %v1927 = vsel %vm1911, 1, 0
      %v1928 = vsel %vm1912, 1, 0
      %v1929 = vsel %vm1913, 1, 0
      %v1930 = vsel %vm1914, 1, 0
      %v1931 = vsel %vm1915, 1, 0
      %v1932 = vcvt.s32.f32 %v1916
      %v1933 = vcvt.s32.f32 %v1917
      %v1934 = vcvt.s32.f32 %v1918
      %v1935 = vcvt.s32.f32 %v1919
      %v1936 = vcvt.s32.f32 %v1920
      %v1937 = vcvt.s32.f32 %v1921
      %v1938 = vcvt.s32.f32 %v1922
      %v1939 = vcvt.s32.f32 %v1923
      %v1940 = vcvt.s32.f32 %v1924
      %v1941 = vcvt.s32.f32 %v1925
      %v1942 = vcvt.s32.f32 %v1926
      %v1943 = vcvt.s32.f32 %v1927
      %v1944 = vcvt.s32.f32 %v1928
      %v1945 = vcvt.s32.f32 %v1929
      %v1946 = vcvt.s32.f32 %v1930
      %v1947 = vcvt.s32.f32 %v1931
      %v1948 = vadd.f32 %v1849, %v1616
      %v1949 = vadd.f32 %v1850, %v1617
      %v1950 = vadd.f32 %v1851, %v1618
      %v1951 = vadd.f32 %v1852, %v1619
      %v1952 = vadd.f32 %v1853, %v1620
      %v1953 = vadd.f32 %v1854, %v1621
      %v1954 = vadd.f32 %v1855, %v1622
      %v1955 = vadd.f32 %v1856, %v1623
      %v1956 = vadd.f32 %v1857, %v1624
      %v1957 = vadd.f32 %v1858, %v1625
      %v1958 = vadd.f32 %v1859, %v1626
      %v1959 = vadd.f32 %v1860, %v1627
      %v1960 = vadd.f32 %v1861, %v1628
      %v1961 = vadd.f32 %v1862, %v1629
      %v1962 = vadd.f32 %v1863, %v1630
      %v1963 = vadd.f32 %v1864, %v1631
      %v1964 = vmul.f32 %v1932, %v1948
      %v1965 = vmul.f32 %v1933, %v1949
      %v1966 = vmul.f32 %v1934, %v1950
      %v1967 = vmul.f32 %v1935, %v1951
      %v1968 = vmul.f32 %v1936, %v1952
      %v1969 = vmul.f32 %v1937, %v1953
      %v1970 = vmul.f32 %v1938, %v1954
      %v1971 = vmul.f32 %v1939, %v1955
      %v1972 = vmul.f32 %v1940, %v1956
      %v1973 = vmul.f32 %v1941, %v1957
      %v1974 = vmul.f32 %v1942, %v1958
      %v1975 = vmul.f32 %v1943, %v1959
      %v1976 = vmul.f32 %v1944, %v1960
      %v1977 = vmul.f32 %v1945, %v1961
      %v1978 = vmul.f32 %v1946, %v1962
      %v1979 = vmul.f32 %v1947, %v1963
      %v1980 = vadd.f32 %v1964, %v1965
      %v1981 = vadd.f32 %v1980, %v1966
      %v1982 = vadd.f32 %v1981, %v1967
      %v1983 = vadd.f32 %v1982, %v1968
      %v1984 = vadd.f32 %v1983, %v1969
      %v1985 = vadd.f32 %v1984, %v1970
      %v1986 = vadd.f32 %v1985, %v1971
      %v1987 = vadd.f32 %v1986, %v1972
      %v1988 = vadd.f32 %v1987, %v1973
      %v1989 = vadd.f32 %v1988, %v1974
      %v1990 = vadd.f32 %v1989, %v1975
      %v1991 = vadd.f32 %v1990, %v1976
      %v1992 = vadd.f32 %v1991, %v1977
      %v1993 = vadd.f32 %v1992, %v1978
      %v1994 = vadd.f32 %v1993, %v1979
      %v1995 = vrot.slane %v1994, 4
      %v1996 = vadd.f32 %v1994, %v1995
      %v1997 = vrot.slane %v1996, 2
      %v1998 = vadd.f32 %v1996, %v1997
      %v1999 = vrot.slane %v1998, 1
      %v2000 = vadd.f32 %v1998, %v1999
      %v2001 = vpack.c.bf16 %v1850, %v1849
      %v2002 = vpack.c.bf16 %v1852, %v1851
      %v2003 = vpack.c.bf16 %v1854, %v1853
      %v2004 = vpack.c.bf16 %v1856, %v1855
      %v2005 = vpack.c.bf16 %v1858, %v1857
      %v2006 = vpack.c.bf16 %v1860, %v1859
      %v2007 = vpack.c.bf16 %v1862, %v1861
      %v2008 = vpack.c.bf16 %v1864, %v1863
      %v2017 = vunpack.c.l.b16 %v2001
      %v2018 = vunpack.c.h.b16 %v2001
      %v2019 = vunpack.c.l.b16 %v2002
      %v2020 = vunpack.c.h.b16 %v2002
      %v2021 = vunpack.c.l.b16 %v2003
      %v2022 = vunpack.c.h.b16 %v2003
      %v2023 = vunpack.c.l.b16 %v2004
      %v2024 = vunpack.c.h.b16 %v2004
      %v2025 = vunpack.c.l.b16 %v2005
      %v2026 = vunpack.c.h.b16 %v2005
      %v2027 = vunpack.c.l.b16 %v2006
      %v2028 = vunpack.c.h.b16 %v2006
      %v2029 = vunpack.c.l.b16 %v2007
      %v2030 = vunpack.c.h.b16 %v2007
      %v2031 = vunpack.c.l.b16 %v2008
      %v2032 = vunpack.c.h.b16 %v2008
      %v2033 = vpack.c.b16 %v2017, %v2017
      %v2034 = vpack.c.b16 %v2018, %v2018
      %v2035 = vpack.c.b16 %v2019, %v2019
      %v2036 = vpack.c.b16 %v2020, %v2020
      %v2037 = vpack.c.b16 %v2021, %v2021
      %v2038 = vpack.c.b16 %v2022, %v2022
      %v2039 = vpack.c.b16 %v2023, %v2023
      %v2040 = vpack.c.b16 %v2024, %v2024
      %v2041 = vpack.c.b16 %v2025, %v2025
      %v2042 = vpack.c.b16 %v2026, %v2026
      %v2043 = vpack.c.b16 %v2027, %v2027
      %v2044 = vpack.c.b16 %v2028, %v2028
      %v2045 = vpack.c.b16 %v2029, %v2029
      %v2046 = vpack.c.b16 %v2030, %v2030
      %v2047 = vpack.c.b16 %v2031, %v2031
      %v2048 = vpack.c.b16 %v2032, %v2032
      %2065 = vst [vmem:[%s516] sm:$0xf] %v2033
      %2066 = vst [vmem:[%s516 + $0x4] sm:$0xf] %v2034
      %2067 = vst [vmem:[%s516 + $0x8] sm:$0xf] %v2035
      %2068 = vst [vmem:[%s516 + $0xc] sm:$0xf] %v2036
      %2069 = vst [vmem:[%s516 + $0x10] sm:$0xf] %v2037
      %2070 = vst [vmem:[%s516 + $0x14] sm:$0xf] %v2038
      %2071 = vst [vmem:[%s516 + $0x18] sm:$0xf] %v2039
      %2072 = vst [vmem:[%s516 + $0x1c] sm:$0xf] %v2040
      %2073 = vst [vmem:[%s516 + $0x20] sm:$0xf] %v2041
      %2074 = vst [vmem:[%s516 + $0x24] sm:$0xf] %v2042
      %2075 = vst [vmem:[%s516 + $0x28] sm:$0xf] %v2043
      %2076 = vst [vmem:[%s516 + $0x2c] sm:$0xf] %v2044
      %2077 = vst [vmem:[%s516 + $0x30] sm:$0xf] %v2045
      %2078 = vst [vmem:[%s516 + $0x34] sm:$0xf] %v2046
      %2079 = vst [vmem:[%s516 + $0x38] sm:$0xf] %v2047
      %2080 = vst [vmem:[%s516 + $0x3c] sm:$0xf] %v2048
      %v2081 = vpack.c.bf16 %v1617, %v1616
      %v2082 = vpack.c.bf16 %v1619, %v1618
      %v2083 = vpack.c.bf16 %v1621, %v1620
      %v2084 = vpack.c.bf16 %v1623, %v1622
      %v2085 = vpack.c.bf16 %v1625, %v1624
      %v2086 = vpack.c.bf16 %v1627, %v1626
      %v2087 = vpack.c.bf16 %v1629, %v1628
      %v2088 = vpack.c.bf16 %v1631, %v1630
      %v2097 = vunpack.c.l.b16 %v2081
      %v2098 = vunpack.c.h.b16 %v2081
      %v2099 = vunpack.c.l.b16 %v2082
      %v2100 = vunpack.c.h.b16 %v2082
      %v2101 = vunpack.c.l.b16 %v2083
      %v2102 = vunpack.c.h.b16 %v2083
      %v2103 = vunpack.c.l.b16 %v2084
      %v2104 = vunpack.c.h.b16 %v2084
      %v2105 = vunpack.c.l.b16 %v2085
      %v2106 = vunpack.c.h.b16 %v2085
      %v2107 = vunpack.c.l.b16 %v2086
      %v2108 = vunpack.c.h.b16 %v2086
      %v2109 = vunpack.c.l.b16 %v2087
      %v2110 = vunpack.c.h.b16 %v2087
      %v2111 = vunpack.c.l.b16 %v2088
      %v2112 = vunpack.c.h.b16 %v2088
      %v2113 = vpack.c.b16 %v2097, %v2097
      %v2114 = vpack.c.b16 %v2098, %v2098
      %v2115 = vpack.c.b16 %v2099, %v2099
      %v2116 = vpack.c.b16 %v2100, %v2100
      %v2117 = vpack.c.b16 %v2101, %v2101
      %v2118 = vpack.c.b16 %v2102, %v2102
      %v2119 = vpack.c.b16 %v2103, %v2103
      %v2120 = vpack.c.b16 %v2104, %v2104
      %v2121 = vpack.c.b16 %v2105, %v2105
      %v2122 = vpack.c.b16 %v2106, %v2106
      %v2123 = vpack.c.b16 %v2107, %v2107
      %v2124 = vpack.c.b16 %v2108, %v2108
      %v2125 = vpack.c.b16 %v2109, %v2109
      %v2126 = vpack.c.b16 %v2110, %v2110
      %v2127 = vpack.c.b16 %v2111, %v2111
      %v2128 = vpack.c.b16 %v2112, %v2112
      %2145 = vst [vmem:[%s526] sm:$0xf] %v2113
      %2146 = vst [vmem:[%s526 + $0x4] sm:$0xf] %v2114
      %2147 = vst [vmem:[%s526 + $0x8] sm:$0xf] %v2115
      %2148 = vst [vmem:[%s526 + $0xc] sm:$0xf] %v2116
      %2149 = vst [vmem:[%s526 + $0x10] sm:$0xf] %v2117
      %2150 = vst [vmem:[%s526 + $0x14] sm:$0xf] %v2118
      %2151 = vst [vmem:[%s526 + $0x18] sm:$0xf] %v2119
      %2152 = vst [vmem:[%s526 + $0x1c] sm:$0xf] %v2120
      %2153 = vst [vmem:[%s526 + $0x20] sm:$0xf] %v2121
      %2154 = vst [vmem:[%s526 + $0x24] sm:$0xf] %v2122
      %2155 = vst [vmem:[%s526 + $0x28] sm:$0xf] %v2123
      %2156 = vst [vmem:[%s526 + $0x2c] sm:$0xf] %v2124
      %2157 = vst [vmem:[%s526 + $0x30] sm:$0xf] %v2125
      %2158 = vst [vmem:[%s526 + $0x34] sm:$0xf] %v2126
      %2159 = vst [vmem:[%s526 + $0x38] sm:$0xf] %v2127
      %2160 = vst [vmem:[%s526 + $0x3c] sm:$0xf] %v2128
      %2161 = vst [vmem:[%s534] sm:$0xff] %v2000
      %s2162 = smul.u32 16, %s27
      %p2163 = scmp.lt.s32.totalorder %s26, 1
      %s2164 = scalar_select %p2163, %s26, 1
      %p2165 = scmp.lt.s32.totalorder %s2162, 15
      %s2166 = scalar_select %p2165, %s2162, 15
      %s2167 = smul.addr %s2164, 16
      %s2168 = sadd.s32 %s2166, %s2167
      %s2169 = smul.addr %s2168, 4
      %s2170 = scalar_lea.vmem %s8, %s2169
      %s2171 = smul.u32 16, %s27
      %p2172 = scmp.lt.s32.totalorder %s26, 1
      %s2173 = scalar_select %p2172, %s26, 1
      %p2174 = scmp.lt.s32.totalorder %s2171, 15
      %s2175 = scalar_select %p2174, %s2171, 15
      %s2176 = smul.addr %s2173, 16
      %s2177 = sadd.s32 %s2175, %s2176
      %s2178 = smul.addr %s2177, 4
      %s2179 = scalar_lea.vmem %s9, %s2178
      %p2180 = scmp.lt.s32.totalorder %s26, 1
      %s2181 = scalar_select %p2180, %s26, 1
      %p2182 = scmp.lt.s32.totalorder %s27, 0
      %s2183 = scalar_select %p2182, %s27, 0
      %s2184 = sadd.s32 %s2183, %s2181
      %s2185 = smul.addr %s2184, 8
      %s2186 = scalar_lea.vmem %s10, %s2185
      // Predicated region
      $region53: #{clfm_forward.6} parent=51 // pred_check
        %p2187 = pneg %p248
      $region54: #{clfm_forward.6} parent=51 // pred_check_branch
        %2189 = sbr.rel (%p2187) target = $region56
      $region55: #{clfm_forward.6} parent=51 // pred_region
        %s2190 = smul.u32 16, %s27
      $region56: #{clfm_forward.6} parent=51 // pred_fallthru
        _
      // Predicated region
      $region57: #{clfm_forward.6} parent=51 // pred_check
        %p2191 = pneg %p276
      $region58: #{clfm_forward.6} parent=51 // pred_check_branch
        %2193 = sbr.rel (%p2191) target = $region60
      $region59: #{clfm_forward.6} parent=51 // pred_region
        %s2194 = smul.u32 16, %s27
      $region60: #{clfm_forward.6} parent=51 // pred_fallthru
        _
      // Predicated region
      $region61: #{clfm_forward.6} parent=51 // pred_check
        %p2195 = pneg %p304
      $region62: #{clfm_forward.6} parent=51 // pred_check_branch
        %2197 = sbr.rel (%p2195) target = $region64
      $region63: #{clfm_forward.6} parent=51 // pred_region
        _
      $region64: #{clfm_forward.6} parent=51 // pred_fallthru
        _
    $region52: #{clfm_forward.6} parent=5 // pred_fallthru
      _
    %p2198 = scmp.le.s32.totalorder 2, %s17
    // Predicated region
    $region65: #{clfm_forward.6} parent=5 // pred_check
      %p2199 = pneg %p2198
    $region66: #{clfm_forward.6} parent=5 // pred_check_branch
      %2201 = sbr.rel (%p2199) target = $region68
    $region67: #{clfm_forward.6} parent=5 // pred_region
      %s2202 = ssub.s32 %s17, 2
      // Predicated region
      $region69: #{clfm_forward.6} parent=67 // pred_check
        %p2203 = pneg %p254
      $region70: #{clfm_forward.6} parent=67 // pred_check_branch
        %2205 = sbr.rel (%p2203) target = $region72
      $region71: #{clfm_forward.6} parent=67 // pred_region
        %s2206 = smul.u32 16, %s29
        %p2207 = scmp.lt.s32.totalorder %s28, 1
        %s2208 = scalar_select %p2207, %s28, 1
        %p2209 = scmp.lt.s32.totalorder %s2206, 15
        %s2210 = scalar_select %p2209, %s2206, 15
        %s2211 = smul.addr %s2208, 16
        %s2212 = sadd.s32 %s2210, %s2211
        %s2213 = smul.addr %s2212, 4
        %s2214 = scalar_lea.vmem %s8, %s2213
      $region72: #{clfm_forward.6} parent=67 // pred_fallthru
        _
      // Predicated region
      $region73: #{clfm_forward.6} parent=67 // pred_check
        %p2215 = pneg %p282
      $region74: #{clfm_forward.6} parent=67 // pred_check_branch
        %2217 = sbr.rel (%p2215) target = $region76
      $region75: #{clfm_forward.6} parent=67 // pred_region
        %s2218 = smul.u32 16, %s29
        %p2219 = scmp.lt.s32.totalorder %s28, 1
        %s2220 = scalar_select %p2219, %s28, 1
        %p2221 = scmp.lt.s32.totalorder %s2218, 15
        %s2222 = scalar_select %p2221, %s2218, 15
        %s2223 = smul.addr %s2220, 16
        %s2224 = sadd.s32 %s2222, %s2223
        %s2225 = smul.addr %s2224, 4
        %s2226 = scalar_lea.vmem %s9, %s2225
      $region76: #{clfm_forward.6} parent=67 // pred_fallthru
        _
      // Predicated region
      $region77: #{clfm_forward.6} parent=67 // pred_check
        %p2227 = pneg %p310
      $region78: #{clfm_forward.6} parent=67 // pred_check_branch
        %2229 = sbr.rel (%p2227) target = $region80
      $region79: #{clfm_forward.6} parent=67 // pred_region
        %p2230 = scmp.lt.s32.totalorder %s28, 1
        %s2231 = scalar_select %p2230, %s28, 1
        %p2232 = scmp.lt.s32.totalorder %s29, 0
        %s2233 = scalar_select %p2232, %s29, 0
        %s2234 = sadd.s32 %s2233, %s2231
        %s2235 = smul.addr %s2234, 8
        %s2236 = scalar_lea.vmem %s10, %s2235
      $region80: #{clfm_forward.6} parent=67 // pred_fallthru
        _
    $region68: #{clfm_forward.6} parent=5 // pred_fallthru
      _
  $region6: #{clfm_forward.6} parent=0 // loop_footer
    %s21 = sadd.s32 1, %s17
  $region7: #{clfm_forward.6} parent=0 // loop_footer_branch
    %16 = sbr.rel target = $region3
  $region8: #{clfm_forward.6} parent=0 // loop_exit
    _

</llo_original>
